<compile_context>
chip_gen: v5e
topology: v5e:2x2
jax: 0.10.0
libtpu: 0.0.40
codegen_flags: <defaults>
</compile_context>

<pallas_src>
import functools

import jax
import jax.numpy as jnp
from jax.experimental import pallas as pl
from jax.experimental.pallas import tpu as pltpu

LATENT = 100
LATENT_PAD = 128      # 100 -> 128: lane multiple -> unmasked loads, clean MXU K
OUT = 28 * 28         # 784
OUT_PAD = 896         # 784 -> 7*128: lane-dense (unmasked) output stores
H1, H2, H3 = 256, 512, 1024


def _round_up(x, m):
    return (x + m - 1) // m * m


def _cdiv(a, b):
    return (a + b - 1) // b


def generator_kernel(z_ref,
                     w1_ref, b1_ref,
                     w2_ref, b2_ref,
                     w3_ref, b3_ref,
                     w4_ref, b4_ref,
                     out_ref):
    # bf16 activations between layers; bias-add/ReLU on the f32 accumulator.
    h = z_ref[...]                                            # (TB, 128) bf16
    # Layer 1: Linear(128->256) + ReLU   (rows 100..127 of w1 are zero)
    a = jnp.dot(h, w1_ref[...], preferred_element_type=jnp.float32)
    h = jnp.maximum(a + b1_ref[...], 0.0).astype(jnp.bfloat16)
    # Layer 2: Linear(256->512) + ReLU
    a = jnp.dot(h, w2_ref[...], preferred_element_type=jnp.float32)
    h = jnp.maximum(a + b2_ref[...], 0.0).astype(jnp.bfloat16)
    # Layer 3: Linear(512->1024) + ReLU
    a = jnp.dot(h, w3_ref[...], preferred_element_type=jnp.float32)
    h = jnp.maximum(a + b3_ref[...], 0.0).astype(jnp.bfloat16)
    # Layer 4: Linear(1024->896) + Tanh  (cols 784..895 of w4/b4 are zero)
    a = jnp.dot(h, w4_ref[...], preferred_element_type=jnp.float32)
    out_ref[...] = jnp.tanh(a + b4_ref[...]).astype(jnp.bfloat16)


def init_params(key):
    """Deterministic parameter init matching nn.Linear shapes.

    PyTorch nn.Linear stores weight as (out, in); we store the transpose
    (in, out) so the kernel can compute z @ W without transposing on-chip.
    Uses uniform(-1/sqrt(fan_in), 1/sqrt(fan_in)) like torch's default init.
    """
    dims = [LATENT, H1, H2, H3, OUT]
    params = []
    for i in range(4):
        fan_in, fan_out = dims[i], dims[i + 1]
        key, kw, kb = jax.random.split(key, 3)
        bound = 1.0 / jnp.sqrt(jnp.float32(fan_in))
        w = jax.random.uniform(kw, (fan_in, fan_out), jnp.float32,
                               minval=-bound, maxval=bound)
        b = jax.random.uniform(kb, (1, fan_out), jnp.float32,
                               minval=-bound, maxval=bound)
        params.extend([w, b])
    return params


def prepare_kernel_params(params):
    """f32 (in,out)/(1,out) params -> zero-padded, bf16-weight kernel params.

    Done once, outside the per-step forward call. Biases stay f32 (added to
    the f32 MXU accumulator).
    """
    w1, b1, w2, b2, w3, b3, w4, b4 = params
    w1p = jnp.pad(w1, ((0, LATENT_PAD - w1.shape[0]), (0, 0)))
    w4p = jnp.pad(w4, ((0, 0), (0, OUT_PAD - w4.shape[1])))
    b4p = jnp.pad(b4, ((0, 0), (0, OUT_PAD - b4.shape[1])))
    bf = jnp.bfloat16
    return (w1p.astype(bf), b1,
            w2.astype(bf), b2,
            w3.astype(bf), b3,
            w4p.astype(bf), b4p)


@functools.partial(jax.jit, static_argnames=("tb_max",))
def generator_forward(z, kparams, *, tb_max=512):
    """z: (B, 100) float32 -> (B, 1, 28, 28) float32."""
    B = z.shape[0]
    w1, b1, w2, b2, w3, b3, w4, b4 = kparams

    # Split B as evenly as possible into tiles of at most tb_max rows, then
    # round the tile to 16 (bf16 sublane tiling). B=300 -> one 304-row tile;
    # B=8 -> one 16-row tile; B=2048 -> four 512-row tiles.
    n_steps = max(1, _cdiv(B, tb_max))
    tb = _round_up(_cdiv(B, n_steps), 16)
    bp = tb * n_steps

    # Zero-pad latent 100 -> 128 and batch B -> bp; feed the MXU bf16 LHS.
    zp = jnp.pad(z, ((0, bp - B), (0, LATENT_PAD - z.shape[1])))
    zp = zp.astype(jnp.bfloat16)

    resident = lambda i: (0, 0)   # weights/biases: constant block -> fetched once

    weight_bytes = sum(int(p.size) * p.dtype.itemsize
                       for p in (w1, b1, w2, b2, w3, b3, w4, b4))
    cost = pl.CostEstimate(
        flops=2 * bp * (LATENT_PAD * H1 + H1 * H2 + H2 * H3 + H3 * OUT_PAD),
        transcendentals=bp * OUT_PAD,
        bytes_accessed=weight_bytes + bp * (LATENT_PAD + OUT_PAD) * 2,
    )

    flat = pl.pallas_call(
        generator_kernel,
        out_shape=jax.ShapeDtypeStruct((bp, OUT_PAD), jnp.bfloat16),
        grid=(bp // tb,),
        in_specs=[
            pl.BlockSpec((tb, LATENT_PAD), lambda i: (i, 0)),
            pl.BlockSpec(w1.shape, resident),
            pl.BlockSpec(b1.shape, resident),
            pl.BlockSpec(w2.shape, resident),
            pl.BlockSpec(b2.shape, resident),
            pl.BlockSpec(w3.shape, resident),
            pl.BlockSpec(b3.shape, resident),
            pl.BlockSpec(w4.shape, resident),
            pl.BlockSpec(b4.shape, resident),
        ],
        out_specs=pl.BlockSpec((tb, OUT_PAD), lambda i: (i, 0)),
        compiler_params=pltpu.CompilerParams(
            dimension_semantics=("parallel",),
            vmem_limit_bytes=32 * 1024 * 1024),
        cost_estimate=cost,
    )(zp, w1, b1, w2, b2, w3, b3, w4, b4)

    # Slice off batch/feature padding; PyTorch: .view(-1, 1, 28, 28) is glue.
    return flat[:B, :OUT].astype(jnp.float32).reshape(-1, 1, 28, 28)


def reference_forward(z, params):
    """Plain-JAX reference mirroring the kernel's bf16 math (f32 accumulate)."""
    w1, b1, w2, b2, w3, b3, w4, b4 = params
    bf = jnp.bfloat16

    def lin(x, w, b):
        return jnp.dot(x, w.astype(bf), preferred_element_type=jnp.float32) + b

    h = z.astype(bf)
    h = jnp.maximum(lin(h, w1, b1), 0.0).astype(bf)
    h = jnp.maximum(lin(h, w2, b2), 0.0).astype(bf)
    h = jnp.maximum(lin(h, w3, b3), 0.0).astype(bf)
    out = jnp.tanh(lin(h, w4, b4)).astype(bf).astype(jnp.float32)
    return out.reshape(-1, 1, 28, 28)


if __name__ == "__main__":
    key = jax.random.PRNGKey(0)
    key, kz = jax.random.split(key)

    B = 8  # small sampling batch (single grid step; tile collapses to 16 rows)
    z = jax.random.normal(kz, (B, LATENT), dtype=jnp.float32)
    params = init_params(key)
    kparams = prepare_kernel_params(params)

    out = jax.block_until_ready(generator_forward(z, kparams))
    ref = reference_forward(z, params)
    assert out.shape == (B, 1, 28, 28), out.shape
    assert jnp.allclose(out, ref, atol=2e-2, rtol=2e-2), \
        float(jnp.max(jnp.abs(out - ref)))

    # Odd batch: B=300 now runs as a single 304-row tile (4 padded rows)
    # instead of padding to 512.
    key, kz2 = jax.random.split(key)
    B2 = 300
    z2 = jax.random.normal(kz2, (B2, LATENT), dtype=jnp.float32)
    out2 = jax.block_until_ready(generator_forward(z2, kparams))
    ref2 = reference_forward(z2, params)
    assert out2.shape == (B2, 1, 28, 28), out2.shape
    assert jnp.allclose(out2, ref2, atol=2e-2, rtol=2e-2), \
        float(jnp.max(jnp.abs(out2 - ref2)))

    # Larger batch: exercises the multi-step grid (two 512-row tiles on the
    # "parallel" batch axis -> both v7x TensorCores get work).
    key, kz3 = jax.random.split(key)
    B3 = 1000
    z3 = jax.random.normal(kz3, (B3, LATENT), dtype=jnp.float32)
    out3 = jax.block_until_ready(generator_forward(z3, kparams))
    ref3 = reference_forward(z3, params)
    assert out3.shape == (B3, 1, 28, 28), out3.shape
    assert jnp.allclose(out3, ref3, atol=2e-2, rtol=2e-2), \
        float(jnp.max(jnp.abs(out3 - ref3)))

    print("KERNEL_OK")
</pallas_src>

<mosaic_0001>
module attributes {stable_mosaic.version = 11 : i64} {
  func.func @generator_kernel(%arg0: i32, %arg1: memref<16x128xbf16, #tpu.memory_space<vmem>>, %arg2: memref<128x256xbf16, #tpu.memory_space<vmem>>, %arg3: memref<1x256xf32, #tpu.memory_space<vmem>>, %arg4: memref<256x512xbf16, #tpu.memory_space<vmem>>, %arg5: memref<1x512xf32, #tpu.memory_space<vmem>>, %arg6: memref<512x1024xbf16, #tpu.memory_space<vmem>>, %arg7: memref<1x1024xf32, #tpu.memory_space<vmem>>, %arg8: memref<1024x896xbf16, #tpu.memory_space<vmem>>, %arg9: memref<1x896xf32, #tpu.memory_space<vmem>>, %arg10: memref<16x896xbf16, #tpu.memory_space<vmem>>) attributes {dimension_semantics = [#tpu.dimension_semantics<parallel>], iteration_bounds = array<i64: 1>, scalar_prefetch = 0 : i64, scratch_operands = 0 : i64, tpu.core_type = #tpu.core_type<tc>, window_params = [{transform_indices = @transform_0, window_bounds = array<i64: 16, 128>}, {pipeline_mode = #tpu.pipeline_mode<synchronous>, transform_indices = @transform_1, window_bounds = array<i64: 128, 256>}, {pipeline_mode = #tpu.pipeline_mode<synchronous>, transform_indices = @transform_2, window_bounds = array<i64: 1, 256>}, {pipeline_mode = #tpu.pipeline_mode<synchronous>, transform_indices = @transform_3, window_bounds = array<i64: 256, 512>}, {pipeline_mode = #tpu.pipeline_mode<synchronous>, transform_indices = @transform_4, window_bounds = array<i64: 1, 512>}, {pipeline_mode = #tpu.pipeline_mode<synchronous>, transform_indices = @transform_5, window_bounds = array<i64: 512, 1024>}, {pipeline_mode = #tpu.pipeline_mode<synchronous>, transform_indices = @transform_6, window_bounds = array<i64: 1, 1024>}, {pipeline_mode = #tpu.pipeline_mode<synchronous>, transform_indices = @transform_7, window_bounds = array<i64: 1024, 896>}, {pipeline_mode = #tpu.pipeline_mode<synchronous>, transform_indices = @transform_8, window_bounds = array<i64: 1, 896>}, {transform_indices = @transform_9, window_bounds = array<i64: 16, 896>}]} {
    %c0 = arith.constant 0 : index
    %c0_0 = arith.constant 0 : index
    %0 = vector.load %arg1[%c0, %c0_0] : memref<16x128xbf16, #tpu.memory_space<vmem>>, vector<16x128xbf16>
    %c0_1 = arith.constant 0 : index
    %c0_2 = arith.constant 0 : index
    %1 = vector.load %arg2[%c0_1, %c0_2] : memref<128x256xbf16, #tpu.memory_space<vmem>>, vector<128x256xbf16>
    %cst = arith.constant dense<0.000000e+00> : vector<16x256xf32>
    %2 = tpu.matmul %0, %1, %cst {dimension_numbers = #tpu.dot_dimension_numbers<[1], [0], [0], [1], [0, 0, 1, 1], [], []>} : vector<16x128xbf16>, vector<128x256xbf16>, vector<16x256xf32> -> vector<16x256xf32>
    %c0_3 = arith.constant 0 : index
    %c0_4 = arith.constant 0 : index
    %3 = vector.load %arg3[%c0_3, %c0_4] : memref<1x256xf32, #tpu.memory_space<vmem>>, vector<1x256xf32>
    %4 = vector.broadcast %3 : vector<1x256xf32> to vector<16x256xf32>
    %5 = arith.addf %2, %4 : vector<16x256xf32>
    %cst_5 = arith.constant 0.000000e+00 : f32
    %6 = vector.broadcast %cst_5 : f32 to vector<16x256xf32>
    %7 = arith.maximumf %5, %6 : vector<16x256xf32>
    %8 = arith.truncf %7 : vector<16x256xf32> to vector<16x256xbf16>
    %c0_6 = arith.constant 0 : index
    %c0_7 = arith.constant 0 : index
    %9 = vector.load %arg4[%c0_6, %c0_7] : memref<256x512xbf16, #tpu.memory_space<vmem>>, vector<256x512xbf16>
    %cst_8 = arith.constant dense<0.000000e+00> : vector<16x512xf32>
    %10 = tpu.matmul %8, %9, %cst_8 {dimension_numbers = #tpu.dot_dimension_numbers<[1], [0], [0], [1], [0, 0, 1, 1], [], []>} : vector<16x256xbf16>, vector<256x512xbf16>, vector<16x512xf32> -> vector<16x512xf32>
    %c0_9 = arith.constant 0 : index
    %c0_10 = arith.constant 0 : index
    %11 = vector.load %arg5[%c0_9, %c0_10] : memref<1x512xf32, #tpu.memory_space<vmem>>, vector<1x512xf32>
    %12 = vector.broadcast %11 : vector<1x512xf32> to vector<16x512xf32>
    %13 = arith.addf %10, %12 : vector<16x512xf32>
    %cst_11 = arith.constant 0.000000e+00 : f32
    %14 = vector.broadcast %cst_11 : f32 to vector<16x512xf32>
    %15 = arith.maximumf %13, %14 : vector<16x512xf32>
    %16 = arith.truncf %15 : vector<16x512xf32> to vector<16x512xbf16>
    %c0_12 = arith.constant 0 : index
    %c0_13 = arith.constant 0 : index
    %17 = vector.load %arg6[%c0_12, %c0_13] : memref<512x1024xbf16, #tpu.memory_space<vmem>>, vector<512x1024xbf16>
    %cst_14 = arith.constant dense<0.000000e+00> : vector<16x1024xf32>
    %18 = tpu.matmul %16, %17, %cst_14 {dimension_numbers = #tpu.dot_dimension_numbers<[1], [0], [0], [1], [0, 0, 1, 1], [], []>} : vector<16x512xbf16>, vector<512x1024xbf16>, vector<16x1024xf32> -> vector<16x1024xf32>
    %c0_15 = arith.constant 0 : index
    %c0_16 = arith.constant 0 : index
    %19 = vector.load %arg7[%c0_15, %c0_16] : memref<1x1024xf32, #tpu.memory_space<vmem>>, vector<1x1024xf32>
    %20 = vector.broadcast %19 : vector<1x1024xf32> to vector<16x1024xf32>
    %21 = arith.addf %18, %20 : vector<16x1024xf32>
    %cst_17 = arith.constant 0.000000e+00 : f32
    %22 = vector.broadcast %cst_17 : f32 to vector<16x1024xf32>
    %23 = arith.maximumf %21, %22 : vector<16x1024xf32>
    %24 = arith.truncf %23 : vector<16x1024xf32> to vector<16x1024xbf16>
    %c0_18 = arith.constant 0 : index
    %c0_19 = arith.constant 0 : index
    %25 = vector.load %arg8[%c0_18, %c0_19] : memref<1024x896xbf16, #tpu.memory_space<vmem>>, vector<1024x896xbf16>
    %cst_20 = arith.constant dense<0.000000e+00> : vector<16x896xf32>
    %26 = tpu.matmul %24, %25, %cst_20 {dimension_numbers = #tpu.dot_dimension_numbers<[1], [0], [0], [1], [0, 0, 1, 1], [], []>} : vector<16x1024xbf16>, vector<1024x896xbf16>, vector<16x896xf32> -> vector<16x896xf32>
    %c0_21 = arith.constant 0 : index
    %c0_22 = arith.constant 0 : index
    %27 = vector.load %arg9[%c0_21, %c0_22] : memref<1x896xf32, #tpu.memory_space<vmem>>, vector<1x896xf32>
    %28 = vector.broadcast %27 : vector<1x896xf32> to vector<16x896xf32>
    %29 = arith.addf %26, %28 : vector<16x896xf32>
    %30 = math.tanh %29 : vector<16x896xf32>
    %31 = arith.truncf %30 : vector<16x896xf32> to vector<16x896xbf16>
    %c0_23 = arith.constant 0 : index
    %c0_24 = arith.constant 0 : index
    %32 = vector.load %arg10[%c0_23, %c0_24] : memref<16x896xbf16, #tpu.memory_space<vmem>>, vector<16x896xbf16>
    tpu.vector_store %arg10[%c0_23, %c0_24], %31 {strides = array<i32>} : memref<16x896xbf16, #tpu.memory_space<vmem>>, vector<16x896xbf16>,
    return
  }
  func.func @transform_0(%arg0: i32) -> (i32, i32) {
    %c0_i32 = arith.constant 0 : i32
    %c0_i32_0 = arith.constant 0 : i32
    return %arg0, %c0_i32 : i32, i32
  }
  func.func @transform_1(%arg0: i32) -> (i32, i32) {
    %c0_i32 = arith.constant 0 : i32
    %c0_i32_0 = arith.constant 0 : i32
    %c0_i32_1 = arith.constant 0 : i32
    return %c0_i32, %c0_i32_0 : i32, i32
  }
  func.func @transform_2(%arg0: i32) -> (i32, i32) {
    %c0_i32 = arith.constant 0 : i32
    %c0_i32_0 = arith.constant 0 : i32
    %c0_i32_1 = arith.constant 0 : i32
    return %c0_i32, %c0_i32_0 : i32, i32
  }
  func.func @transform_3(%arg0: i32) -> (i32, i32) {
    %c0_i32 = arith.constant 0 : i32
    %c0_i32_0 = arith.constant 0 : i32
    %c0_i32_1 = arith.constant 0 : i32
    return %c0_i32, %c0_i32_0 : i32, i32
  }
  func.func @transform_4(%arg0: i32) -> (i32, i32) {
    %c0_i32 = arith.constant 0 : i32
    %c0_i32_0 = arith.constant 0 : i32
    %c0_i32_1 = arith.constant 0 : i32
    return %c0_i32, %c0_i32_0 : i32, i32
  }
  func.func @transform_5(%arg0: i32) -> (i32, i32) {
    %c0_i32 = arith.constant 0 : i32
    %c0_i32_0 = arith.constant 0 : i32
    %c0_i32_1 = arith.constant 0 : i32
    return %c0_i32, %c0_i32_0 : i32, i32
  }
  func.func @transform_6(%arg0: i32) -> (i32, i32) {
    %c0_i32 = arith.constant 0 : i32
    %c0_i32_0 = arith.constant 0 : i32
    %c0_i32_1 = arith.constant 0 : i32
    return %c0_i32, %c0_i32_0 : i32, i32
  }
  func.func @transform_7(%arg0: i32) -> (i32, i32) {
    %c0_i32 = arith.constant 0 : i32
    %c0_i32_0 = arith.constant 0 : i32
    %c0_i32_1 = arith.constant 0 : i32
    return %c0_i32, %c0_i32_0 : i32, i32
  }
  func.func @transform_8(%arg0: i32) -> (i32, i32) {
    %c0_i32 = arith.constant 0 : i32
    %c0_i32_0 = arith.constant 0 : i32
    %c0_i32_1 = arith.constant 0 : i32
    return %c0_i32, %c0_i32_0 : i32, i32
  }
  func.func @transform_9(%arg0: i32) -> (i32, i32) {
    %c0_i32 = arith.constant 0 : i32
    %c0_i32_0 = arith.constant 0 : i32
    return %arg0, %c0_i32 : i32, i32
  }
}

</mosaic_0001>

<llo_original>
// kernel: generator_forward.1
$region0: #{generator_forward.1}
  #allocation0 [shape = 'u32[]', space=smem, size = 0x4, offset = 0x4, fixed_abs, tag = 'smem constant byte address 0x4 - core index']
  #allocation1 [shape = 'u32[72,128]{1,0:T(1,128)}', space=vmem, size = 0x9000, scoped, tag = 'internal scratch']
  %s0 = inlined_call_operand.vmem [shape: bf16[16,128], index: 0, kind: input, shape index: {}]
  %s1 = inlined_call_operand.hbm [shape: bf16[128,256], index: 1, kind: input, shape index: {}]
  %s2 = inlined_call_operand.hbm [shape: f32[1,256], index: 2, kind: input, shape index: {}]
  %s3 = inlined_call_operand.hbm [shape: bf16[256,512], index: 3, kind: input, shape index: {}]
  %s4 = inlined_call_operand.hbm [shape: f32[1,512], index: 4, kind: input, shape index: {}]
  %s5 = inlined_call_operand.hbm [shape: bf16[512,1024], index: 5, kind: input, shape index: {}]
  %s6 = inlined_call_operand.hbm [shape: f32[1,1024], index: 6, kind: input, shape index: {}]
  %s7 = inlined_call_operand.hbm [shape: bf16[1024,896], index: 7, kind: input, shape index: {}]
  %s8 = inlined_call_operand.hbm [shape: f32[1,896], index: 8, kind: input, shape index: {}]
  %s9 = inlined_call_operand.vmem [shape: bf16[16,896], index: 9, kind: output, shape index: {}]
  %s10 = sld [smem:[#allocation0]]
  $region78: #{generator_forward.1} parent=0
    _
  %s12 = ssub.s32 1, %s10
  %s13 = scalar_select 0, %s12, %s10
  $region1: #{generator_forward.1} parent=0
    #allocation2 [shape = 'u8[65536]{0}', space=vmem, size = 0x10000, scoped, tag = 'input window, operand 1, single buffered']
    #allocation3 [shape = 's32[1]{0}', space=sflag, size = 0x4, scoped, tag = 'scoped memory for generator_forward.1']
    #allocation4 [shape = 'u8[1024]{0}', space=vmem, size = 0x400, scoped, tag = 'input window, operand 2, single buffered']
    #allocation5 [shape = 's32[1]{0}', space=sflag, size = 0x4, scoped, tag = 'scoped memory for generator_forward.1']
    #allocation6 [shape = 'u8[262144]{0}', space=vmem, size = 0x40000, scoped, tag = 'input window, operand 3, single buffered']
    #allocation7 [shape = 'u8[2048]{0}', space=vmem, size = 0x800, scoped, tag = 'input window, operand 4, single buffered']
    #allocation8 [shape = 's32[1]{0}', space=sflag, size = 0x4, scoped, tag = 'scoped memory for generator_forward.1']
    #allocation9 [shape = 'u8[1048576]{0}', space=vmem, size = 0x100000, scoped, tag = 'input window, operand 5, single buffered']
    #allocation10 [shape = 'u8[4096]{0}', space=vmem, size = 0x1000, scoped, tag = 'input window, operand 6, single buffered']
    #allocation11 [shape = 's32[1]{0}', space=sflag, size = 0x4, scoped, tag = 'scoped memory for generator_forward.1']
    #allocation12 [shape = 'u8[1835008]{0}', space=vmem, size = 0x1c0000, scoped, tag = 'input window, operand 7, single buffered']
    #allocation13 [shape = 'u8[3584]{0}', space=vmem, size = 0x1000, scoped, tag = 'input window, operand 8, single buffered']
    #allocation14 [shape = 's32[1]{0}', space=sflag, size = 0x4, scoped, tag = 'scoped memory for generator_forward.1']
    %14 = vsyncpa [#allocation3], 0
    %15 = vsyncpa [#allocation5], 0
    %16 = vsyncpa [#allocation8], 0
    %17 = vsyncpa [#allocation11], 0
    %18 = vsyncpa [#allocation14], 0
    // Predicated region
    $region2: #{generator_forward.1} parent=1 // pred_check
      _
    $region3: #{generator_forward.1} parent=1 // pred_check_branch
      %20 = sbr.rel (0) target = $region5
    $region4: #{generator_forward.1} parent=1 // pred_region
      _
    $region5: #{generator_forward.1} parent=1 // pred_fallthru
      _
    // Predicated region
    $region6: #{generator_forward.1} parent=1 // pred_check
      _
    $region7: #{generator_forward.1} parent=1 // pred_check_branch
      %22 = sbr.rel (0) target = $region9
    $region8: #{generator_forward.1} parent=1 // pred_region
      %24 = vsyncadd [#allocation3], 0
      %s25 = sshll.u32 %s1, 4
      %s26 = int_to_ptr.hbm [resolvable:$true] %s25
      %s27 = sshll.u32 [#allocation2], 4
      %s28 = int_to_ptr.vmem [resolvable:$true] %s27
      %33 = dma.hbm_to_vmem [thread:$0]  %s26, 2048, %s28, [#allocation3], 128, 128, 8
    $region9: #{generator_forward.1} parent=1 // pred_fallthru
      _
    // Predicated region
    $region10: #{generator_forward.1} parent=1 // pred_check
      _
    $region11: #{generator_forward.1} parent=1 // pred_check_branch
      %35 = sbr.rel (0) target = $region13
    $region12: #{generator_forward.1} parent=1 // pred_region
      %37 = vsyncadd [#allocation5], 0
      %s39 = sshll.u32 %s2, 4
      %s40 = int_to_ptr.hbm [resolvable:$true] %s39
      %s41 = sshll.u32 [#allocation4], 4
      %s42 = int_to_ptr.vmem [resolvable:$true] %s41
      %44 = dma.hbm_to_vmem [thread:$0]  %s40, 32, %s42, [#allocation5]
    $region13: #{generator_forward.1} parent=1 // pred_fallthru
      _
    // Predicated region
    $region14: #{generator_forward.1} parent=1 // pred_check
      _
    $region15: #{generator_forward.1} parent=1 // pred_check_branch
      %46 = sbr.rel (0) target = $region17
    $region16: #{generator_forward.1} parent=1 // pred_region
      %48 = vsyncadd [#allocation5], 0
      %s49 = sshll.u32 %s3, 4
      %s50 = int_to_ptr.hbm [resolvable:$true] %s49
      %s51 = sshll.u32 [#allocation6], 4
      %s52 = int_to_ptr.vmem [resolvable:$true] %s51
      %57 = dma.hbm_to_vmem [thread:$0]  %s50, 8192, %s52, [#allocation5], 256, 256, 16
    $region17: #{generator_forward.1} parent=1 // pred_fallthru
      _
    // Predicated region
    $region18: #{generator_forward.1} parent=1 // pred_check
      _
    $region19: #{generator_forward.1} parent=1 // pred_check_branch
      %59 = sbr.rel (0) target = $region21
    $region20: #{generator_forward.1} parent=1 // pred_region
      %61 = vsyncadd [#allocation8], 0
      %s63 = sshll.u32 %s4, 4
      %s64 = int_to_ptr.hbm [resolvable:$true] %s63
      %s65 = sshll.u32 [#allocation7], 4
      %s66 = int_to_ptr.vmem [resolvable:$true] %s65
      %68 = dma.hbm_to_vmem [thread:$0]  %s64, 64, %s66, [#allocation8]
    $region21: #{generator_forward.1} parent=1 // pred_fallthru
      _
    // Predicated region
    $region22: #{generator_forward.1} parent=1 // pred_check
      _
    $region23: #{generator_forward.1} parent=1 // pred_check_branch
      %70 = sbr.rel (0) target = $region25
    $region24: #{generator_forward.1} parent=1 // pred_region
      %72 = vsyncadd [#allocation8], 0
      %s73 = sshll.u32 %s5, 4
      %s74 = int_to_ptr.hbm [resolvable:$true] %s73
      %s75 = sshll.u32 [#allocation9], 4
      %s76 = int_to_ptr.vmem [resolvable:$true] %s75
      %81 = dma.hbm_to_vmem [thread:$0]  %s74, 32768, %s76, [#allocation8], 512, 512, 32
    $region25: #{generator_forward.1} parent=1 // pred_fallthru
      _
    // Predicated region
    $region26: #{generator_forward.1} parent=1 // pred_check
      _
    $region27: #{generator_forward.1} parent=1 // pred_check_branch
      %83 = sbr.rel (0) target = $region29
    $region28: #{generator_forward.1} parent=1 // pred_region
      %85 = vsyncadd [#allocation11], 0
      %s87 = sshll.u32 %s6, 4
      %s88 = int_to_ptr.hbm [resolvable:$true] %s87
      %s89 = sshll.u32 [#allocation10], 4
      %s90 = int_to_ptr.vmem [resolvable:$true] %s89
      %92 = dma.hbm_to_vmem [thread:$0]  %s88, 128, %s90, [#allocation11]
    $region29: #{generator_forward.1} parent=1 // pred_fallthru
      _
    // Predicated region
    $region30: #{generator_forward.1} parent=1 // pred_check
      _
    $region31: #{generator_forward.1} parent=1 // pred_check_branch
      %94 = sbr.rel (0) target = $region33
    $region32: #{generator_forward.1} parent=1 // pred_region
      %96 = vsyncadd [#allocation11], 0
      %s97 = sshll.u32 %s7, 4
      %s98 = int_to_ptr.hbm [resolvable:$true] %s97
      %s99 = sshll.u32 [#allocation12], 4
      %s100 = int_to_ptr.vmem [resolvable:$true] %s99
      %105 = dma.hbm_to_vmem [thread:$0]  %s98, 57344, %s100, [#allocation11], 448, 448, 28
    $region33: #{generator_forward.1} parent=1 // pred_fallthru
      _
    // Predicated region
    $region34: #{generator_forward.1} parent=1 // pred_check
      _
    $region35: #{generator_forward.1} parent=1 // pred_check_branch
      %107 = sbr.rel (0) target = $region37
    $region36: #{generator_forward.1} parent=1 // pred_region
      %109 = vsyncadd [#allocation14], 0
      %s111 = sshll.u32 %s8, 4
      %s112 = int_to_ptr.hbm [resolvable:$true] %s111
      %s113 = sshll.u32 [#allocation13], 4
      %s114 = int_to_ptr.vmem [resolvable:$true] %s113
      %116 = dma.hbm_to_vmem [thread:$0]  %s112, 112, %s114, [#allocation14]
    $region37: #{generator_forward.1} parent=1 // pred_fallthru
      _
    // Predicated region
    $region38: #{generator_forward.1} parent=1 // pred_check
      _
    $region39: #{generator_forward.1} parent=1 // pred_check_branch
      %118 = sbr.rel (0) target = $region41
    $region40: #{generator_forward.1} parent=1 // pred_region
      %120 = dma.done [#allocation3], 2048
    $region41: #{generator_forward.1} parent=1 // pred_fallthru
      _
    // Predicated region
    $region42: #{generator_forward.1} parent=1 // pred_check
      _
    $region43: #{generator_forward.1} parent=1 // pred_check_branch
      %122 = sbr.rel (0) target = $region45
    $region44: #{generator_forward.1} parent=1 // pred_region
      %124 = dma.done [#allocation5], 32
    $region45: #{generator_forward.1} parent=1 // pred_fallthru
      _
    // Predicated region
    $region46: #{generator_forward.1} parent=1 // pred_check
      _
    $region47: #{generator_forward.1} parent=1 // pred_check_branch
      %126 = sbr.rel (0) target = $region49
    $region48: #{generator_forward.1} parent=1 // pred_region
      %128 = dma.done [#allocation5], 8192
    $region49: #{generator_forward.1} parent=1 // pred_fallthru
      _
    // Predicated region
    $region50: #{generator_forward.1} parent=1 // pred_check
      _
    $region51: #{generator_forward.1} parent=1 // pred_check_branch
      %130 = sbr.rel (0) target = $region53
    $region52: #{generator_forward.1} parent=1 // pred_region
      %132 = dma.done [#allocation8], 64
    $region53: #{generator_forward.1} parent=1 // pred_fallthru
      _
    // Predicated region
    $region54: #{generator_forward.1} parent=1 // pred_check
      _
    $region55: #{generator_forward.1} parent=1 // pred_check_branch
      %134 = sbr.rel (0) target = $region57
    $region56: #{generator_forward.1} parent=1 // pred_region
      %136 = dma.done [#allocation8], 32768
    $region57: #{generator_forward.1} parent=1 // pred_fallthru
      _
    // Predicated region
    $region58: #{generator_forward.1} parent=1 // pred_check
      _
    $region59: #{generator_forward.1} parent=1 // pred_check_branch
      %138 = sbr.rel (0) target = $region61
    $region60: #{generator_forward.1} parent=1 // pred_region
      %140 = dma.done [#allocation11], 128
    $region61: #{generator_forward.1} parent=1 // pred_fallthru
      _
    // Predicated region
    $region62: #{generator_forward.1} parent=1 // pred_check
      _
    $region63: #{generator_forward.1} parent=1 // pred_check_branch
      %142 = sbr.rel (0) target = $region65
    $region64: #{generator_forward.1} parent=1 // pred_region
      %144 = dma.done [#allocation11], 57344
    $region65: #{generator_forward.1} parent=1 // pred_fallthru
      _
    // Predicated region
    $region66: #{generator_forward.1} parent=1 // pred_check
      _
    $region67: #{generator_forward.1} parent=1 // pred_check_branch
      %146 = sbr.rel (0) target = $region69
    $region68: #{generator_forward.1} parent=1 // pred_region
      %148 = dma.done [#allocation14], 112
    $region69: #{generator_forward.1} parent=1 // pred_fallthru
      _
    %v149 = vld [vmem:[%s0] sm:$0xf]
    %v150 = vld [vmem:[%s0 + $0x4] sm:$0xf]
    %v151 = vld [vmem:[#allocation2] sm:$0xff]
    %v152 = vld [vmem:[#allocation2 + $0x8] sm:$0xff]
    %v153 = vld [vmem:[#allocation2 + $0x10] sm:$0xff]
    %v154 = vld [vmem:[#allocation2 + $0x18] sm:$0xff]
    %v155 = vld [vmem:[#allocation2 + $0x20] sm:$0xff]
    %v156 = vld [vmem:[#allocation2 + $0x28] sm:$0xff]
    %v157 = vld [vmem:[#allocation2 + $0x30] sm:$0xff]
    %v158 = vld [vmem:[#allocation2 + $0x38] sm:$0xff]
    %v159 = vld [vmem:[#allocation2 + $0x40] sm:$0xff]
    %v160 = vld [vmem:[#allocation2 + $0x48] sm:$0xff]
    %v161 = vld [vmem:[#allocation2 + $0x50] sm:$0xff]
    %v162 = vld [vmem:[#allocation2 + $0x58] sm:$0xff]
    %v163 = vld [vmem:[#allocation2 + $0x60] sm:$0xff]
    %v164 = vld [vmem:[#allocation2 + $0x68] sm:$0xff]
    %v165 = vld [vmem:[#allocation2 + $0x70] sm:$0xff]
    %v166 = vld [vmem:[#allocation2 + $0x78] sm:$0xff]
    %v167 = vld [vmem:[#allocation4] sm:$0x3]
    %v169 = vperm.slane %v167, 0
    %v170 = vperm.slane %v167, 1
    %v175 = vunpack.c.l.b16 %v149
    %v176 = vunpack.c.l.b16 %v150
    %v177 = vpack.c.b16 %v176, %v175
    %v195 = vunpack.c.l.b16 %v151
    %v196 = vunpack.c.h.b16 %v151
    %v197 = vunpack.c.l.b16 %v152
    %v198 = vunpack.c.h.b16 %v152
    %v199 = vunpack.c.l.b16 %v153
    %v200 = vunpack.c.h.b16 %v153
    %v201 = vunpack.c.l.b16 %v154
    %v202 = vunpack.c.h.b16 %v154
    %v203 = vunpack.c.l.b16 %v155
    %v204 = vunpack.c.h.b16 %v155
    %v205 = vunpack.c.l.b16 %v156
    %v206 = vunpack.c.h.b16 %v156
    %v207 = vunpack.c.l.b16 %v157
    %v208 = vunpack.c.h.b16 %v157
    %v209 = vunpack.c.l.b16 %v158
    %v210 = vunpack.c.h.b16 %v158
    %v211 = vunpack.c.l.b16 %v159
    %v212 = vunpack.c.h.b16 %v159
    %v213 = vunpack.c.l.b16 %v160
    %v214 = vunpack.c.h.b16 %v160
    %v215 = vunpack.c.l.b16 %v161
    %v216 = vunpack.c.h.b16 %v161
    %v217 = vunpack.c.l.b16 %v162
    %v218 = vunpack.c.h.b16 %v162
    %v219 = vunpack.c.l.b16 %v163
    %v220 = vunpack.c.h.b16 %v163
    %v221 = vunpack.c.l.b16 %v164
    %v222 = vunpack.c.h.b16 %v164
    %v223 = vunpack.c.l.b16 %v165
    %v224 = vunpack.c.h.b16 %v165
    %v225 = vunpack.c.l.b16 %v166
    %v226 = vunpack.c.h.b16 %v166
    %v227 = vpack.c.b16 %v197, %v195
    %v228 = vpack.c.b16 %v198, %v196
    %v229 = vpack.c.b16 %v201, %v199
    %v230 = vpack.c.b16 %v202, %v200
    %v231 = vpack.c.b16 %v205, %v203
    %v232 = vpack.c.b16 %v206, %v204
    %v233 = vpack.c.b16 %v209, %v207
    %v234 = vpack.c.b16 %v210, %v208
    %v235 = vpack.c.b16 %v213, %v211
    %v236 = vpack.c.b16 %v214, %v212
    %v237 = vpack.c.b16 %v217, %v215
    %v238 = vpack.c.b16 %v218, %v216
    %v239 = vpack.c.b16 %v221, %v219
    %v240 = vpack.c.b16 %v222, %v220
    %v241 = vpack.c.b16 %v225, %v223
    %v242 = vpack.c.b16 %v226, %v224
    %259 = vmatpush.bf16.msra.mxu0 %v241
    %260 = vmatpush.bf16.msra.mxu0 %v239
    %261 = vmatpush.bf16.msra.mxu0 %v237
    %262 = vmatpush.bf16.msra.mxu0 %v235
    %263 = vmatpush.bf16.msra.mxu0 %v233
    %264 = vmatpush.bf16.msra.mxu0 %v231
    %265 = vmatpush.bf16.msra.mxu0 %v229
    %266 = vmatpush.bf16.msra.mxu0 %v227
    %267 = vmatmul.bf16.gmra.mxu0 %v177
    %v268 = vpop.f32.mrf.mxu0
    %v269 = vadd.f32 %v169, %v268
    %v270 = vpop.f32.mrf.mxu0
    %v271 = vadd.f32 %v169, %v270
    %272 = vdwg.mxu0
    %273 = vmatpush.bf16.msra.mxu0 %v242
    %274 = vmatpush.bf16.msra.mxu0 %v240
    %275 = vmatpush.bf16.msra.mxu0 %v238
    %276 = vmatpush.bf16.msra.mxu0 %v236
    %277 = vmatpush.bf16.msra.mxu0 %v234
    %278 = vmatpush.bf16.msra.mxu0 %v232
    %279 = vmatpush.bf16.msra.mxu0 %v230
    %280 = vmatpush.bf16.msra.mxu0 %v228
    %281 = vmatmul.bf16.gmra.mxu0 %v177
    %v282 = vpop.f32.mrf.mxu0
    %v283 = vadd.f32 %v170, %v282
    %v284 = vpop.f32.mrf.mxu0
    %v285 = vadd.f32 %v170, %v284
    %286 = vdwg.mxu0
    %v287 = vmax.f32 %v269, 0.0
    %v288 = vmax.f32 %v283, 0.0
    %v289 = vmax.f32 %v271, 0.0
    %v290 = vmax.f32 %v285, 0.0
    %v291 = vpack.c.bf16 %v289, %v287
    %v292 = vpack.c.bf16 %v290, %v288
    %v293 = vld [vmem:[#allocation6] sm:$0xff]
    %v294 = vld [vmem:[#allocation6 + $0x8] sm:$0xff]
    %v295 = vld [vmem:[#allocation6 + $0x10] sm:$0xff]
    %v296 = vld [vmem:[#allocation6 + $0x18] sm:$0xff]
    %v297 = vld [vmem:[#allocation6 + $0x20] sm:$0xff]
    %v298 = vld [vmem:[#allocation6 + $0x28] sm:$0xff]
    %v299 = vld [vmem:[#allocation6 + $0x30] sm:$0xff]
    %v300 = vld [vmem:[#allocation6 + $0x38] sm:$0xff]
    %v301 = vld [vmem:[#allocation6 + $0x40] sm:$0xff]
    %v302 = vld [vmem:[#allocation6 + $0x48] sm:$0xff]
    %v303 = vld [vmem:[#allocation6 + $0x50] sm:$0xff]
    %v304 = vld [vmem:[#allocation6 + $0x58] sm:$0xff]
    %v305 = vld [vmem:[#allocation6 + $0x60] sm:$0xff]
    %v306 = vld [vmem:[#allocation6 + $0x68] sm:$0xff]
    %v307 = vld [vmem:[#allocation6 + $0x70] sm:$0xff]
    %v308 = vld [vmem:[#allocation6 + $0x78] sm:$0xff]
    %v309 = vld [vmem:[#allocation6 + $0x80] sm:$0xff]
    %v310 = vld [vmem:[#allocation6 + $0x88] sm:$0xff]
    %v311 = vld [vmem:[#allocation6 + $0x90] sm:$0xff]
    %v312 = vld [vmem:[#allocation6 + $0x98] sm:$0xff]
    %v313 = vld [vmem:[#allocation6 + $0xa0] sm:$0xff]
    %v314 = vld [vmem:[#allocation6 + $0xa8] sm:$0xff]
    %v315 = vld [vmem:[#allocation6 + $0xb0] sm:$0xff]
    %v316 = vld [vmem:[#allocation6 + $0xb8] sm:$0xff]
    %v317 = vld [vmem:[#allocation6 + $0xc0] sm:$0xff]
    %v318 = vld [vmem:[#allocation6 + $0xc8] sm:$0xff]
    %v319 = vld [vmem:[#allocation6 + $0xd0] sm:$0xff]
    %v320 = vld [vmem:[#allocation6 + $0xd8] sm:$0xff]
    %v321 = vld [vmem:[#allocation6 + $0xe0] sm:$0xff]
    %v322 = vld [vmem:[#allocation6 + $0xe8] sm:$0xff]
    %v323 = vld [vmem:[#allocation6 + $0xf0] sm:$0xff]
    %v324 = vld [vmem:[#allocation6 + $0xf8] sm:$0xff]
    %v325 = vld [vmem:[#allocation6 + $0x100] sm:$0xff]
    %v326 = vld [vmem:[#allocation6 + $0x108] sm:$0xff]
    %v327 = vld [vmem:[#allocation6 + $0x110] sm:$0xff]
    %v328 = vld [vmem:[#allocation6 + $0x118] sm:$0xff]
    %v329 = vld [vmem:[#allocation6 + $0x120] sm:$0xff]
    %v330 = vld [vmem:[#allocation6 + $0x128] sm:$0xff]
    %v331 = vld [vmem:[#allocation6 + $0x130] sm:$0xff]
    %v332 = vld [vmem:[#allocation6 + $0x138] sm:$0xff]
    %v333 = vld [vmem:[#allocation6 + $0x140] sm:$0xff]
    %v334 = vld [vmem:[#allocation6 + $0x148] sm:$0xff]
    %v335 = vld [vmem:[#allocation6 + $0x150] sm:$0xff]
    %v336 = vld [vmem:[#allocation6 + $0x158] sm:$0xff]
    %v337 = vld [vmem:[#allocation6 + $0x160] sm:$0xff]
    %v338 = vld [vmem:[#allocation6 + $0x168] sm:$0xff]
    %v339 = vld [vmem:[#allocation6 + $0x170] sm:$0xff]
    %v340 = vld [vmem:[#allocation6 + $0x178] sm:$0xff]
    %v341 = vld [vmem:[#allocation6 + $0x180] sm:$0xff]
    %v342 = vld [vmem:[#allocation6 + $0x188] sm:$0xff]
    %v343 = vld [vmem:[#allocation6 + $0x190] sm:$0xff]
    %v344 = vld [vmem:[#allocation6 + $0x198] sm:$0xff]
    %v345 = vld [vmem:[#allocation6 + $0x1a0] sm:$0xff]
    %v346 = vld [vmem:[#allocation6 + $0x1a8] sm:$0xff]
    %v347 = vld [vmem:[#allocation6 + $0x1b0] sm:$0xff]
    %v348 = vld [vmem:[#allocation6 + $0x1b8] sm:$0xff]
    %v349 = vld [vmem:[#allocation6 + $0x1c0] sm:$0xff]
    %v350 = vld [vmem:[#allocation6 + $0x1c8] sm:$0xff]
    %v351 = vld [vmem:[#allocation6 + $0x1d0] sm:$0xff]
    %v352 = vld [vmem:[#allocation6 + $0x1d8] sm:$0xff]
    %v353 = vld [vmem:[#allocation6 + $0x1e0] sm:$0xff]
    %v354 = vld [vmem:[#allocation6 + $0x1e8] sm:$0xff]
    %v355 = vld [vmem:[#allocation6 + $0x1f0] sm:$0xff]
    %v356 = vld [vmem:[#allocation6 + $0x1f8] sm:$0xff]
    %v357 = vld [vmem:[#allocation7] sm:$0xf]
    %v359 = vperm.slane %v357, 0
    %v360 = vperm.slane %v357, 1
    %v361 = vperm.slane %v357, 2
    %v362 = vperm.slane %v357, 3
    %v431 = vunpack.c.l.b16 %v293
    %v432 = vunpack.c.h.b16 %v293
    %v433 = vunpack.c.l.b16 %v294
    %v434 = vunpack.c.h.b16 %v294
    %v435 = vunpack.c.l.b16 %v295
    %v436 = vunpack.c.h.b16 %v295
    %v437 = vunpack.c.l.b16 %v296
    %v438 = vunpack.c.h.b16 %v296
    %v439 = vunpack.c.l.b16 %v297
    %v440 = vunpack.c.h.b16 %v297
    %v441 = vunpack.c.l.b16 %v298
    %v442 = vunpack.c.h.b16 %v298
    %v443 = vunpack.c.l.b16 %v299
    %v444 = vunpack.c.h.b16 %v299
    %v445 = vunpack.c.l.b16 %v300
    %v446 = vunpack.c.h.b16 %v300
    %v447 = vunpack.c.l.b16 %v301
    %v448 = vunpack.c.h.b16 %v301
    %v449 = vunpack.c.l.b16 %v302
    %v450 = vunpack.c.h.b16 %v302
    %v451 = vunpack.c.l.b16 %v303
    %v452 = vunpack.c.h.b16 %v303
    %v453 = vunpack.c.l.b16 %v304
    %v454 = vunpack.c.h.b16 %v304
    %v455 = vunpack.c.l.b16 %v305
    %v456 = vunpack.c.h.b16 %v305
    %v457 = vunpack.c.l.b16 %v306
    %v458 = vunpack.c.h.b16 %v306
    %v459 = vunpack.c.l.b16 %v307
    %v460 = vunpack.c.h.b16 %v307
    %v461 = vunpack.c.l.b16 %v308
    %v462 = vunpack.c.h.b16 %v308
    %v463 = vunpack.c.l.b16 %v309
    %v464 = vunpack.c.h.b16 %v309
    %v465 = vunpack.c.l.b16 %v310
    %v466 = vunpack.c.h.b16 %v310
    %v467 = vunpack.c.l.b16 %v311
    %v468 = vunpack.c.h.b16 %v311
    %v469 = vunpack.c.l.b16 %v312
    %v470 = vunpack.c.h.b16 %v312
    %v471 = vunpack.c.l.b16 %v313
    %v472 = vunpack.c.h.b16 %v313
    %v473 = vunpack.c.l.b16 %v314
    %v474 = vunpack.c.h.b16 %v314
    %v475 = vunpack.c.l.b16 %v315
    %v476 = vunpack.c.h.b16 %v315
    %v477 = vunpack.c.l.b16 %v316
    %v478 = vunpack.c.h.b16 %v316
    %v479 = vunpack.c.l.b16 %v317
    %v480 = vunpack.c.h.b16 %v317
    %v481 = vunpack.c.l.b16 %v318
    %v482 = vunpack.c.h.b16 %v318
    %v483 = vunpack.c.l.b16 %v319
    %v484 = vunpack.c.h.b16 %v319
    %v485 = vunpack.c.l.b16 %v320
    %v486 = vunpack.c.h.b16 %v320
    %v487 = vunpack.c.l.b16 %v321
    %v488 = vunpack.c.h.b16 %v321
    %v489 = vunpack.c.l.b16 %v322
    %v490 = vunpack.c.h.b16 %v322
    %v491 = vunpack.c.l.b16 %v323
    %v492 = vunpack.c.h.b16 %v323
    %v493 = vunpack.c.l.b16 %v324
    %v494 = vunpack.c.h.b16 %v324
    %v495 = vunpack.c.l.b16 %v325
    %v496 = vunpack.c.h.b16 %v325
    %v497 = vunpack.c.l.b16 %v326
    %v498 = vunpack.c.h.b16 %v326
    %v499 = vunpack.c.l.b16 %v327
    %v500 = vunpack.c.h.b16 %v327
    %v501 = vunpack.c.l.b16 %v328
    %v502 = vunpack.c.h.b16 %v328
    %v503 = vunpack.c.l.b16 %v329
    %v504 = vunpack.c.h.b16 %v329
    %v505 = vunpack.c.l.b16 %v330
    %v506 = vunpack.c.h.b16 %v330
    %v507 = vunpack.c.l.b16 %v331
    %v508 = vunpack.c.h.b16 %v331
    %v509 = vunpack.c.l.b16 %v332
    %v510 = vunpack.c.h.b16 %v332
    %v511 = vunpack.c.l.b16 %v333
    %v512 = vunpack.c.h.b16 %v333
    %v513 = vunpack.c.l.b16 %v334
    %v514 = vunpack.c.h.b16 %v334
    %v515 = vunpack.c.l.b16 %v335
    %v516 = vunpack.c.h.b16 %v335
    %v517 = vunpack.c.l.b16 %v336
    %v518 = vunpack.c.h.b16 %v336
    %v519 = vunpack.c.l.b16 %v337
    %v520 = vunpack.c.h.b16 %v337
    %v521 = vunpack.c.l.b16 %v338
    %v522 = vunpack.c.h.b16 %v338
    %v523 = vunpack.c.l.b16 %v339
    %v524 = vunpack.c.h.b16 %v339
    %v525 = vunpack.c.l.b16 %v340
    %v526 = vunpack.c.h.b16 %v340
    %v527 = vunpack.c.l.b16 %v341
    %v528 = vunpack.c.h.b16 %v341
    %v529 = vunpack.c.l.b16 %v342
    %v530 = vunpack.c.h.b16 %v342
    %v531 = vunpack.c.l.b16 %v343
    %v532 = vunpack.c.h.b16 %v343
    %v533 = vunpack.c.l.b16 %v344
    %v534 = vunpack.c.h.b16 %v344
    %v535 = vunpack.c.l.b16 %v345
    %v536 = vunpack.c.h.b16 %v345
    %v537 = vunpack.c.l.b16 %v346
    %v538 = vunpack.c.h.b16 %v346
    %v539 = vunpack.c.l.b16 %v347
    %v540 = vunpack.c.h.b16 %v347
    %v541 = vunpack.c.l.b16 %v348
    %v542 = vunpack.c.h.b16 %v348
    %v543 = vunpack.c.l.b16 %v349
    %v544 = vunpack.c.h.b16 %v349
    %v545 = vunpack.c.l.b16 %v350
    %v546 = vunpack.c.h.b16 %v350
    %v547 = vunpack.c.l.b16 %v351
    %v548 = vunpack.c.h.b16 %v351
    %v549 = vunpack.c.l.b16 %v352
    %v550 = vunpack.c.h.b16 %v352
    %v551 = vunpack.c.l.b16 %v353
    %v552 = vunpack.c.h.b16 %v353
    %v553 = vunpack.c.l.b16 %v354
    %v554 = vunpack.c.h.b16 %v354
    %v555 = vunpack.c.l.b16 %v355
    %v556 = vunpack.c.h.b16 %v355
    %v557 = vunpack.c.l.b16 %v356
    %v558 = vunpack.c.h.b16 %v356
    %v559 = vpack.c.b16 %v435, %v431
    %v560 = vpack.c.b16 %v436, %v432
    %v561 = vpack.c.b16 %v437, %v433
    %v562 = vpack.c.b16 %v438, %v434
    %v563 = vpack.c.b16 %v443, %v439
    %v564 = vpack.c.b16 %v444, %v440
    %v565 = vpack.c.b16 %v445, %v441
    %v566 = vpack.c.b16 %v446, %v442
    %v567 = vpack.c.b16 %v451, %v447
    %v568 = vpack.c.b16 %v452, %v448
    %v569 = vpack.c.b16 %v453, %v449
    %v570 = vpack.c.b16 %v454, %v450
    %v571 = vpack.c.b16 %v459, %v455
    %v572 = vpack.c.b16 %v460, %v456
    %v573 = vpack.c.b16 %v461, %v457
    %v574 = vpack.c.b16 %v462, %v458
    %v575 = vpack.c.b16 %v467, %v463
    %v576 = vpack.c.b16 %v468, %v464
    %v577 = vpack.c.b16 %v469, %v465
    %v578 = vpack.c.b16 %v470, %v466
    %v579 = vpack.c.b16 %v475, %v471
    %v580 = vpack.c.b16 %v476, %v472
    %v581 = vpack.c.b16 %v477, %v473
    %v582 = vpack.c.b16 %v478, %v474
    %v583 = vpack.c.b16 %v483, %v479
    %v584 = vpack.c.b16 %v484, %v480
    %v585 = vpack.c.b16 %v485, %v481
    %v586 = vpack.c.b16 %v486, %v482
    %v587 = vpack.c.b16 %v491, %v487
    %v588 = vpack.c.b16 %v492, %v488
    %v589 = vpack.c.b16 %v493, %v489
    %v590 = vpack.c.b16 %v494, %v490
    %v591 = vpack.c.b16 %v499, %v495
    %v592 = vpack.c.b16 %v500, %v496
    %v593 = vpack.c.b16 %v501, %v497
    %v594 = vpack.c.b16 %v502, %v498
    %v595 = vpack.c.b16 %v507, %v503
    %v596 = vpack.c.b16 %v508, %v504
    %v597 = vpack.c.b16 %v509, %v505
    %v598 = vpack.c.b16 %v510, %v506
    %v599 = vpack.c.b16 %v515, %v511
    %v600 = vpack.c.b16 %v516, %v512
    %v601 = vpack.c.b16 %v517, %v513
    %v602 = vpack.c.b16 %v518, %v514
    %v603 = vpack.c.b16 %v523, %v519
    %v604 = vpack.c.b16 %v524, %v520
    %v605 = vpack.c.b16 %v525, %v521
    %v606 = vpack.c.b16 %v526, %v522
    %v607 = vpack.c.b16 %v531, %v527
    %v608 = vpack.c.b16 %v532, %v528
    %v609 = vpack.c.b16 %v533, %v529
    %v610 = vpack.c.b16 %v534, %v530
    %v611 = vpack.c.b16 %v539, %v535
    %v612 = vpack.c.b16 %v540, %v536
    %v613 = vpack.c.b16 %v541, %v537
    %v614 = vpack.c.b16 %v542, %v538
    %v615 = vpack.c.b16 %v547, %v543
    %v616 = vpack.c.b16 %v548, %v544
    %v617 = vpack.c.b16 %v549, %v545
    %v618 = vpack.c.b16 %v550, %v546
    %v619 = vpack.c.b16 %v555, %v551
    %v620 = vpack.c.b16 %v556, %v552
    %v621 = vpack.c.b16 %v557, %v553
    %v622 = vpack.c.b16 %v558, %v554
    %687 = vmatpush.bf16.msra.mxu0 %v587
    %688 = vmatpush.bf16.msra.mxu0 %v583
    %689 = vmatpush.bf16.msra.mxu0 %v579
    %690 = vmatpush.bf16.msra.mxu0 %v575
    %691 = vmatpush.bf16.msra.mxu0 %v571
    %692 = vmatpush.bf16.msra.mxu0 %v567
    %693 = vmatpush.bf16.msra.mxu0 %v563
    %694 = vmatpush.bf16.msra.mxu0 %v559
    %695 = vmatmul.bf16.gmra.mxu0 %v291
    %v696 = vpop.f32.mrf.mxu0
    %v697 = vadd.f32 %v359, %v696
    %v698 = vpop.f32.mrf.mxu0
    %v699 = vadd.f32 %v359, %v698
    %700 = vdwg.mxu0
    %701 = vmatpush.bf16.msra.mxu0 %v619
    %702 = vmatpush.bf16.msra.mxu0 %v615
    %703 = vmatpush.bf16.msra.mxu0 %v611
    %704 = vmatpush.bf16.msra.mxu0 %v607
    %705 = vmatpush.bf16.msra.mxu0 %v603
    %706 = vmatpush.bf16.msra.mxu0 %v599
    %707 = vmatpush.bf16.msra.mxu0 %v595
    %708 = vmatpush.bf16.msra.mxu0 %v591
    %709 = vmatmul.bf16.gmra.mxu0 %v292
    %v710 = vpop.f32.mrf.mxu0
    %v711 = vadd.f32 %v697, %v710
    %v712 = vpop.f32.mrf.mxu0
    %v713 = vadd.f32 %v699, %v712
    %714 = vdwg.mxu0
    %715 = vmatpush.bf16.msra.mxu0 %v588
    %716 = vmatpush.bf16.msra.mxu0 %v584
    %717 = vmatpush.bf16.msra.mxu0 %v580
    %718 = vmatpush.bf16.msra.mxu0 %v576
    %719 = vmatpush.bf16.msra.mxu0 %v572
    %720 = vmatpush.bf16.msra.mxu0 %v568
    %721 = vmatpush.bf16.msra.mxu0 %v564
    %722 = vmatpush.bf16.msra.mxu0 %v560
    %723 = vmatmul.bf16.gmra.mxu0 %v291
    %v724 = vpop.f32.mrf.mxu0
    %v725 = vadd.f32 %v360, %v724
    %v726 = vpop.f32.mrf.mxu0
    %v727 = vadd.f32 %v360, %v726
    %728 = vdwg.mxu0
    %729 = vmatpush.bf16.msra.mxu0 %v620
    %730 = vmatpush.bf16.msra.mxu0 %v616
    %731 = vmatpush.bf16.msra.mxu0 %v612
    %732 = vmatpush.bf16.msra.mxu0 %v608
    %733 = vmatpush.bf16.msra.mxu0 %v604
    %734 = vmatpush.bf16.msra.mxu0 %v600
    %735 = vmatpush.bf16.msra.mxu0 %v596
    %736 = vmatpush.bf16.msra.mxu0 %v592
    %737 = vmatmul.bf16.gmra.mxu0 %v292
    %v738 = vpop.f32.mrf.mxu0
    %v739 = vadd.f32 %v725, %v738
    %v740 = vpop.f32.mrf.mxu0
    %v741 = vadd.f32 %v727, %v740
    %742 = vdwg.mxu0
    %743 = vmatpush.bf16.msra.mxu0 %v589
    %744 = vmatpush.bf16.msra.mxu0 %v585
    %745 = vmatpush.bf16.msra.mxu0 %v581
    %746 = vmatpush.bf16.msra.mxu0 %v577
    %747 = vmatpush.bf16.msra.mxu0 %v573
    %748 = vmatpush.bf16.msra.mxu0 %v569
    %749 = vmatpush.bf16.msra.mxu0 %v565
    %750 = vmatpush.bf16.msra.mxu0 %v561
    %751 = vmatmul.bf16.gmra.mxu0 %v291
    %v752 = vpop.f32.mrf.mxu0
    %v753 = vadd.f32 %v361, %v752
    %v754 = vpop.f32.mrf.mxu0
    %v755 = vadd.f32 %v361, %v754
    %756 = vdwg.mxu0
    %757 = vmatpush.bf16.msra.mxu0 %v621
    %758 = vmatpush.bf16.msra.mxu0 %v617
    %759 = vmatpush.bf16.msra.mxu0 %v613
    %760 = vmatpush.bf16.msra.mxu0 %v609
    %761 = vmatpush.bf16.msra.mxu0 %v605
    %762 = vmatpush.bf16.msra.mxu0 %v601
    %763 = vmatpush.bf16.msra.mxu0 %v597
    %764 = vmatpush.bf16.msra.mxu0 %v593
    %765 = vmatmul.bf16.gmra.mxu0 %v292
    %v766 = vpop.f32.mrf.mxu0
    %v767 = vadd.f32 %v753, %v766
    %v768 = vpop.f32.mrf.mxu0
    %v769 = vadd.f32 %v755, %v768
    %770 = vdwg.mxu0
    %771 = vmatpush.bf16.msra.mxu0 %v590
    %772 = vmatpush.bf16.msra.mxu0 %v586
    %773 = vmatpush.bf16.msra.mxu0 %v582
    %774 = vmatpush.bf16.msra.mxu0 %v578
    %775 = vmatpush.bf16.msra.mxu0 %v574
    %776 = vmatpush.bf16.msra.mxu0 %v570
    %777 = vmatpush.bf16.msra.mxu0 %v566
    %778 = vmatpush.bf16.msra.mxu0 %v562
    %779 = vmatmul.bf16.gmra.mxu0 %v291
    %v780 = vpop.f32.mrf.mxu0
    %v781 = vadd.f32 %v362, %v780
    %v782 = vpop.f32.mrf.mxu0
    %v783 = vadd.f32 %v362, %v782
    %784 = vdwg.mxu0
    %785 = vmatpush.bf16.msra.mxu0 %v622
    %786 = vmatpush.bf16.msra.mxu0 %v618
    %787 = vmatpush.bf16.msra.mxu0 %v614
    %788 = vmatpush.bf16.msra.mxu0 %v610
    %789 = vmatpush.bf16.msra.mxu0 %v606
    %790 = vmatpush.bf16.msra.mxu0 %v602
    %791 = vmatpush.bf16.msra.mxu0 %v598
    %792 = vmatpush.bf16.msra.mxu0 %v594
    %793 = vmatmul.bf16.gmra.mxu0 %v292
    %v794 = vpop.f32.mrf.mxu0
    %v795 = vadd.f32 %v781, %v794
    %v796 = vpop.f32.mrf.mxu0
    %v797 = vadd.f32 %v783, %v796
    %798 = vdwg.mxu0
    %v799 = vmax.f32 %v711, 0.0
    %v800 = vmax.f32 %v739, 0.0
    %v801 = vmax.f32 %v767, 0.0
    %v802 = vmax.f32 %v795, 0.0
    %v803 = vmax.f32 %v713, 0.0
    %v804 = vmax.f32 %v741, 0.0
    %v805 = vmax.f32 %v769, 0.0
    %v806 = vmax.f32 %v797, 0.0
    %v807 = vpack.c.bf16 %v803, %v799
    %v808 = vpack.c.bf16 %v804, %v800
    %v809 = vpack.c.bf16 %v805, %v801
    %v810 = vpack.c.bf16 %v806, %v802
    %v811 = vld [vmem:[#allocation9] sm:$0xff]
    %v812 = vld [vmem:[#allocation9 + $0x8] sm:$0xff]
    %v813 = vld [vmem:[#allocation9 + $0x10] sm:$0xff]
    %v814 = vld [vmem:[#allocation9 + $0x18] sm:$0xff]
    %v815 = vld [vmem:[#allocation9 + $0x20] sm:$0xff]
    %v816 = vld [vmem:[#allocation9 + $0x28] sm:$0xff]
    %v817 = vld [vmem:[#allocation9 + $0x30] sm:$0xff]
    %v818 = vld [vmem:[#allocation9 + $0x38] sm:$0xff]
    %v819 = vld [vmem:[#allocation9 + $0x40] sm:$0xff]
    %v820 = vld [vmem:[#allocation9 + $0x48] sm:$0xff]
    %v821 = vld [vmem:[#allocation9 + $0x50] sm:$0xff]
    %v822 = vld [vmem:[#allocation9 + $0x58] sm:$0xff]
    %v823 = vld [vmem:[#allocation9 + $0x60] sm:$0xff]
    %v824 = vld [vmem:[#allocation9 + $0x68] sm:$0xff]
    %v825 = vld [vmem:[#allocation9 + $0x70] sm:$0xff]
    %v826 = vld [vmem:[#allocation9 + $0x78] sm:$0xff]
    %v827 = vld [vmem:[#allocation9 + $0x80] sm:$0xff]
    %v828 = vld [vmem:[#allocation9 + $0x88] sm:$0xff]
    %v829 = vld [vmem:[#allocation9 + $0x90] sm:$0xff]
    %v830 = vld [vmem:[#allocation9 + $0x98] sm:$0xff]
    %v831 = vld [vmem:[#allocation9 + $0xa0] sm:$0xff]
    %v832 = vld [vmem:[#allocation9 + $0xa8] sm:$0xff]
    %v833 = vld [vmem:[#allocation9 + $0xb0] sm:$0xff]
    %v834 = vld [vmem:[#allocation9 + $0xb8] sm:$0xff]
    %v835 = vld [vmem:[#allocation9 + $0xc0] sm:$0xff]
    %v836 = vld [vmem:[#allocation9 + $0xc8] sm:$0xff]
    %v837 = vld [vmem:[#allocation9 + $0xd0] sm:$0xff]
    %v838 = vld [vmem:[#allocation9 + $0xd8] sm:$0xff]
    %v839 = vld [vmem:[#allocation9 + $0xe0] sm:$0xff]
    %v840 = vld [vmem:[#allocation9 + $0xe8] sm:$0xff]
    %v841 = vld [vmem:[#allocation9 + $0xf0] sm:$0xff]
    %v842 = vld [vmem:[#allocation9 + $0xf8] sm:$0xff]
    %v843 = vld [vmem:[#allocation9 + $0x100] sm:$0xff]
    %v844 = vld [vmem:[#allocation9 + $0x108] sm:$0xff]
    %v845 = vld [vmem:[#allocation9 + $0x110] sm:$0xff]
    %v846 = vld [vmem:[#allocation9 + $0x118] sm:$0xff]
    %v847 = vld [vmem:[#allocation9 + $0x120] sm:$0xff]
    %v848 = vld [vmem:[#allocation9 + $0x128] sm:$0xff]
    %v849 = vld [vmem:[#allocation9 + $0x130] sm:$0xff]
    %v850 = vld [vmem:[#allocation9 + $0x138] sm:$0xff]
    %v851 = vld [vmem:[#allocation9 + $0x140] sm:$0xff]
    %v852 = vld [vmem:[#allocation9 + $0x148] sm:$0xff]
    %v853 = vld [vmem:[#allocation9 + $0x150] sm:$0xff]
    %v854 = vld [vmem:[#allocation9 + $0x158] sm:$0xff]
    %v855 = vld [vmem:[#allocation9 + $0x160] sm:$0xff]
    %v856 = vld [vmem:[#allocation9 + $0x168] sm:$0xff]
    %v857 = vld [vmem:[#allocation9 + $0x170] sm:$0xff]
    %v858 = vld [vmem:[#allocation9 + $0x178] sm:$0xff]
    %v859 = vld [vmem:[#allocation9 + $0x180] sm:$0xff]
    %v860 = vld [vmem:[#allocation9 + $0x188] sm:$0xff]
    %v861 = vld [vmem:[#allocation9 + $0x190] sm:$0xff]
    %v862 = vld [vmem:[#allocation9 + $0x198] sm:$0xff]
    %v863 = vld [vmem:[#allocation9 + $0x1a0] sm:$0xff]
    %v864 = vld [vmem:[#allocation9 + $0x1a8] sm:$0xff]
    %v865 = vld [vmem:[#allocation9 + $0x1b0] sm:$0xff]
    %v866 = vld [vmem:[#allocation9 + $0x1b8] sm:$0xff]
    %v867 = vld [vmem:[#allocation9 + $0x1c0] sm:$0xff]
    %v868 = vld [vmem:[#allocation9 + $0x1c8] sm:$0xff]
    %v869 = vld [vmem:[#allocation9 + $0x1d0] sm:$0xff]
    %v870 = vld [vmem:[#allocation9 + $0x1d8] sm:$0xff]
    %v871 = vld [vmem:[#allocation9 + $0x1e0] sm:$0xff]
    %v872 = vld [vmem:[#allocation9 + $0x1e8] sm:$0xff]
    %v873 = vld [vmem:[#allocation9 + $0x1f0] sm:$0xff]
    %v874 = vld [vmem:[#allocation9 + $0x1f8] sm:$0xff]
    %v875 = vld [vmem:[#allocation9 + $0x200] sm:$0xff]
    %v876 = vld [vmem:[#allocation9 + $0x208] sm:$0xff]
    %v877 = vld [vmem:[#allocation9 + $0x210] sm:$0xff]
    %v878 = vld [vmem:[#allocation9 + $0x218] sm:$0xff]
    %v879 = vld [vmem:[#allocation9 + $0x220] sm:$0xff]
    %v880 = vld [vmem:[#allocation9 + $0x228] sm:$0xff]
    %v881 = vld [vmem:[#allocation9 + $0x230] sm:$0xff]
    %v882 = vld [vmem:[#allocation9 + $0x238] sm:$0xff]
    %v883 = vld [vmem:[#allocation9 + $0x240] sm:$0xff]
    %v884 = vld [vmem:[#allocation9 + $0x248] sm:$0xff]
    %v885 = vld [vmem:[#allocation9 + $0x250] sm:$0xff]
    %v886 = vld [vmem:[#allocation9 + $0x258] sm:$0xff]
    %v887 = vld [vmem:[#allocation9 + $0x260] sm:$0xff]
    %v888 = vld [vmem:[#allocation9 + $0x268] sm:$0xff]
    %v889 = vld [vmem:[#allocation9 + $0x270] sm:$0xff]
    %v890 = vld [vmem:[#allocation9 + $0x278] sm:$0xff]
    %v891 = vld [vmem:[#allocation9 + $0x280] sm:$0xff]
    %v892 = vld [vmem:[#allocation9 + $0x288] sm:$0xff]
    %v893 = vld [vmem:[#allocation9 + $0x290] sm:$0xff]
    %v894 = vld [vmem:[#allocation9 + $0x298] sm:$0xff]
    %v895 = vld [vmem:[#allocation9 + $0x2a0] sm:$0xff]
    %v896 = vld [vmem:[#allocation9 + $0x2a8] sm:$0xff]
    %v897 = vld [vmem:[#allocation9 + $0x2b0] sm:$0xff]
    %v898 = vld [vmem:[#allocation9 + $0x2b8] sm:$0xff]
    %v899 = vld [vmem:[#allocation9 + $0x2c0] sm:$0xff]
    %v900 = vld [vmem:[#allocation9 + $0x2c8] sm:$0xff]
    %v901 = vld [vmem:[#allocation9 + $0x2d0] sm:$0xff]
    %v902 = vld [vmem:[#allocation9 + $0x2d8] sm:$0xff]
    %v903 = vld [vmem:[#allocation9 + $0x2e0] sm:$0xff]
    %v904 = vld [vmem:[#allocation9 + $0x2e8] sm:$0xff]
    %v905 = vld [vmem:[#allocation9 + $0x2f0] sm:$0xff]
    %v906 = vld [vmem:[#allocation9 + $0x2f8] sm:$0xff]
    %v907 = vld [vmem:[#allocation9 + $0x300] sm:$0xff]
    %v908 = vld [vmem:[#allocation9 + $0x308] sm:$0xff]
    %v909 = vld [vmem:[#allocation9 + $0x310] sm:$0xff]
    %v910 = vld [vmem:[#allocation9 + $0x318] sm:$0xff]
    %v911 = vld [vmem:[#allocation9 + $0x320] sm:$0xff]
    %v912 = vld [vmem:[#allocation9 + $0x328] sm:$0xff]
    %v913 = vld [vmem:[#allocation9 + $0x330] sm:$0xff]
    %v914 = vld [vmem:[#allocation9 + $0x338] sm:$0xff]
    %v915 = vld [vmem:[#allocation9 + $0x340] sm:$0xff]
    %v916 = vld [vmem:[#allocation9 + $0x348] sm:$0xff]
    %v917 = vld [vmem:[#allocation9 + $0x350] sm:$0xff]
    %v918 = vld [vmem:[#allocation9 + $0x358] sm:$0xff]
    %v919 = vld [vmem:[#allocation9 + $0x360] sm:$0xff]
    %v920 = vld [vmem:[#allocation9 + $0x368] sm:$0xff]
    %v921 = vld [vmem:[#allocation9 + $0x370] sm:$0xff]
    %v922 = vld [vmem:[#allocation9 + $0x378] sm:$0xff]
    %v923 = vld [vmem:[#allocation9 + $0x380] sm:$0xff]
    %v924 = vld [vmem:[#allocation9 + $0x388] sm:$0xff]
    %v925 = vld [vmem:[#allocation9 + $0x390] sm:$0xff]
    %v926 = vld [vmem:[#allocation9 + $0x398] sm:$0xff]
    %v927 = vld [vmem:[#allocation9 + $0x3a0] sm:$0xff]
    %v928 = vld [vmem:[#allocation9 + $0x3a8] sm:$0xff]
    %v929 = vld [vmem:[#allocation9 + $0x3b0] sm:$0xff]
    %v930 = vld [vmem:[#allocation9 + $0x3b8] sm:$0xff]
    %v931 = vld [vmem:[#allocation9 + $0x3c0] sm:$0xff]
    %v932 = vld [vmem:[#allocation9 + $0x3c8] sm:$0xff]
    %v933 = vld [vmem:[#allocation9 + $0x3d0] sm:$0xff]
    %v934 = vld [vmem:[#allocation9 + $0x3d8] sm:$0xff]
    %v935 = vld [vmem:[#allocation9 + $0x3e0] sm:$0xff]
    %v936 = vld [vmem:[#allocation9 + $0x3e8] sm:$0xff]
    %v937 = vld [vmem:[#allocation9 + $0x3f0] sm:$0xff]
    %v938 = vld [vmem:[#allocation9 + $0x3f8] sm:$0xff]
    %v939 = vld [vmem:[#allocation9 + $0x400] sm:$0xff]
    %v940 = vld [vmem:[#allocation9 + $0x408] sm:$0xff]
    %v941 = vld [vmem:[#allocation9 + $0x410] sm:$0xff]
    %v942 = vld [vmem:[#allocation9 + $0x418] sm:$0xff]
    %v943 = vld [vmem:[#allocation9 + $0x420] sm:$0xff]
    %v944 = vld [vmem:[#allocation9 + $0x428] sm:$0xff]
    %v945 = vld [vmem:[#allocation9 + $0x430] sm:$0xff]
    %v946 = vld [vmem:[#allocation9 + $0x438] sm:$0xff]
    %v947 = vld [vmem:[#allocation9 + $0x440] sm:$0xff]
    %v948 = vld [vmem:[#allocation9 + $0x448] sm:$0xff]
    %v949 = vld [vmem:[#allocation9 + $0x450] sm:$0xff]
    %v950 = vld [vmem:[#allocation9 + $0x458] sm:$0xff]
    %v951 = vld [vmem:[#allocation9 + $0x460] sm:$0xff]
    %v952 = vld [vmem:[#allocation9 + $0x468] sm:$0xff]
    %v953 = vld [vmem:[#allocation9 + $0x470] sm:$0xff]
    %v954 = vld [vmem:[#allocation9 + $0x478] sm:$0xff]
    %v955 = vld [vmem:[#allocation9 + $0x480] sm:$0xff]
    %v956 = vld [vmem:[#allocation9 + $0x488] sm:$0xff]
    %v957 = vld [vmem:[#allocation9 + $0x490] sm:$0xff]
    %v958 = vld [vmem:[#allocation9 + $0x498] sm:$0xff]
    %v959 = vld [vmem:[#allocation9 + $0x4a0] sm:$0xff]
    %v960 = vld [vmem:[#allocation9 + $0x4a8] sm:$0xff]
    %v961 = vld [vmem:[#allocation9 + $0x4b0] sm:$0xff]
    %v962 = vld [vmem:[#allocation9 + $0x4b8] sm:$0xff]
    %v963 = vld [vmem:[#allocation9 + $0x4c0] sm:$0xff]
    %v964 = vld [vmem:[#allocation9 + $0x4c8] sm:$0xff]
    %v965 = vld [vmem:[#allocation9 + $0x4d0] sm:$0xff]
    %v966 = vld [vmem:[#allocation9 + $0x4d8] sm:$0xff]
    %v967 = vld [vmem:[#allocation9 + $0x4e0] sm:$0xff]
    %v968 = vld [vmem:[#allocation9 + $0x4e8] sm:$0xff]
    %v969 = vld [vmem:[#allocation9 + $0x4f0] sm:$0xff]
    %v970 = vld [vmem:[#allocation9 + $0x4f8] sm:$0xff]
    %v971 = vld [vmem:[#allocation9 + $0x500] sm:$0xff]
    %v972 = vld [vmem:[#allocation9 + $0x508] sm:$0xff]
    %v973 = vld [vmem:[#allocation9 + $0x510] sm:$0xff]
    %v974 = vld [vmem:[#allocation9 + $0x518] sm:$0xff]
    %v975 = vld [vmem:[#allocation9 + $0x520] sm:$0xff]
    %v976 = vld [vmem:[#allocation9 + $0x528] sm:$0xff]
    %v977 = vld [vmem:[#allocation9 + $0x530] sm:$0xff]
    %v978 = vld [vmem:[#allocation9 + $0x538] sm:$0xff]
    %v979 = vld [vmem:[#allocation9 + $0x540] sm:$0xff]
    %v980 = vld [vmem:[#allocation9 + $0x548] sm:$0xff]
    %v981 = vld [vmem:[#allocation9 + $0x550] sm:$0xff]
    %v982 = vld [vmem:[#allocation9 + $0x558] sm:$0xff]
    %v983 = vld [vmem:[#allocation9 + $0x560] sm:$0xff]
    %v984 = vld [vmem:[#allocation9 + $0x568] sm:$0xff]
    %v985 = vld [vmem:[#allocation9 + $0x570] sm:$0xff]
    %v986 = vld [vmem:[#allocation9 + $0x578] sm:$0xff]
    %v987 = vld [vmem:[#allocation9 + $0x580] sm:$0xff]
    %v988 = vld [vmem:[#allocation9 + $0x588] sm:$0xff]
    %v989 = vld [vmem:[#allocation9 + $0x590] sm:$0xff]
    %v990 = vld [vmem:[#allocation9 + $0x598] sm:$0xff]
    %v991 = vld [vmem:[#allocation9 + $0x5a0] sm:$0xff]
    %v992 = vld [vmem:[#allocation9 + $0x5a8] sm:$0xff]
    %v993 = vld [vmem:[#allocation9 + $0x5b0] sm:$0xff]
    %v994 = vld [vmem:[#allocation9 + $0x5b8] sm:$0xff]
    %v995 = vld [vmem:[#allocation9 + $0x5c0] sm:$0xff]
    %v996 = vld [vmem:[#allocation9 + $0x5c8] sm:$0xff]
    %v997 = vld [vmem:[#allocation9 + $0x5d0] sm:$0xff]
    %v998 = vld [vmem:[#allocation9 + $0x5d8] sm:$0xff]
    %v999 = vld [vmem:[#allocation9 + $0x5e0] sm:$0xff]
    %v1000 = vld [vmem:[#allocation9 + $0x5e8] sm:$0xff]
    %v1001 = vld [vmem:[#allocation9 + $0x5f0] sm:$0xff]
    %v1002 = vld [vmem:[#allocation9 + $0x5f8] sm:$0xff]
    %v1003 = vld [vmem:[#allocation9 + $0x600] sm:$0xff]
    %v1004 = vld [vmem:[#allocation9 + $0x608] sm:$0xff]
    %v1005 = vld [vmem:[#allocation9 + $0x610] sm:$0xff]
    %v1006 = vld [vmem:[#allocation9 + $0x618] sm:$0xff]
    %v1007 = vld [vmem:[#allocation9 + $0x620] sm:$0xff]
    %v1008 = vld [vmem:[#allocation9 + $0x628] sm:$0xff]
    %v1009 = vld [vmem:[#allocation9 + $0x630] sm:$0xff]
    %v1010 = vld [vmem:[#allocation9 + $0x638] sm:$0xff]
    %v1011 = vld [vmem:[#allocation9 + $0x640] sm:$0xff]
    %v1012 = vld [vmem:[#allocation9 + $0x648] sm:$0xff]
    %v1013 = vld [vmem:[#allocation9 + $0x650] sm:$0xff]
    %v1014 = vld [vmem:[#allocation9 + $0x658] sm:$0xff]
    %v1015 = vld [vmem:[#allocation9 + $0x660] sm:$0xff]
    %v1016 = vld [vmem:[#allocation9 + $0x668] sm:$0xff]
    %v1017 = vld [vmem:[#allocation9 + $0x670] sm:$0xff]
    %v1018 = vld [vmem:[#allocation9 + $0x678] sm:$0xff]
    %v1019 = vld [vmem:[#allocation9 + $0x680] sm:$0xff]
    %v1020 = vld [vmem:[#allocation9 + $0x688] sm:$0xff]
    %v1021 = vld [vmem:[#allocation9 + $0x690] sm:$0xff]
    %v1022 = vld [vmem:[#allocation9 + $0x698] sm:$0xff]
    %v1023 = vld [vmem:[#allocation9 + $0x6a0] sm:$0xff]
    %v1024 = vld [vmem:[#allocation9 + $0x6a8] sm:$0xff]
    %v1025 = vld [vmem:[#allocation9 + $0x6b0] sm:$0xff]
    %v1026 = vld [vmem:[#allocation9 + $0x6b8] sm:$0xff]
    %v1027 = vld [vmem:[#allocation9 + $0x6c0] sm:$0xff]
    %v1028 = vld [vmem:[#allocation9 + $0x6c8] sm:$0xff]
    %v1029 = vld [vmem:[#allocation9 + $0x6d0] sm:$0xff]
    %v1030 = vld [vmem:[#allocation9 + $0x6d8] sm:$0xff]
    %v1031 = vld [vmem:[#allocation9 + $0x6e0] sm:$0xff]
    %v1032 = vld [vmem:[#allocation9 + $0x6e8] sm:$0xff]
    %v1033 = vld [vmem:[#allocation9 + $0x6f0] sm:$0xff]
    %v1034 = vld [vmem:[#allocation9 + $0x6f8] sm:$0xff]
    %v1035 = vld [vmem:[#allocation9 + $0x700] sm:$0xff]
    %v1036 = vld [vmem:[#allocation9 + $0x708] sm:$0xff]
    %v1037 = vld [vmem:[#allocation9 + $0x710] sm:$0xff]
    %v1038 = vld [vmem:[#allocation9 + $0x718] sm:$0xff]
    %v1039 = vld [vmem:[#allocation9 + $0x720] sm:$0xff]
    %v1040 = vld [vmem:[#allocation9 + $0x728] sm:$0xff]
    %v1041 = vld [vmem:[#allocation9 + $0x730] sm:$0xff]
    %v1042 = vld [vmem:[#allocation9 + $0x738] sm:$0xff]
    %v1043 = vld [vmem:[#allocation9 + $0x740] sm:$0xff]
    %v1044 = vld [vmem:[#allocation9 + $0x748] sm:$0xff]
    %v1045 = vld [vmem:[#allocation9 + $0x750] sm:$0xff]
    %v1046 = vld [vmem:[#allocation9 + $0x758] sm:$0xff]
    %v1047 = vld [vmem:[#allocation9 + $0x760] sm:$0xff]
    %v1048 = vld [vmem:[#allocation9 + $0x768] sm:$0xff]
    %v1049 = vld [vmem:[#allocation9 + $0x770] sm:$0xff]
    %v1050 = vld [vmem:[#allocation9 + $0x778] sm:$0xff]
    %v1051 = vld [vmem:[#allocation9 + $0x780] sm:$0xff]
    %v1052 = vld [vmem:[#allocation9 + $0x788] sm:$0xff]
    %v1053 = vld [vmem:[#allocation9 + $0x790] sm:$0xff]
    %v1054 = vld [vmem:[#allocation9 + $0x798] sm:$0xff]
    %v1055 = vld [vmem:[#allocation9 + $0x7a0] sm:$0xff]
    %v1056 = vld [vmem:[#allocation9 + $0x7a8] sm:$0xff]
    %v1057 = vld [vmem:[#allocation9 + $0x7b0] sm:$0xff]
    %v1058 = vld [vmem:[#allocation9 + $0x7b8] sm:$0xff]
    %v1059 = vld [vmem:[#allocation9 + $0x7c0] sm:$0xff]
    %v1060 = vld [vmem:[#allocation9 + $0x7c8] sm:$0xff]
    %v1061 = vld [vmem:[#allocation9 + $0x7d0] sm:$0xff]
    %v1062 = vld [vmem:[#allocation9 + $0x7d8] sm:$0xff]
    %v1063 = vld [vmem:[#allocation9 + $0x7e0] sm:$0xff]
    %v1064 = vld [vmem:[#allocation9 + $0x7e8] sm:$0xff]
    %v1065 = vld [vmem:[#allocation9 + $0x7f0] sm:$0xff]
    %v1066 = vld [vmem:[#allocation9 + $0x7f8] sm:$0xff]
    %v1067 = vld [vmem:[#allocation10] sm:$0xff]
    %v1069 = vperm.slane %v1067, 0
    %v1070 = vperm.slane %v1067, 1
    %v1071 = vperm.slane %v1067, 2
    %v1072 = vperm.slane %v1067, 3
    %v1073 = vperm.slane %v1067, 4
    %v1074 = vperm.slane %v1067, 5
    %v1075 = vperm.slane %v1067, 6
    %v1076 = vperm.slane %v1067, 7
    %v1341 = vunpack.c.l.b16 %v811
    %v1342 = vunpack.c.h.b16 %v811
    %v1343 = vunpack.c.l.b16 %v812
    %v1344 = vunpack.c.h.b16 %v812
    %v1345 = vunpack.c.l.b16 %v813
    %v1346 = vunpack.c.h.b16 %v813
    %v1347 = vunpack.c.l.b16 %v814
    %v1348 = vunpack.c.h.b16 %v814
    %v1349 = vunpack.c.l.b16 %v815
    %v1350 = vunpack.c.h.b16 %v815
    %v1351 = vunpack.c.l.b16 %v816
    %v1352 = vunpack.c.h.b16 %v816
    %v1353 = vunpack.c.l.b16 %v817
    %v1354 = vunpack.c.h.b16 %v817
    %v1355 = vunpack.c.l.b16 %v818
    %v1356 = vunpack.c.h.b16 %v818
    %v1357 = vunpack.c.l.b16 %v819
    %v1358 = vunpack.c.h.b16 %v819
    %v1359 = vunpack.c.l.b16 %v820
    %v1360 = vunpack.c.h.b16 %v820
    %v1361 = vunpack.c.l.b16 %v821
    %v1362 = vunpack.c.h.b16 %v821
    %v1363 = vunpack.c.l.b16 %v822
    %v1364 = vunpack.c.h.b16 %v822
    %v1365 = vunpack.c.l.b16 %v823
    %v1366 = vunpack.c.h.b16 %v823
    %v1367 = vunpack.c.l.b16 %v824
    %v1368 = vunpack.c.h.b16 %v824
    %v1369 = vunpack.c.l.b16 %v825
    %v1370 = vunpack.c.h.b16 %v825
    %v1371 = vunpack.c.l.b16 %v826
    %v1372 = vunpack.c.h.b16 %v826
    %v1373 = vunpack.c.l.b16 %v827
    %v1374 = vunpack.c.h.b16 %v827
    %v1375 = vunpack.c.l.b16 %v828
    %v1376 = vunpack.c.h.b16 %v828
    %v1377 = vunpack.c.l.b16 %v829
    %v1378 = vunpack.c.h.b16 %v829
    %v1379 = vunpack.c.l.b16 %v830
    %v1380 = vunpack.c.h.b16 %v830
    %v1381 = vunpack.c.l.b16 %v831
    %v1382 = vunpack.c.h.b16 %v831
    %v1383 = vunpack.c.l.b16 %v832
    %v1384 = vunpack.c.h.b16 %v832
    %v1385 = vunpack.c.l.b16 %v833
    %v1386 = vunpack.c.h.b16 %v833
    %v1387 = vunpack.c.l.b16 %v834
    %v1388 = vunpack.c.h.b16 %v834
    %v1389 = vunpack.c.l.b16 %v835
    %v1390 = vunpack.c.h.b16 %v835
    %v1391 = vunpack.c.l.b16 %v836
    %v1392 = vunpack.c.h.b16 %v836
    %v1393 = vunpack.c.l.b16 %v837
    %v1394 = vunpack.c.h.b16 %v837
    %v1395 = vunpack.c.l.b16 %v838
    %v1396 = vunpack.c.h.b16 %v838
    %v1397 = vunpack.c.l.b16 %v839
    %v1398 = vunpack.c.h.b16 %v839
    %v1399 = vunpack.c.l.b16 %v840
    %v1400 = vunpack.c.h.b16 %v840
    %v1401 = vunpack.c.l.b16 %v841
    %v1402 = vunpack.c.h.b16 %v841
    %v1403 = vunpack.c.l.b16 %v842
    %v1404 = vunpack.c.h.b16 %v842
    %v1405 = vunpack.c.l.b16 %v843
    %v1406 = vunpack.c.h.b16 %v843
    %v1407 = vunpack.c.l.b16 %v844
    %v1408 = vunpack.c.h.b16 %v844
    %v1409 = vunpack.c.l.b16 %v845
    %v1410 = vunpack.c.h.b16 %v845
    %v1411 = vunpack.c.l.b16 %v846
    %v1412 = vunpack.c.h.b16 %v846
    %v1413 = vunpack.c.l.b16 %v847
    %v1414 = vunpack.c.h.b16 %v847
    %v1415 = vunpack.c.l.b16 %v848
    %v1416 = vunpack.c.h.b16 %v848
    %v1417 = vunpack.c.l.b16 %v849
    %v1418 = vunpack.c.h.b16 %v849
    %v1419 = vunpack.c.l.b16 %v850
    %v1420 = vunpack.c.h.b16 %v850
    %v1421 = vunpack.c.l.b16 %v851
    %v1422 = vunpack.c.h.b16 %v851
    %v1423 = vunpack.c.l.b16 %v852
    %v1424 = vunpack.c.h.b16 %v852
    %v1425 = vunpack.c.l.b16 %v853
    %v1426 = vunpack.c.h.b16 %v853
    %v1427 = vunpack.c.l.b16 %v854
    %v1428 = vunpack.c.h.b16 %v854
    %v1429 = vunpack.c.l.b16 %v855
    %v1430 = vunpack.c.h.b16 %v855
    %v1431 = vunpack.c.l.b16 %v856
    %v1432 = vunpack.c.h.b16 %v856
    %v1433 = vunpack.c.l.b16 %v857
    %v1434 = vunpack.c.h.b16 %v857
    %v1435 = vunpack.c.l.b16 %v858
    %v1436 = vunpack.c.h.b16 %v858
    %v1437 = vunpack.c.l.b16 %v859
    %v1438 = vunpack.c.h.b16 %v859
    %v1439 = vunpack.c.l.b16 %v860
    %v1440 = vunpack.c.h.b16 %v860
    %v1441 = vunpack.c.l.b16 %v861
    %v1442 = vunpack.c.h.b16 %v861
    %v1443 = vunpack.c.l.b16 %v862
    %v1444 = vunpack.c.h.b16 %v862
    %v1445 = vunpack.c.l.b16 %v863
    %v1446 = vunpack.c.h.b16 %v863
    %v1447 = vunpack.c.l.b16 %v864
    %v1448 = vunpack.c.h.b16 %v864
    %v1449 = vunpack.c.l.b16 %v865
    %v1450 = vunpack.c.h.b16 %v865
    %v1451 = vunpack.c.l.b16 %v866
    %v1452 = vunpack.c.h.b16 %v866
    %v1453 = vunpack.c.l.b16 %v867
    %v1454 = vunpack.c.h.b16 %v867
    %v1455 = vunpack.c.l.b16 %v868
    %v1456 = vunpack.c.h.b16 %v868
    %v1457 = vunpack.c.l.b16 %v869
    %v1458 = vunpack.c.h.b16 %v869
    %v1459 = vunpack.c.l.b16 %v870
    %v1460 = vunpack.c.h.b16 %v870
    %v1461 = vunpack.c.l.b16 %v871
    %v1462 = vunpack.c.h.b16 %v871
    %v1463 = vunpack.c.l.b16 %v872
    %v1464 = vunpack.c.h.b16 %v872
    %v1465 = vunpack.c.l.b16 %v873
    %v1466 = vunpack.c.h.b16 %v873
    %v1467 = vunpack.c.l.b16 %v874
    %v1468 = vunpack.c.h.b16 %v874
    %v1469 = vunpack.c.l.b16 %v875
    %v1470 = vunpack.c.h.b16 %v875
    %v1471 = vunpack.c.l.b16 %v876
    %v1472 = vunpack.c.h.b16 %v876
    %v1473 = vunpack.c.l.b16 %v877
    %v1474 = vunpack.c.h.b16 %v877
    %v1475 = vunpack.c.l.b16 %v878
    %v1476 = vunpack.c.h.b16 %v878
    %v1477 = vunpack.c.l.b16 %v879
    %v1478 = vunpack.c.h.b16 %v879
    %v1479 = vunpack.c.l.b16 %v880
    %v1480 = vunpack.c.h.b16 %v880
    %v1481 = vunpack.c.l.b16 %v881
    %v1482 = vunpack.c.h.b16 %v881
    %v1483 = vunpack.c.l.b16 %v882
    %v1484 = vunpack.c.h.b16 %v882
    %v1485 = vunpack.c.l.b16 %v883
    %v1486 = vunpack.c.h.b16 %v883
    %v1487 = vunpack.c.l.b16 %v884
    %v1488 = vunpack.c.h.b16 %v884
    %v1489 = vunpack.c.l.b16 %v885
    %v1490 = vunpack.c.h.b16 %v885
    %v1491 = vunpack.c.l.b16 %v886
    %v1492 = vunpack.c.h.b16 %v886
    %v1493 = vunpack.c.l.b16 %v887
    %v1494 = vunpack.c.h.b16 %v887
    %v1495 = vunpack.c.l.b16 %v888
    %v1496 = vunpack.c.h.b16 %v888
    %v1497 = vunpack.c.l.b16 %v889
    %v1498 = vunpack.c.h.b16 %v889
    %v1499 = vunpack.c.l.b16 %v890
    %v1500 = vunpack.c.h.b16 %v890
    %v1501 = vunpack.c.l.b16 %v891
    %v1502 = vunpack.c.h.b16 %v891
    %v1503 = vunpack.c.l.b16 %v892
    %v1504 = vunpack.c.h.b16 %v892
    %v1505 = vunpack.c.l.b16 %v893
    %v1506 = vunpack.c.h.b16 %v893
    %v1507 = vunpack.c.l.b16 %v894
    %v1508 = vunpack.c.h.b16 %v894
    %v1509 = vunpack.c.l.b16 %v895
    %v1510 = vunpack.c.h.b16 %v895
    %v1511 = vunpack.c.l.b16 %v896
    %v1512 = vunpack.c.h.b16 %v896
    %v1513 = vunpack.c.l.b16 %v897
    %v1514 = vunpack.c.h.b16 %v897
    %v1515 = vunpack.c.l.b16 %v898
    %v1516 = vunpack.c.h.b16 %v898
    %v1517 = vunpack.c.l.b16 %v899
    %v1518 = vunpack.c.h.b16 %v899
    %v1519 = vunpack.c.l.b16 %v900
    %v1520 = vunpack.c.h.b16 %v900
    %v1521 = vunpack.c.l.b16 %v901
    %v1522 = vunpack.c.h.b16 %v901
    %v1523 = vunpack.c.l.b16 %v902
    %v1524 = vunpack.c.h.b16 %v902
    %v1525 = vunpack.c.l.b16 %v903
    %v1526 = vunpack.c.h.b16 %v903
    %v1527 = vunpack.c.l.b16 %v904
    %v1528 = vunpack.c.h.b16 %v904
    %v1529 = vunpack.c.l.b16 %v905
    %v1530 = vunpack.c.h.b16 %v905
    %v1531 = vunpack.c.l.b16 %v906
    %v1532 = vunpack.c.h.b16 %v906
    %v1533 = vunpack.c.l.b16 %v907
    %v1534 = vunpack.c.h.b16 %v907
    %v1535 = vunpack.c.l.b16 %v908
    %v1536 = vunpack.c.h.b16 %v908
    %v1537 = vunpack.c.l.b16 %v909
    %v1538 = vunpack.c.h.b16 %v909
    %v1539 = vunpack.c.l.b16 %v910
    %v1540 = vunpack.c.h.b16 %v910
    %v1541 = vunpack.c.l.b16 %v911
    %v1542 = vunpack.c.h.b16 %v911
    %v1543 = vunpack.c.l.b16 %v912
    %v1544 = vunpack.c.h.b16 %v912
    %v1545 = vunpack.c.l.b16 %v913
    %v1546 = vunpack.c.h.b16 %v913
    %v1547 = vunpack.c.l.b16 %v914
    %v1548 = vunpack.c.h.b16 %v914
    %v1549 = vunpack.c.l.b16 %v915
    %v1550 = vunpack.c.h.b16 %v915
    %v1551 = vunpack.c.l.b16 %v916
    %v1552 = vunpack.c.h.b16 %v916
    %v1553 = vunpack.c.l.b16 %v917
    %v1554 = vunpack.c.h.b16 %v917
    %v1555 = vunpack.c.l.b16 %v918
    %v1556 = vunpack.c.h.b16 %v918
    %v1557 = vunpack.c.l.b16 %v919
    %v1558 = vunpack.c.h.b16 %v919
    %v1559 = vunpack.c.l.b16 %v920
    %v1560 = vunpack.c.h.b16 %v920
    %v1561 = vunpack.c.l.b16 %v921
    %v1562 = vunpack.c.h.b16 %v921
    %v1563 = vunpack.c.l.b16 %v922
    %v1564 = vunpack.c.h.b16 %v922
    %v1565 = vunpack.c.l.b16 %v923
    %v1566 = vunpack.c.h.b16 %v923
    %v1567 = vunpack.c.l.b16 %v924
    %v1568 = vunpack.c.h.b16 %v924
    %v1569 = vunpack.c.l.b16 %v925
    %v1570 = vunpack.c.h.b16 %v925
    %v1571 = vunpack.c.l.b16 %v926
    %v1572 = vunpack.c.h.b16 %v926
    %v1573 = vunpack.c.l.b16 %v927
    %v1574 = vunpack.c.h.b16 %v927
    %v1575 = vunpack.c.l.b16 %v928
    %v1576 = vunpack.c.h.b16 %v928
    %v1577 = vunpack.c.l.b16 %v929
    %v1578 = vunpack.c.h.b16 %v929
    %v1579 = vunpack.c.l.b16 %v930
    %v1580 = vunpack.c.h.b16 %v930
    %v1581 = vunpack.c.l.b16 %v931
    %v1582 = vunpack.c.h.b16 %v931
    %v1583 = vunpack.c.l.b16 %v932
    %v1584 = vunpack.c.h.b16 %v932
    %v1585 = vunpack.c.l.b16 %v933
    %v1586 = vunpack.c.h.b16 %v933
    %v1587 = vunpack.c.l.b16 %v934
    %v1588 = vunpack.c.h.b16 %v934
    %v1589 = vunpack.c.l.b16 %v935
    %v1590 = vunpack.c.h.b16 %v935
    %v1591 = vunpack.c.l.b16 %v936
    %v1592 = vunpack.c.h.b16 %v936
    %v1593 = vunpack.c.l.b16 %v937
    %v1594 = vunpack.c.h.b16 %v937
    %v1595 = vunpack.c.l.b16 %v938
    %v1596 = vunpack.c.h.b16 %v938
    %v1597 = vunpack.c.l.b16 %v939
    %v1598 = vunpack.c.h.b16 %v939
    %v1599 = vunpack.c.l.b16 %v940
    %v1600 = vunpack.c.h.b16 %v940
    %v1601 = vunpack.c.l.b16 %v941
    %v1602 = vunpack.c.h.b16 %v941
    %v1603 = vunpack.c.l.b16 %v942
    %v1604 = vunpack.c.h.b16 %v942
    %v1605 = vunpack.c.l.b16 %v943
    %v1606 = vunpack.c.h.b16 %v943
    %v1607 = vunpack.c.l.b16 %v944
    %v1608 = vunpack.c.h.b16 %v944
    %v1609 = vunpack.c.l.b16 %v945
    %v1610 = vunpack.c.h.b16 %v945
    %v1611 = vunpack.c.l.b16 %v946
    %v1612 = vunpack.c.h.b16 %v946
    %v1613 = vunpack.c.l.b16 %v947
    %v1614 = vunpack.c.h.b16 %v947
    %v1615 = vunpack.c.l.b16 %v948
    %v1616 = vunpack.c.h.b16 %v948
    %v1617 = vunpack.c.l.b16 %v949
    %v1618 = vunpack.c.h.b16 %v949
    %v1619 = vunpack.c.l.b16 %v950
    %v1620 = vunpack.c.h.b16 %v950
    %v1621 = vunpack.c.l.b16 %v951
    %v1622 = vunpack.c.h.b16 %v951
    %v1623 = vunpack.c.l.b16 %v952
    %v1624 = vunpack.c.h.b16 %v952
    %v1625 = vunpack.c.l.b16 %v953
    %v1626 = vunpack.c.h.b16 %v953
    %v1627 = vunpack.c.l.b16 %v954
    %v1628 = vunpack.c.h.b16 %v954
    %v1629 = vunpack.c.l.b16 %v955
    %v1630 = vunpack.c.h.b16 %v955
    %v1631 = vunpack.c.l.b16 %v956
    %v1632 = vunpack.c.h.b16 %v956
    %v1633 = vunpack.c.l.b16 %v957
    %v1634 = vunpack.c.h.b16 %v957
    %v1635 = vunpack.c.l.b16 %v958
    %v1636 = vunpack.c.h.b16 %v958
    %v1637 = vunpack.c.l.b16 %v959
    %v1638 = vunpack.c.h.b16 %v959
    %v1639 = vunpack.c.l.b16 %v960
    %v1640 = vunpack.c.h.b16 %v960
    %v1641 = vunpack.c.l.b16 %v961
    %v1642 = vunpack.c.h.b16 %v961
    %v1643 = vunpack.c.l.b16 %v962
    %v1644 = vunpack.c.h.b16 %v962
    %v1645 = vunpack.c.l.b16 %v963
    %v1646 = vunpack.c.h.b16 %v963
    %v1647 = vunpack.c.l.b16 %v964
    %v1648 = vunpack.c.h.b16 %v964
    %v1649 = vunpack.c.l.b16 %v965
    %v1650 = vunpack.c.h.b16 %v965
    %v1651 = vunpack.c.l.b16 %v966
    %v1652 = vunpack.c.h.b16 %v966
    %v1653 = vunpack.c.l.b16 %v967
    %v1654 = vunpack.c.h.b16 %v967
    %v1655 = vunpack.c.l.b16 %v968
    %v1656 = vunpack.c.h.b16 %v968
    %v1657 = vunpack.c.l.b16 %v969
    %v1658 = vunpack.c.h.b16 %v969
    %v1659 = vunpack.c.l.b16 %v970
    %v1660 = vunpack.c.h.b16 %v970
    %v1661 = vunpack.c.l.b16 %v971
    %v1662 = vunpack.c.h.b16 %v971
    %v1663 = vunpack.c.l.b16 %v972
    %v1664 = vunpack.c.h.b16 %v972
    %v1665 = vunpack.c.l.b16 %v973
    %v1666 = vunpack.c.h.b16 %v973
    %v1667 = vunpack.c.l.b16 %v974
    %v1668 = vunpack.c.h.b16 %v974
    %v1669 = vunpack.c.l.b16 %v975
    %v1670 = vunpack.c.h.b16 %v975
    %v1671 = vunpack.c.l.b16 %v976
    %v1672 = vunpack.c.h.b16 %v976
    %v1673 = vunpack.c.l.b16 %v977
    %v1674 = vunpack.c.h.b16 %v977
    %v1675 = vunpack.c.l.b16 %v978
    %v1676 = vunpack.c.h.b16 %v978
    %v1677 = vunpack.c.l.b16 %v979
    %v1678 = vunpack.c.h.b16 %v979
    %v1679 = vunpack.c.l.b16 %v980
    %v1680 = vunpack.c.h.b16 %v980
    %v1681 = vunpack.c.l.b16 %v981
    %v1682 = vunpack.c.h.b16 %v981
    %v1683 = vunpack.c.l.b16 %v982
    %v1684 = vunpack.c.h.b16 %v982
    %v1685 = vunpack.c.l.b16 %v983
    %v1686 = vunpack.c.h.b16 %v983
    %v1687 = vunpack.c.l.b16 %v984
    %v1688 = vunpack.c.h.b16 %v984
    %v1689 = vunpack.c.l.b16 %v985
    %v1690 = vunpack.c.h.b16 %v985
    %v1691 = vunpack.c.l.b16 %v986
    %v1692 = vunpack.c.h.b16 %v986
    %v1693 = vunpack.c.l.b16 %v987
    %v1694 = vunpack.c.h.b16 %v987
    %v1695 = vunpack.c.l.b16 %v988
    %v1696 = vunpack.c.h.b16 %v988
    %v1697 = vunpack.c.l.b16 %v989
    %v1698 = vunpack.c.h.b16 %v989
    %v1699 = vunpack.c.l.b16 %v990
    %v1700 = vunpack.c.h.b16 %v990
    %v1701 = vunpack.c.l.b16 %v991
    %v1702 = vunpack.c.h.b16 %v991
    %v1703 = vunpack.c.l.b16 %v992
    %v1704 = vunpack.c.h.b16 %v992
    %v1705 = vunpack.c.l.b16 %v993
    %v1706 = vunpack.c.h.b16 %v993
    %v1707 = vunpack.c.l.b16 %v994
    %v1708 = vunpack.c.h.b16 %v994
    %v1709 = vunpack.c.l.b16 %v995
    %v1710 = vunpack.c.h.b16 %v995
    %v1711 = vunpack.c.l.b16 %v996
    %v1712 = vunpack.c.h.b16 %v996
    %v1713 = vunpack.c.l.b16 %v997
    %v1714 = vunpack.c.h.b16 %v997
    %v1715 = vunpack.c.l.b16 %v998
    %v1716 = vunpack.c.h.b16 %v998
    %v1717 = vunpack.c.l.b16 %v999
    %v1718 = vunpack.c.h.b16 %v999
    %v1719 = vunpack.c.l.b16 %v1000
    %v1720 = vunpack.c.h.b16 %v1000
    %v1721 = vunpack.c.l.b16 %v1001
    %v1722 = vunpack.c.h.b16 %v1001
    %v1723 = vunpack.c.l.b16 %v1002
    %v1724 = vunpack.c.h.b16 %v1002
    %v1725 = vunpack.c.l.b16 %v1003
    %v1726 = vunpack.c.h.b16 %v1003
    %v1727 = vunpack.c.l.b16 %v1004
    %v1728 = vunpack.c.h.b16 %v1004
    %v1729 = vunpack.c.l.b16 %v1005
    %v1730 = vunpack.c.h.b16 %v1005
    %v1731 = vunpack.c.l.b16 %v1006
    %v1732 = vunpack.c.h.b16 %v1006
    %v1733 = vunpack.c.l.b16 %v1007
    %v1734 = vunpack.c.h.b16 %v1007
    %v1735 = vunpack.c.l.b16 %v1008
    %v1736 = vunpack.c.h.b16 %v1008
    %v1737 = vunpack.c.l.b16 %v1009
    %v1738 = vunpack.c.h.b16 %v1009
    %v1739 = vunpack.c.l.b16 %v1010
    %v1740 = vunpack.c.h.b16 %v1010
    %v1741 = vunpack.c.l.b16 %v1011
    %v1742 = vunpack.c.h.b16 %v1011
    %v1743 = vunpack.c.l.b16 %v1012
    %v1744 = vunpack.c.h.b16 %v1012
    %v1745 = vunpack.c.l.b16 %v1013
    %v1746 = vunpack.c.h.b16 %v1013
    %v1747 = vunpack.c.l.b16 %v1014
    %v1748 = vunpack.c.h.b16 %v1014
    %v1749 = vunpack.c.l.b16 %v1015
    %v1750 = vunpack.c.h.b16 %v1015
    %v1751 = vunpack.c.l.b16 %v1016
    %v1752 = vunpack.c.h.b16 %v1016
    %v1753 = vunpack.c.l.b16 %v1017
    %v1754 = vunpack.c.h.b16 %v1017
    %v1755 = vunpack.c.l.b16 %v1018
    %v1756 = vunpack.c.h.b16 %v1018
    %v1757 = vunpack.c.l.b16 %v1019
    %v1758 = vunpack.c.h.b16 %v1019
    %v1759 = vunpack.c.l.b16 %v1020
    %v1760 = vunpack.c.h.b16 %v1020
    %v1761 = vunpack.c.l.b16 %v1021
    %v1762 = vunpack.c.h.b16 %v1021
    %v1763 = vunpack.c.l.b16 %v1022
    %v1764 = vunpack.c.h.b16 %v1022
    %v1765 = vunpack.c.l.b16 %v1023
    %v1766 = vunpack.c.h.b16 %v1023
    %v1767 = vunpack.c.l.b16 %v1024
    %v1768 = vunpack.c.h.b16 %v1024
    %v1769 = vunpack.c.l.b16 %v1025
    %v1770 = vunpack.c.h.b16 %v1025
    %v1771 = vunpack.c.l.b16 %v1026
    %v1772 = vunpack.c.h.b16 %v1026
    %v1773 = vunpack.c.l.b16 %v1027
    %v1774 = vunpack.c.h.b16 %v1027
    %v1775 = vunpack.c.l.b16 %v1028
    %v1776 = vunpack.c.h.b16 %v1028
    %v1777 = vunpack.c.l.b16 %v1029
    %v1778 = vunpack.c.h.b16 %v1029
    %v1779 = vunpack.c.l.b16 %v1030
    %v1780 = vunpack.c.h.b16 %v1030
    %v1781 = vunpack.c.l.b16 %v1031
    %v1782 = vunpack.c.h.b16 %v1031
    %v1783 = vunpack.c.l.b16 %v1032
    %v1784 = vunpack.c.h.b16 %v1032
    %v1785 = vunpack.c.l.b16 %v1033
    %v1786 = vunpack.c.h.b16 %v1033
    %v1787 = vunpack.c.l.b16 %v1034
    %v1788 = vunpack.c.h.b16 %v1034
    %v1789 = vunpack.c.l.b16 %v1035
    %v1790 = vunpack.c.h.b16 %v1035
    %v1791 = vunpack.c.l.b16 %v1036
    %v1792 = vunpack.c.h.b16 %v1036
    %v1793 = vunpack.c.l.b16 %v1037
    %v1794 = vunpack.c.h.b16 %v1037
    %v1795 = vunpack.c.l.b16 %v1038
    %v1796 = vunpack.c.h.b16 %v1038
    %v1797 = vunpack.c.l.b16 %v1039
    %v1798 = vunpack.c.h.b16 %v1039
    %v1799 = vunpack.c.l.b16 %v1040
    %v1800 = vunpack.c.h.b16 %v1040
    %v1801 = vunpack.c.l.b16 %v1041
    %v1802 = vunpack.c.h.b16 %v1041
    %v1803 = vunpack.c.l.b16 %v1042
    %v1804 = vunpack.c.h.b16 %v1042
    %v1805 = vunpack.c.l.b16 %v1043
    %v1806 = vunpack.c.h.b16 %v1043
    %v1807 = vunpack.c.l.b16 %v1044
    %v1808 = vunpack.c.h.b16 %v1044
    %v1809 = vunpack.c.l.b16 %v1045
    %v1810 = vunpack.c.h.b16 %v1045
    %v1811 = vunpack.c.l.b16 %v1046
    %v1812 = vunpack.c.h.b16 %v1046
    %v1813 = vunpack.c.l.b16 %v1047
    %v1814 = vunpack.c.h.b16 %v1047
    %v1815 = vunpack.c.l.b16 %v1048
    %v1816 = vunpack.c.h.b16 %v1048
    %v1817 = vunpack.c.l.b16 %v1049
    %v1818 = vunpack.c.h.b16 %v1049
    %v1819 = vunpack.c.l.b16 %v1050
    %v1820 = vunpack.c.h.b16 %v1050
    %v1821 = vunpack.c.l.b16 %v1051
    %v1822 = vunpack.c.h.b16 %v1051
    %v1823 = vunpack.c.l.b16 %v1052
    %v1824 = vunpack.c.h.b16 %v1052
    %v1825 = vunpack.c.l.b16 %v1053
    %v1826 = vunpack.c.h.b16 %v1053
    %v1827 = vunpack.c.l.b16 %v1054
    %v1828 = vunpack.c.h.b16 %v1054
    %v1829 = vunpack.c.l.b16 %v1055
    %v1830 = vunpack.c.h.b16 %v1055
    %v1831 = vunpack.c.l.b16 %v1056
    %v1832 = vunpack.c.h.b16 %v1056
    %v1833 = vunpack.c.l.b16 %v1057
    %v1834 = vunpack.c.h.b16 %v1057
    %v1835 = vunpack.c.l.b16 %v1058
    %v1836 = vunpack.c.h.b16 %v1058
    %v1837 = vunpack.c.l.b16 %v1059
    %v1838 = vunpack.c.h.b16 %v1059
    %v1839 = vunpack.c.l.b16 %v1060
    %v1840 = vunpack.c.h.b16 %v1060
    %v1841 = vunpack.c.l.b16 %v1061
    %v1842 = vunpack.c.h.b16 %v1061
    %v1843 = vunpack.c.l.b16 %v1062
    %v1844 = vunpack.c.h.b16 %v1062
    %v1845 = vunpack.c.l.b16 %v1063
    %v1846 = vunpack.c.h.b16 %v1063
    %v1847 = vunpack.c.l.b16 %v1064
    %v1848 = vunpack.c.h.b16 %v1064
    %v1849 = vunpack.c.l.b16 %v1065
    %v1850 = vunpack.c.h.b16 %v1065
    %v1851 = vunpack.c.l.b16 %v1066
    %v1852 = vunpack.c.h.b16 %v1066
    %v1853 = vpack.c.b16 %v1349, %v1341
    %v1854 = vpack.c.b16 %v1350, %v1342
    %v1855 = vpack.c.b16 %v1351, %v1343
    %v1856 = vpack.c.b16 %v1352, %v1344
    %v1857 = vpack.c.b16 %v1353, %v1345
    %v1858 = vpack.c.b16 %v1354, %v1346
    %v1859 = vpack.c.b16 %v1355, %v1347
    %v1860 = vpack.c.b16 %v1356, %v1348
    %v1861 = vpack.c.b16 %v1365, %v1357
    %v1862 = vpack.c.b16 %v1366, %v1358
    %v1863 = vpack.c.b16 %v1367, %v1359
    %v1864 = vpack.c.b16 %v1368, %v1360
    %v1865 = vpack.c.b16 %v1369, %v1361
    %v1866 = vpack.c.b16 %v1370, %v1362
    %v1867 = vpack.c.b16 %v1371, %v1363
    %v1868 = vpack.c.b16 %v1372, %v1364
    %v1869 = vpack.c.b16 %v1381, %v1373
    %v1870 = vpack.c.b16 %v1382, %v1374
    %v1871 = vpack.c.b16 %v1383, %v1375
    %v1872 = vpack.c.b16 %v1384, %v1376
    %v1873 = vpack.c.b16 %v1385, %v1377
    %v1874 = vpack.c.b16 %v1386, %v1378
    %v1875 = vpack.c.b16 %v1387, %v1379
    %v1876 = vpack.c.b16 %v1388, %v1380
    %v1877 = vpack.c.b16 %v1397, %v1389
    %v1878 = vpack.c.b16 %v1398, %v1390
    %v1879 = vpack.c.b16 %v1399, %v1391
    %v1880 = vpack.c.b16 %v1400, %v1392
    %v1881 = vpack.c.b16 %v1401, %v1393
    %v1882 = vpack.c.b16 %v1402, %v1394
    %v1883 = vpack.c.b16 %v1403, %v1395
    %v1884 = vpack.c.b16 %v1404, %v1396
    %v1885 = vpack.c.b16 %v1413, %v1405
    %v1886 = vpack.c.b16 %v1414, %v1406
    %v1887 = vpack.c.b16 %v1415, %v1407
    %v1888 = vpack.c.b16 %v1416, %v1408
    %v1889 = vpack.c.b16 %v1417, %v1409
    %v1890 = vpack.c.b16 %v1418, %v1410
    %v1891 = vpack.c.b16 %v1419, %v1411
    %v1892 = vpack.c.b16 %v1420, %v1412
    %v1893 = vpack.c.b16 %v1429, %v1421
    %v1894 = vpack.c.b16 %v1430, %v1422
    %v1895 = vpack.c.b16 %v1431, %v1423
    %v1896 = vpack.c.b16 %v1432, %v1424
    %v1897 = vpack.c.b16 %v1433, %v1425
    %v1898 = vpack.c.b16 %v1434, %v1426
    %v1899 = vpack.c.b16 %v1435, %v1427
    %v1900 = vpack.c.b16 %v1436, %v1428
    %v1901 = vpack.c.b16 %v1445, %v1437
    %v1902 = vpack.c.b16 %v1446, %v1438
    %v1903 = vpack.c.b16 %v1447, %v1439
    %v1904 = vpack.c.b16 %v1448, %v1440
    %v1905 = vpack.c.b16 %v1449, %v1441
    %v1906 = vpack.c.b16 %v1450, %v1442
    %v1907 = vpack.c.b16 %v1451, %v1443
    %v1908 = vpack.c.b16 %v1452, %v1444
    %v1909 = vpack.c.b16 %v1461, %v1453
    %v1910 = vpack.c.b16 %v1462, %v1454
    %v1911 = vpack.c.b16 %v1463, %v1455
    %v1912 = vpack.c.b16 %v1464, %v1456
    %v1913 = vpack.c.b16 %v1465, %v1457
    %v1914 = vpack.c.b16 %v1466, %v1458
    %v1915 = vpack.c.b16 %v1467, %v1459
    %v1916 = vpack.c.b16 %v1468, %v1460
    %v1917 = vpack.c.b16 %v1477, %v1469
    %v1918 = vpack.c.b16 %v1478, %v1470
    %v1919 = vpack.c.b16 %v1479, %v1471
    %v1920 = vpack.c.b16 %v1480, %v1472
    %v1921 = vpack.c.b16 %v1481, %v1473
    %v1922 = vpack.c.b16 %v1482, %v1474
    %v1923 = vpack.c.b16 %v1483, %v1475
    %v1924 = vpack.c.b16 %v1484, %v1476
    %v1925 = vpack.c.b16 %v1493, %v1485
    %v1926 = vpack.c.b16 %v1494, %v1486
    %v1927 = vpack.c.b16 %v1495, %v1487
    %v1928 = vpack.c.b16 %v1496, %v1488
    %v1929 = vpack.c.b16 %v1497, %v1489
    %v1930 = vpack.c.b16 %v1498, %v1490
    %v1931 = vpack.c.b16 %v1499, %v1491
    %v1932 = vpack.c.b16 %v1500, %v1492
    %v1933 = vpack.c.b16 %v1509, %v1501
    %v1934 = vpack.c.b16 %v1510, %v1502
    %v1935 = vpack.c.b16 %v1511, %v1503
    %v1936 = vpack.c.b16 %v1512, %v1504
    %v1937 = vpack.c.b16 %v1513, %v1505
    %v1938 = vpack.c.b16 %v1514, %v1506
    %v1939 = vpack.c.b16 %v1515, %v1507
    %v1940 = vpack.c.b16 %v1516, %v1508
    %v1941 = vpack.c.b16 %v1525, %v1517
    %v1942 = vpack.c.b16 %v1526, %v1518
    %v1943 = vpack.c.b16 %v1527, %v1519
    %v1944 = vpack.c.b16 %v1528, %v1520
    %v1945 = vpack.c.b16 %v1529, %v1521
    %v1946 = vpack.c.b16 %v1530, %v1522
    %v1947 = vpack.c.b16 %v1531, %v1523
    %v1948 = vpack.c.b16 %v1532, %v1524
    %v1949 = vpack.c.b16 %v1541, %v1533
    %v1950 = vpack.c.b16 %v1542, %v1534
    %v1951 = vpack.c.b16 %v1543, %v1535
    %v1952 = vpack.c.b16 %v1544, %v1536
    %v1953 = vpack.c.b16 %v1545, %v1537
    %v1954 = vpack.c.b16 %v1546, %v1538
    %v1955 = vpack.c.b16 %v1547, %v1539
    %v1956 = vpack.c.b16 %v1548, %v1540
    %v1957 = vpack.c.b16 %v1557, %v1549
    %v1958 = vpack.c.b16 %v1558, %v1550
    %v1959 = vpack.c.b16 %v1559, %v1551
    %v1960 = vpack.c.b16 %v1560, %v1552
    %v1961 = vpack.c.b16 %v1561, %v1553
    %v1962 = vpack.c.b16 %v1562, %v1554
    %v1963 = vpack.c.b16 %v1563, %v1555
    %v1964 = vpack.c.b16 %v1564, %v1556
    %v1965 = vpack.c.b16 %v1573, %v1565
    %v1966 = vpack.c.b16 %v1574, %v1566
    %v1967 = vpack.c.b16 %v1575, %v1567
    %v1968 = vpack.c.b16 %v1576, %v1568
    %v1969 = vpack.c.b16 %v1577, %v1569
    %v1970 = vpack.c.b16 %v1578, %v1570
    %v1971 = vpack.c.b16 %v1579, %v1571
    %v1972 = vpack.c.b16 %v1580, %v1572
    %v1973 = vpack.c.b16 %v1589, %v1581
    %v1974 = vpack.c.b16 %v1590, %v1582
    %v1975 = vpack.c.b16 %v1591, %v1583
    %v1976 = vpack.c.b16 %v1592, %v1584
    %v1977 = vpack.c.b16 %v1593, %v1585
    %v1978 = vpack.c.b16 %v1594, %v1586
    %v1979 = vpack.c.b16 %v1595, %v1587
    %v1980 = vpack.c.b16 %v1596, %v1588
    %v1981 = vpack.c.b16 %v1605, %v1597
    %v1982 = vpack.c.b16 %v1606, %v1598
    %v1983 = vpack.c.b16 %v1607, %v1599
    %v1984 = vpack.c.b16 %v1608, %v1600
    %v1985 = vpack.c.b16 %v1609, %v1601
    %v1986 = vpack.c.b16 %v1610, %v1602
    %v1987 = vpack.c.b16 %v1611, %v1603
    %v1988 = vpack.c.b16 %v1612, %v1604
    %v1989 = vpack.c.b16 %v1621, %v1613
    %v1990 = vpack.c.b16 %v1622, %v1614
    %v1991 = vpack.c.b16 %v1623, %v1615
    %v1992 = vpack.c.b16 %v1624, %v1616
    %v1993 = vpack.c.b16 %v1625, %v1617
    %v1994 = vpack.c.b16 %v1626, %v1618
    %v1995 = vpack.c.b16 %v1627, %v1619
    %v1996 = vpack.c.b16 %v1628, %v1620
    %v1997 = vpack.c.b16 %v1637, %v1629
    %v1998 = vpack.c.b16 %v1638, %v1630
    %v1999 = vpack.c.b16 %v1639, %v1631
    %v2000 = vpack.c.b16 %v1640, %v1632
    %v2001 = vpack.c.b16 %v1641, %v1633
    %v2002 = vpack.c.b16 %v1642, %v1634
    %v2003 = vpack.c.b16 %v1643, %v1635
    %v2004 = vpack.c.b16 %v1644, %v1636
    %v2005 = vpack.c.b16 %v1653, %v1645
    %v2006 = vpack.c.b16 %v1654, %v1646
    %v2007 = vpack.c.b16 %v1655, %v1647
    %v2008 = vpack.c.b16 %v1656, %v1648
    %v2009 = vpack.c.b16 %v1657, %v1649
    %v2010 = vpack.c.b16 %v1658, %v1650
    %v2011 = vpack.c.b16 %v1659, %v1651
    %v2012 = vpack.c.b16 %v1660, %v1652
    %v2013 = vpack.c.b16 %v1669, %v1661
    %v2014 = vpack.c.b16 %v1670, %v1662
    %v2015 = vpack.c.b16 %v1671, %v1663
    %v2016 = vpack.c.b16 %v1672, %v1664
    %v2017 = vpack.c.b16 %v1673, %v1665
    %v2018 = vpack.c.b16 %v1674, %v1666
    %v2019 = vpack.c.b16 %v1675, %v1667
    %v2020 = vpack.c.b16 %v1676, %v1668
    %v2021 = vpack.c.b16 %v1685, %v1677
    %v2022 = vpack.c.b16 %v1686, %v1678
    %v2023 = vpack.c.b16 %v1687, %v1679
    %v2024 = vpack.c.b16 %v1688, %v1680
    %v2025 = vpack.c.b16 %v1689, %v1681
    %v2026 = vpack.c.b16 %v1690, %v1682
    %v2027 = vpack.c.b16 %v1691, %v1683
    %v2028 = vpack.c.b16 %v1692, %v1684
    %v2029 = vpack.c.b16 %v1701, %v1693
    %v2030 = vpack.c.b16 %v1702, %v1694
    %v2031 = vpack.c.b16 %v1703, %v1695
    %v2032 = vpack.c.b16 %v1704, %v1696
    %v2033 = vpack.c.b16 %v1705, %v1697
    %v2034 = vpack.c.b16 %v1706, %v1698
    %v2035 = vpack.c.b16 %v1707, %v1699
    %v2036 = vpack.c.b16 %v1708, %v1700
    %v2037 = vpack.c.b16 %v1717, %v1709
    %v2038 = vpack.c.b16 %v1718, %v1710
    %v2039 = vpack.c.b16 %v1719, %v1711
    %v2040 = vpack.c.b16 %v1720, %v1712
    %v2041 = vpack.c.b16 %v1721, %v1713
    %v2042 = vpack.c.b16 %v1722, %v1714
    %v2043 = vpack.c.b16 %v1723, %v1715
    %v2044 = vpack.c.b16 %v1724, %v1716
    %v2045 = vpack.c.b16 %v1733, %v1725
    %v2046 = vpack.c.b16 %v1734, %v1726
    %v2047 = vpack.c.b16 %v1735, %v1727
    %v2048 = vpack.c.b16 %v1736, %v1728
    %v2049 = vpack.c.b16 %v1737, %v1729
    %v2050 = vpack.c.b16 %v1738, %v1730
    %v2051 = vpack.c.b16 %v1739, %v1731
    %v2052 = vpack.c.b16 %v1740, %v1732
    %v2053 = vpack.c.b16 %v1749, %v1741
    %v2054 = vpack.c.b16 %v1750, %v1742
    %v2055 = vpack.c.b16 %v1751, %v1743
    %v2056 = vpack.c.b16 %v1752, %v1744
    %v2057 = vpack.c.b16 %v1753, %v1745
    %v2058 = vpack.c.b16 %v1754, %v1746
    %v2059 = vpack.c.b16 %v1755, %v1747
    %v2060 = vpack.c.b16 %v1756, %v1748
    %v2061 = vpack.c.b16 %v1765, %v1757
    %v2062 = vpack.c.b16 %v1766, %v1758
    %v2063 = vpack.c.b16 %v1767, %v1759
    %v2064 = vpack.c.b16 %v1768, %v1760
    %v2065 = vpack.c.b16 %v1769, %v1761
    %v2066 = vpack.c.b16 %v1770, %v1762
    %v2067 = vpack.c.b16 %v1771, %v1763
    %v2068 = vpack.c.b16 %v1772, %v1764
    %v2069 = vpack.c.b16 %v1781, %v1773
    %v2070 = vpack.c.b16 %v1782, %v1774
    %v2071 = vpack.c.b16 %v1783, %v1775
    %v2072 = vpack.c.b16 %v1784, %v1776
    %v2073 = vpack.c.b16 %v1785, %v1777
    %v2074 = vpack.c.b16 %v1786, %v1778
    %v2075 = vpack.c.b16 %v1787, %v1779
    %v2076 = vpack.c.b16 %v1788, %v1780
    %v2077 = vpack.c.b16 %v1797, %v1789
    %v2078 = vpack.c.b16 %v1798, %v1790
    %v2079 = vpack.c.b16 %v1799, %v1791
    %v2080 = vpack.c.b16 %v1800, %v1792
    %v2081 = vpack.c.b16 %v1801, %v1793
    %v2082 = vpack.c.b16 %v1802, %v1794
    %v2083 = vpack.c.b16 %v1803, %v1795
    %v2084 = vpack.c.b16 %v1804, %v1796
    %v2085 = vpack.c.b16 %v1813, %v1805
    %v2086 = vpack.c.b16 %v1814, %v1806
    %v2087 = vpack.c.b16 %v1815, %v1807
    %v2088 = vpack.c.b16 %v1816, %v1808
    %v2089 = vpack.c.b16 %v1817, %v1809
    %v2090 = vpack.c.b16 %v1818, %v1810
    %v2091 = vpack.c.b16 %v1819, %v1811
    %v2092 = vpack.c.b16 %v1820, %v1812
    %v2093 = vpack.c.b16 %v1829, %v1821
    %v2094 = vpack.c.b16 %v1830, %v1822
    %v2095 = vpack.c.b16 %v1831, %v1823
    %v2096 = vpack.c.b16 %v1832, %v1824
    %v2097 = vpack.c.b16 %v1833, %v1825
    %v2098 = vpack.c.b16 %v1834, %v1826
    %v2099 = vpack.c.b16 %v1835, %v1827
    %v2100 = vpack.c.b16 %v1836, %v1828
    %v2101 = vpack.c.b16 %v1845, %v1837
    %v2102 = vpack.c.b16 %v1846, %v1838
    %v2103 = vpack.c.b16 %v1847, %v1839
    %v2104 = vpack.c.b16 %v1848, %v1840
    %v2105 = vpack.c.b16 %v1849, %v1841
    %v2106 = vpack.c.b16 %v1850, %v1842
    %v2107 = vpack.c.b16 %v1851, %v1843
    %v2108 = vpack.c.b16 %v1852, %v1844
    %2365 = vmatpush.bf16.msra.mxu0 %v1909
    %2366 = vmatpush.bf16.msra.mxu0 %v1901
    %2367 = vmatpush.bf16.msra.mxu0 %v1893
    %2368 = vmatpush.bf16.msra.mxu0 %v1885
    %2369 = vmatpush.bf16.msra.mxu0 %v1877
    %2370 = vmatpush.bf16.msra.mxu0 %v1869
    %2371 = vmatpush.bf16.msra.mxu0 %v1861
    %2372 = vmatpush.bf16.msra.mxu0 %v1853
    %2373 = vmatmul.bf16.gmra.mxu0 %v807
    %v2374 = vpop.f32.mrf.mxu0
    %v2375 = vadd.f32 %v1069, %v2374
    %v2376 = vpop.f32.mrf.mxu0
    %v2377 = vadd.f32 %v1069, %v2376
    %2378 = vdwg.mxu0
    %2379 = vmatpush.bf16.msra.mxu0 %v1973
    %2380 = vmatpush.bf16.msra.mxu0 %v1965
    %2381 = vmatpush.bf16.msra.mxu0 %v1957
    %2382 = vmatpush.bf16.msra.mxu0 %v1949
    %2383 = vmatpush.bf16.msra.mxu0 %v1941
    %2384 = vmatpush.bf16.msra.mxu0 %v1933
    %2385 = vmatpush.bf16.msra.mxu0 %v1925
    %2386 = vmatpush.bf16.msra.mxu0 %v1917
    %2387 = vmatmul.bf16.gmra.mxu0 %v808
    %v2388 = vpop.f32.mrf.mxu0
    %v2389 = vadd.f32 %v2375, %v2388
    %v2390 = vpop.f32.mrf.mxu0
    %v2391 = vadd.f32 %v2377, %v2390
    %2392 = vdwg.mxu0
    %2393 = vmatpush.bf16.msra.mxu0 %v2037
    %2394 = vmatpush.bf16.msra.mxu0 %v2029
    %2395 = vmatpush.bf16.msra.mxu0 %v2021
    %2396 = vmatpush.bf16.msra.mxu0 %v2013
    %2397 = vmatpush.bf16.msra.mxu0 %v2005
    %2398 = vmatpush.bf16.msra.mxu0 %v1997
    %2399 = vmatpush.bf16.msra.mxu0 %v1989
    %2400 = vmatpush.bf16.msra.mxu0 %v1981
    %2401 = vmatmul.bf16.gmra.mxu0 %v809
    %v2402 = vpop.f32.mrf.mxu0
    %v2403 = vadd.f32 %v2389, %v2402
    %v2404 = vpop.f32.mrf.mxu0
    %v2405 = vadd.f32 %v2391, %v2404
    %2406 = vdwg.mxu0
    %2407 = vmatpush.bf16.msra.mxu0 %v2101
    %2408 = vmatpush.bf16.msra.mxu0 %v2093
    %2409 = vmatpush.bf16.msra.mxu0 %v2085
    %2410 = vmatpush.bf16.msra.mxu0 %v2077
    %2411 = vmatpush.bf16.msra.mxu0 %v2069
    %2412 = vmatpush.bf16.msra.mxu0 %v2061
    %2413 = vmatpush.bf16.msra.mxu0 %v2053
    %2414 = vmatpush.bf16.msra.mxu0 %v2045
    %2415 = vmatmul.bf16.gmra.mxu0 %v810
    %v2416 = vpop.f32.mrf.mxu0
    %v2417 = vadd.f32 %v2403, %v2416
    %v2418 = vpop.f32.mrf.mxu0
    %v2419 = vadd.f32 %v2405, %v2418
    %2420 = vdwg.mxu0
    %2421 = vmatpush.bf16.msra.mxu0 %v1910
    %2422 = vmatpush.bf16.msra.mxu0 %v1902
    %2423 = vmatpush.bf16.msra.mxu0 %v1894
    %2424 = vmatpush.bf16.msra.mxu0 %v1886
    %2425 = vmatpush.bf16.msra.mxu0 %v1878
    %2426 = vmatpush.bf16.msra.mxu0 %v1870
    %2427 = vmatpush.bf16.msra.mxu0 %v1862
    %2428 = vmatpush.bf16.msra.mxu0 %v1854
    %2429 = vmatmul.bf16.gmra.mxu0 %v807
    %v2430 = vpop.f32.mrf.mxu0
    %v2431 = vadd.f32 %v1070, %v2430
    %v2432 = vpop.f32.mrf.mxu0
    %v2433 = vadd.f32 %v1070, %v2432
    %2434 = vdwg.mxu0
    %2435 = vmatpush.bf16.msra.mxu0 %v1974
    %2436 = vmatpush.bf16.msra.mxu0 %v1966
    %2437 = vmatpush.bf16.msra.mxu0 %v1958
    %2438 = vmatpush.bf16.msra.mxu0 %v1950
    %2439 = vmatpush.bf16.msra.mxu0 %v1942
    %2440 = vmatpush.bf16.msra.mxu0 %v1934
    %2441 = vmatpush.bf16.msra.mxu0 %v1926
    %2442 = vmatpush.bf16.msra.mxu0 %v1918
    %2443 = vmatmul.bf16.gmra.mxu0 %v808
    %v2444 = vpop.f32.mrf.mxu0
    %v2445 = vadd.f32 %v2431, %v2444
    %v2446 = vpop.f32.mrf.mxu0
    %v2447 = vadd.f32 %v2433, %v2446
    %2448 = vdwg.mxu0
    %2449 = vmatpush.bf16.msra.mxu0 %v2038
    %2450 = vmatpush.bf16.msra.mxu0 %v2030
    %2451 = vmatpush.bf16.msra.mxu0 %v2022
    %2452 = vmatpush.bf16.msra.mxu0 %v2014
    %2453 = vmatpush.bf16.msra.mxu0 %v2006
    %2454 = vmatpush.bf16.msra.mxu0 %v1998
    %2455 = vmatpush.bf16.msra.mxu0 %v1990
    %2456 = vmatpush.bf16.msra.mxu0 %v1982
    %2457 = vmatmul.bf16.gmra.mxu0 %v809
    %v2458 = vpop.f32.mrf.mxu0
    %v2459 = vadd.f32 %v2445, %v2458
    %v2460 = vpop.f32.mrf.mxu0
    %v2461 = vadd.f32 %v2447, %v2460
    %2462 = vdwg.mxu0
    %2463 = vmatpush.bf16.msra.mxu0 %v2102
    %2464 = vmatpush.bf16.msra.mxu0 %v2094
    %2465 = vmatpush.bf16.msra.mxu0 %v2086
    %2466 = vmatpush.bf16.msra.mxu0 %v2078
    %2467 = vmatpush.bf16.msra.mxu0 %v2070
    %2468 = vmatpush.bf16.msra.mxu0 %v2062
    %2469 = vmatpush.bf16.msra.mxu0 %v2054
    %2470 = vmatpush.bf16.msra.mxu0 %v2046
    %2471 = vmatmul.bf16.gmra.mxu0 %v810
    %v2472 = vpop.f32.mrf.mxu0
    %v2473 = vadd.f32 %v2459, %v2472
    %v2474 = vpop.f32.mrf.mxu0
    %v2475 = vadd.f32 %v2461, %v2474
    %2476 = vdwg.mxu0
    %2477 = vmatpush.bf16.msra.mxu0 %v1911
    %2478 = vmatpush.bf16.msra.mxu0 %v1903
    %2479 = vmatpush.bf16.msra.mxu0 %v1895
    %2480 = vmatpush.bf16.msra.mxu0 %v1887
    %2481 = vmatpush.bf16.msra.mxu0 %v1879
    %2482 = vmatpush.bf16.msra.mxu0 %v1871
    %2483 = vmatpush.bf16.msra.mxu0 %v1863
    %2484 = vmatpush.bf16.msra.mxu0 %v1855
    %2485 = vmatmul.bf16.gmra.mxu0 %v807
    %v2486 = vpop.f32.mrf.mxu0
    %v2487 = vadd.f32 %v1071, %v2486
    %v2488 = vpop.f32.mrf.mxu0
    %v2489 = vadd.f32 %v1071, %v2488
    %2490 = vdwg.mxu0
    %2491 = vmatpush.bf16.msra.mxu0 %v1975
    %2492 = vmatpush.bf16.msra.mxu0 %v1967
    %2493 = vmatpush.bf16.msra.mxu0 %v1959
    %2494 = vmatpush.bf16.msra.mxu0 %v1951
    %2495 = vmatpush.bf16.msra.mxu0 %v1943
    %2496 = vmatpush.bf16.msra.mxu0 %v1935
    %2497 = vmatpush.bf16.msra.mxu0 %v1927
    %2498 = vmatpush.bf16.msra.mxu0 %v1919
    %2499 = vmatmul.bf16.gmra.mxu0 %v808
    %v2500 = vpop.f32.mrf.mxu0
    %v2501 = vadd.f32 %v2487, %v2500
    %v2502 = vpop.f32.mrf.mxu0
    %v2503 = vadd.f32 %v2489, %v2502
    %2504 = vdwg.mxu0
    %2505 = vmatpush.bf16.msra.mxu0 %v2039
    %2506 = vmatpush.bf16.msra.mxu0 %v2031
    %2507 = vmatpush.bf16.msra.mxu0 %v2023
    %2508 = vmatpush.bf16.msra.mxu0 %v2015
    %2509 = vmatpush.bf16.msra.mxu0 %v2007
    %2510 = vmatpush.bf16.msra.mxu0 %v1999
    %2511 = vmatpush.bf16.msra.mxu0 %v1991
    %2512 = vmatpush.bf16.msra.mxu0 %v1983
    %2513 = vmatmul.bf16.gmra.mxu0 %v809
    %v2514 = vpop.f32.mrf.mxu0
    %v2515 = vadd.f32 %v2501, %v2514
    %v2516 = vpop.f32.mrf.mxu0
    %v2517 = vadd.f32 %v2503, %v2516
    %2518 = vdwg.mxu0
    %2519 = vmatpush.bf16.msra.mxu0 %v2103
    %2520 = vmatpush.bf16.msra.mxu0 %v2095
    %2521 = vmatpush.bf16.msra.mxu0 %v2087
    %2522 = vmatpush.bf16.msra.mxu0 %v2079
    %2523 = vmatpush.bf16.msra.mxu0 %v2071
    %2524 = vmatpush.bf16.msra.mxu0 %v2063
    %2525 = vmatpush.bf16.msra.mxu0 %v2055
    %2526 = vmatpush.bf16.msra.mxu0 %v2047
    %2527 = vmatmul.bf16.gmra.mxu0 %v810
    %v2528 = vpop.f32.mrf.mxu0
    %v2529 = vadd.f32 %v2515, %v2528
    %v2530 = vpop.f32.mrf.mxu0
    %v2531 = vadd.f32 %v2517, %v2530
    %2532 = vdwg.mxu0
    %2533 = vmatpush.bf16.msra.mxu0 %v1912
    %2534 = vmatpush.bf16.msra.mxu0 %v1904
    %2535 = vmatpush.bf16.msra.mxu0 %v1896
    %2536 = vmatpush.bf16.msra.mxu0 %v1888
    %2537 = vmatpush.bf16.msra.mxu0 %v1880
    %2538 = vmatpush.bf16.msra.mxu0 %v1872
    %2539 = vmatpush.bf16.msra.mxu0 %v1864
    %2540 = vmatpush.bf16.msra.mxu0 %v1856
    %2541 = vmatmul.bf16.gmra.mxu0 %v807
    %v2542 = vpop.f32.mrf.mxu0
    %v2543 = vadd.f32 %v1072, %v2542
    %v2544 = vpop.f32.mrf.mxu0
    %v2545 = vadd.f32 %v1072, %v2544
    %2546 = vdwg.mxu0
    %2547 = vmatpush.bf16.msra.mxu0 %v1976
    %2548 = vmatpush.bf16.msra.mxu0 %v1968
    %2549 = vmatpush.bf16.msra.mxu0 %v1960
    %2550 = vmatpush.bf16.msra.mxu0 %v1952
    %2551 = vmatpush.bf16.msra.mxu0 %v1944
    %2552 = vmatpush.bf16.msra.mxu0 %v1936
    %2553 = vmatpush.bf16.msra.mxu0 %v1928
    %2554 = vmatpush.bf16.msra.mxu0 %v1920
    %2555 = vmatmul.bf16.gmra.mxu0 %v808
    %v2556 = vpop.f32.mrf.mxu0
    %v2557 = vadd.f32 %v2543, %v2556
    %v2558 = vpop.f32.mrf.mxu0
    %v2559 = vadd.f32 %v2545, %v2558
    %2560 = vdwg.mxu0
    %2561 = vmatpush.bf16.msra.mxu0 %v2040
    %2562 = vmatpush.bf16.msra.mxu0 %v2032
    %2563 = vmatpush.bf16.msra.mxu0 %v2024
    %2564 = vmatpush.bf16.msra.mxu0 %v2016
    %2565 = vmatpush.bf16.msra.mxu0 %v2008
    %2566 = vmatpush.bf16.msra.mxu0 %v2000
    %2567 = vmatpush.bf16.msra.mxu0 %v1992
    %2568 = vmatpush.bf16.msra.mxu0 %v1984
    %2569 = vmatmul.bf16.gmra.mxu0 %v809
    %v2570 = vpop.f32.mrf.mxu0
    %v2571 = vadd.f32 %v2557, %v2570
    %v2572 = vpop.f32.mrf.mxu0
    %v2573 = vadd.f32 %v2559, %v2572
    %2574 = vdwg.mxu0
    %2575 = vmatpush.bf16.msra.mxu0 %v2104
    %2576 = vmatpush.bf16.msra.mxu0 %v2096
    %2577 = vmatpush.bf16.msra.mxu0 %v2088
    %2578 = vmatpush.bf16.msra.mxu0 %v2080
    %2579 = vmatpush.bf16.msra.mxu0 %v2072
    %2580 = vmatpush.bf16.msra.mxu0 %v2064
    %2581 = vmatpush.bf16.msra.mxu0 %v2056
    %2582 = vmatpush.bf16.msra.mxu0 %v2048
    %2583 = vmatmul.bf16.gmra.mxu0 %v810
    %v2584 = vpop.f32.mrf.mxu0
    %v2585 = vadd.f32 %v2571, %v2584
    %v2586 = vpop.f32.mrf.mxu0
    %v2587 = vadd.f32 %v2573, %v2586
    %2588 = vdwg.mxu0
    %2589 = vmatpush.bf16.msra.mxu0 %v1913
    %2590 = vmatpush.bf16.msra.mxu0 %v1905
    %2591 = vmatpush.bf16.msra.mxu0 %v1897
    %2592 = vmatpush.bf16.msra.mxu0 %v1889
    %2593 = vmatpush.bf16.msra.mxu0 %v1881
    %2594 = vmatpush.bf16.msra.mxu0 %v1873
    %2595 = vmatpush.bf16.msra.mxu0 %v1865
    %2596 = vmatpush.bf16.msra.mxu0 %v1857
    %2597 = vmatmul.bf16.gmra.mxu0 %v807
    %v2598 = vpop.f32.mrf.mxu0
    %v2599 = vadd.f32 %v1073, %v2598
    %v2600 = vpop.f32.mrf.mxu0
    %v2601 = vadd.f32 %v1073, %v2600
    %2602 = vdwg.mxu0
    %2603 = vmatpush.bf16.msra.mxu0 %v1977
    %2604 = vmatpush.bf16.msra.mxu0 %v1969
    %2605 = vmatpush.bf16.msra.mxu0 %v1961
    %2606 = vmatpush.bf16.msra.mxu0 %v1953
    %2607 = vmatpush.bf16.msra.mxu0 %v1945
    %2608 = vmatpush.bf16.msra.mxu0 %v1937
    %2609 = vmatpush.bf16.msra.mxu0 %v1929
    %2610 = vmatpush.bf16.msra.mxu0 %v1921
    %2611 = vmatmul.bf16.gmra.mxu0 %v808
    %v2612 = vpop.f32.mrf.mxu0
    %v2613 = vadd.f32 %v2599, %v2612
    %v2614 = vpop.f32.mrf.mxu0
    %v2615 = vadd.f32 %v2601, %v2614
    %2616 = vdwg.mxu0
    %2617 = vmatpush.bf16.msra.mxu0 %v2041
    %2618 = vmatpush.bf16.msra.mxu0 %v2033
    %2619 = vmatpush.bf16.msra.mxu0 %v2025
    %2620 = vmatpush.bf16.msra.mxu0 %v2017
    %2621 = vmatpush.bf16.msra.mxu0 %v2009
    %2622 = vmatpush.bf16.msra.mxu0 %v2001
    %2623 = vmatpush.bf16.msra.mxu0 %v1993
    %2624 = vmatpush.bf16.msra.mxu0 %v1985
    %2625 = vmatmul.bf16.gmra.mxu0 %v809
    %v2626 = vpop.f32.mrf.mxu0
    %v2627 = vadd.f32 %v2613, %v2626
    %v2628 = vpop.f32.mrf.mxu0
    %v2629 = vadd.f32 %v2615, %v2628
    %2630 = vdwg.mxu0
    %2631 = vmatpush.bf16.msra.mxu0 %v2105
    %2632 = vmatpush.bf16.msra.mxu0 %v2097
    %2633 = vmatpush.bf16.msra.mxu0 %v2089
    %2634 = vmatpush.bf16.msra.mxu0 %v2081
    %2635 = vmatpush.bf16.msra.mxu0 %v2073
    %2636 = vmatpush.bf16.msra.mxu0 %v2065
    %2637 = vmatpush.bf16.msra.mxu0 %v2057
    %2638 = vmatpush.bf16.msra.mxu0 %v2049
    %2639 = vmatmul.bf16.gmra.mxu0 %v810
    %v2640 = vpop.f32.mrf.mxu0
    %v2641 = vadd.f32 %v2627, %v2640
    %v2642 = vpop.f32.mrf.mxu0
    %v2643 = vadd.f32 %v2629, %v2642
    %2644 = vdwg.mxu0
    %2645 = vmatpush.bf16.msra.mxu0 %v1914
    %2646 = vmatpush.bf16.msra.mxu0 %v1906
    %2647 = vmatpush.bf16.msra.mxu0 %v1898
    %2648 = vmatpush.bf16.msra.mxu0 %v1890
    %2649 = vmatpush.bf16.msra.mxu0 %v1882
    %2650 = vmatpush.bf16.msra.mxu0 %v1874
    %2651 = vmatpush.bf16.msra.mxu0 %v1866
    %2652 = vmatpush.bf16.msra.mxu0 %v1858
    %2653 = vmatmul.bf16.gmra.mxu0 %v807
    %v2654 = vpop.f32.mrf.mxu0
    %v2655 = vadd.f32 %v1074, %v2654
    %v2656 = vpop.f32.mrf.mxu0
    %v2657 = vadd.f32 %v1074, %v2656
    %2658 = vdwg.mxu0
    %2659 = vmatpush.bf16.msra.mxu0 %v1978
    %2660 = vmatpush.bf16.msra.mxu0 %v1970
    %2661 = vmatpush.bf16.msra.mxu0 %v1962
    %2662 = vmatpush.bf16.msra.mxu0 %v1954
    %2663 = vmatpush.bf16.msra.mxu0 %v1946
    %2664 = vmatpush.bf16.msra.mxu0 %v1938
    %2665 = vmatpush.bf16.msra.mxu0 %v1930
    %2666 = vmatpush.bf16.msra.mxu0 %v1922
    %2667 = vmatmul.bf16.gmra.mxu0 %v808
    %v2668 = vpop.f32.mrf.mxu0
    %v2669 = vadd.f32 %v2655, %v2668
    %v2670 = vpop.f32.mrf.mxu0
    %v2671 = vadd.f32 %v2657, %v2670
    %2672 = vdwg.mxu0
    %2673 = vmatpush.bf16.msra.mxu0 %v2042
    %2674 = vmatpush.bf16.msra.mxu0 %v2034
    %2675 = vmatpush.bf16.msra.mxu0 %v2026
    %2676 = vmatpush.bf16.msra.mxu0 %v2018
    %2677 = vmatpush.bf16.msra.mxu0 %v2010
    %2678 = vmatpush.bf16.msra.mxu0 %v2002
    %2679 = vmatpush.bf16.msra.mxu0 %v1994
    %2680 = vmatpush.bf16.msra.mxu0 %v1986
    %2681 = vmatmul.bf16.gmra.mxu0 %v809
    %v2682 = vpop.f32.mrf.mxu0
    %v2683 = vadd.f32 %v2669, %v2682
    %v2684 = vpop.f32.mrf.mxu0
    %v2685 = vadd.f32 %v2671, %v2684
    %2686 = vdwg.mxu0
    %2687 = vmatpush.bf16.msra.mxu0 %v2106
    %2688 = vmatpush.bf16.msra.mxu0 %v2098
    %2689 = vmatpush.bf16.msra.mxu0 %v2090
    %2690 = vmatpush.bf16.msra.mxu0 %v2082
    %2691 = vmatpush.bf16.msra.mxu0 %v2074
    %2692 = vmatpush.bf16.msra.mxu0 %v2066
    %2693 = vmatpush.bf16.msra.mxu0 %v2058
    %2694 = vmatpush.bf16.msra.mxu0 %v2050
    %2695 = vmatmul.bf16.gmra.mxu0 %v810
    %v2696 = vpop.f32.mrf.mxu0
    %v2697 = vadd.f32 %v2683, %v2696
    %v2698 = vpop.f32.mrf.mxu0
    %v2699 = vadd.f32 %v2685, %v2698
    %2700 = vdwg.mxu0
    %2701 = vmatpush.bf16.msra.mxu0 %v1915
    %2702 = vmatpush.bf16.msra.mxu0 %v1907
    %2703 = vmatpush.bf16.msra.mxu0 %v1899
    %2704 = vmatpush.bf16.msra.mxu0 %v1891
    %2705 = vmatpush.bf16.msra.mxu0 %v1883
    %2706 = vmatpush.bf16.msra.mxu0 %v1875
    %2707 = vmatpush.bf16.msra.mxu0 %v1867
    %2708 = vmatpush.bf16.msra.mxu0 %v1859
    %2709 = vmatmul.bf16.gmra.mxu0 %v807
    %v2710 = vpop.f32.mrf.mxu0
    %v2711 = vadd.f32 %v1075, %v2710
    %v2712 = vpop.f32.mrf.mxu0
    %v2713 = vadd.f32 %v1075, %v2712
    %2714 = vdwg.mxu0
    %2715 = vmatpush.bf16.msra.mxu0 %v1979
    %2716 = vmatpush.bf16.msra.mxu0 %v1971
    %2717 = vmatpush.bf16.msra.mxu0 %v1963
    %2718 = vmatpush.bf16.msra.mxu0 %v1955
    %2719 = vmatpush.bf16.msra.mxu0 %v1947
    %2720 = vmatpush.bf16.msra.mxu0 %v1939
    %2721 = vmatpush.bf16.msra.mxu0 %v1931
    %2722 = vmatpush.bf16.msra.mxu0 %v1923
    %2723 = vmatmul.bf16.gmra.mxu0 %v808
    %v2724 = vpop.f32.mrf.mxu0
    %v2725 = vadd.f32 %v2711, %v2724
    %v2726 = vpop.f32.mrf.mxu0
    %v2727 = vadd.f32 %v2713, %v2726
    %2728 = vdwg.mxu0
    %2729 = vmatpush.bf16.msra.mxu0 %v2043
    %2730 = vmatpush.bf16.msra.mxu0 %v2035
    %2731 = vmatpush.bf16.msra.mxu0 %v2027
    %2732 = vmatpush.bf16.msra.mxu0 %v2019
    %2733 = vmatpush.bf16.msra.mxu0 %v2011
    %2734 = vmatpush.bf16.msra.mxu0 %v2003
    %2735 = vmatpush.bf16.msra.mxu0 %v1995
    %2736 = vmatpush.bf16.msra.mxu0 %v1987
    %2737 = vmatmul.bf16.gmra.mxu0 %v809
    %v2738 = vpop.f32.mrf.mxu0
    %v2739 = vadd.f32 %v2725, %v2738
    %v2740 = vpop.f32.mrf.mxu0
    %v2741 = vadd.f32 %v2727, %v2740
    %2742 = vdwg.mxu0
    %2743 = vmatpush.bf16.msra.mxu0 %v2107
    %2744 = vmatpush.bf16.msra.mxu0 %v2099
    %2745 = vmatpush.bf16.msra.mxu0 %v2091
    %2746 = vmatpush.bf16.msra.mxu0 %v2083
    %2747 = vmatpush.bf16.msra.mxu0 %v2075
    %2748 = vmatpush.bf16.msra.mxu0 %v2067
    %2749 = vmatpush.bf16.msra.mxu0 %v2059
    %2750 = vmatpush.bf16.msra.mxu0 %v2051
    %2751 = vmatmul.bf16.gmra.mxu0 %v810
    %v2752 = vpop.f32.mrf.mxu0
    %v2753 = vadd.f32 %v2739, %v2752
    %v2754 = vpop.f32.mrf.mxu0
    %v2755 = vadd.f32 %v2741, %v2754
    %2756 = vdwg.mxu0
    %2757 = vmatpush.bf16.msra.mxu0 %v1916
    %2758 = vmatpush.bf16.msra.mxu0 %v1908
    %2759 = vmatpush.bf16.msra.mxu0 %v1900
    %2760 = vmatpush.bf16.msra.mxu0 %v1892
    %2761 = vmatpush.bf16.msra.mxu0 %v1884
    %2762 = vmatpush.bf16.msra.mxu0 %v1876
    %2763 = vmatpush.bf16.msra.mxu0 %v1868
    %2764 = vmatpush.bf16.msra.mxu0 %v1860
    %2765 = vmatmul.bf16.gmra.mxu0 %v807
    %v2766 = vpop.f32.mrf.mxu0
    %v2767 = vadd.f32 %v1076, %v2766
    %v2768 = vpop.f32.mrf.mxu0
    %v2769 = vadd.f32 %v1076, %v2768
    %2770 = vdwg.mxu0
    %2771 = vmatpush.bf16.msra.mxu0 %v1980
    %2772 = vmatpush.bf16.msra.mxu0 %v1972
    %2773 = vmatpush.bf16.msra.mxu0 %v1964
    %2774 = vmatpush.bf16.msra.mxu0 %v1956
    %2775 = vmatpush.bf16.msra.mxu0 %v1948
    %2776 = vmatpush.bf16.msra.mxu0 %v1940
    %2777 = vmatpush.bf16.msra.mxu0 %v1932
    %2778 = vmatpush.bf16.msra.mxu0 %v1924
    %2779 = vmatmul.bf16.gmra.mxu0 %v808
    %v2780 = vpop.f32.mrf.mxu0
    %v2781 = vadd.f32 %v2767, %v2780
    %v2782 = vpop.f32.mrf.mxu0
    %v2783 = vadd.f32 %v2769, %v2782
    %2784 = vdwg.mxu0
    %2785 = vmatpush.bf16.msra.mxu0 %v2044
    %2786 = vmatpush.bf16.msra.mxu0 %v2036
    %2787 = vmatpush.bf16.msra.mxu0 %v2028
    %2788 = vmatpush.bf16.msra.mxu0 %v2020
    %2789 = vmatpush.bf16.msra.mxu0 %v2012
    %2790 = vmatpush.bf16.msra.mxu0 %v2004
    %2791 = vmatpush.bf16.msra.mxu0 %v1996
    %2792 = vmatpush.bf16.msra.mxu0 %v1988
    %2793 = vmatmul.bf16.gmra.mxu0 %v809
    %v2794 = vpop.f32.mrf.mxu0
    %v2795 = vadd.f32 %v2781, %v2794
    %v2796 = vpop.f32.mrf.mxu0
    %v2797 = vadd.f32 %v2783, %v2796
    %2798 = vdwg.mxu0
    %2799 = vmatpush.bf16.msra.mxu0 %v2108
    %2800 = vmatpush.bf16.msra.mxu0 %v2100
    %2801 = vmatpush.bf16.msra.mxu0 %v2092
    %2802 = vmatpush.bf16.msra.mxu0 %v2084
    %2803 = vmatpush.bf16.msra.mxu0 %v2076
    %2804 = vmatpush.bf16.msra.mxu0 %v2068
    %2805 = vmatpush.bf16.msra.mxu0 %v2060
    %2806 = vmatpush.bf16.msra.mxu0 %v2052
    %2807 = vmatmul.bf16.gmra.mxu0 %v810
    %v2808 = vpop.f32.mrf.mxu0
    %v2809 = vadd.f32 %v2795, %v2808
    %v2810 = vpop.f32.mrf.mxu0
    %v2811 = vadd.f32 %v2797, %v2810
    %2812 = vdwg.mxu0
    %v2813 = vmax.f32 %v2417, 0.0
    %v2814 = vmax.f32 %v2473, 0.0
    %v2815 = vmax.f32 %v2529, 0.0
    %v2816 = vmax.f32 %v2585, 0.0
    %v2817 = vmax.f32 %v2641, 0.0
    %v2818 = vmax.f32 %v2697, 0.0
    %v2819 = vmax.f32 %v2753, 0.0
    %v2820 = vmax.f32 %v2809, 0.0
    %v2821 = vmax.f32 %v2419, 0.0
    %v2822 = vmax.f32 %v2475, 0.0
    %v2823 = vmax.f32 %v2531, 0.0
    %v2824 = vmax.f32 %v2587, 0.0
    %v2825 = vmax.f32 %v2643, 0.0
    %v2826 = vmax.f32 %v2699, 0.0
    %v2827 = vmax.f32 %v2755, 0.0
    %v2828 = vmax.f32 %v2811, 0.0
    %v2829 = vpack.c.bf16 %v2821, %v2813
    %v2830 = vpack.c.bf16 %v2822, %v2814
    %v2831 = vpack.c.bf16 %v2823, %v2815
    %v2832 = vpack.c.bf16 %v2824, %v2816
    %v2833 = vpack.c.bf16 %v2825, %v2817
    %v2834 = vpack.c.bf16 %v2826, %v2818
    %v2835 = vpack.c.bf16 %v2827, %v2819
    %v2836 = vpack.c.bf16 %v2828, %v2820
    %v2837 = vld [vmem:[#allocation12] sm:$0xff]
    %v2838 = vld [vmem:[#allocation12 + $0x8] sm:$0xff]
    %v2839 = vld [vmem:[#allocation12 + $0x10] sm:$0xff]
    %v2840 = vld [vmem:[#allocation12 + $0x18] sm:$0xf]
    %v2841 = vld [vmem:[#allocation12 + $0x1c] sm:$0xff]
    %v2842 = vld [vmem:[#allocation12 + $0x24] sm:$0xff]
    %v2843 = vld [vmem:[#allocation12 + $0x2c] sm:$0xff]
    %v2844 = vld [vmem:[#allocation12 + $0x34] sm:$0xf]
    %v2845 = vld [vmem:[#allocation12 + $0x38] sm:$0xff]
    %v2846 = vld [vmem:[#allocation12 + $0x40] sm:$0xff]
    %v2847 = vld [vmem:[#allocation12 + $0x48] sm:$0xff]
    %v2848 = vld [vmem:[#allocation12 + $0x50] sm:$0xf]
    %v2849 = vld [vmem:[#allocation12 + $0x54] sm:$0xff]
    %v2850 = vld [vmem:[#allocation12 + $0x5c] sm:$0xff]
    %v2851 = vld [vmem:[#allocation12 + $0x64] sm:$0xff]
    %v2852 = vld [vmem:[#allocation12 + $0x6c] sm:$0xf]
    %v2853 = vld [vmem:[#allocation12 + $0x70] sm:$0xff]
    %v2854 = vld [vmem:[#allocation12 + $0x78] sm:$0xff]
    %v2855 = vld [vmem:[#allocation12 + $0x80] sm:$0xff]
    %v2856 = vld [vmem:[#allocation12 + $0x88] sm:$0xf]
    %v2857 = vld [vmem:[#allocation12 + $0x8c] sm:$0xff]
    %v2858 = vld [vmem:[#allocation12 + $0x94] sm:$0xff]
    %v2859 = vld [vmem:[#allocation12 + $0x9c] sm:$0xff]
    %v2860 = vld [vmem:[#allocation12 + $0xa4] sm:$0xf]
    %v2861 = vld [vmem:[#allocation12 + $0xa8] sm:$0xff]
    %v2862 = vld [vmem:[#allocation12 + $0xb0] sm:$0xff]
    %v2863 = vld [vmem:[#allocation12 + $0xb8] sm:$0xff]
    %v2864 = vld [vmem:[#allocation12 + $0xc0] sm:$0xf]
    %v2865 = vld [vmem:[#allocation12 + $0xc4] sm:$0xff]
    %v2866 = vld [vmem:[#allocation12 + $0xcc] sm:$0xff]
    %v2867 = vld [vmem:[#allocation12 + $0xd4] sm:$0xff]
    %v2868 = vld [vmem:[#allocation12 + $0xdc] sm:$0xf]
    %v2869 = vld [vmem:[#allocation12 + $0xe0] sm:$0xff]
    %v2870 = vld [vmem:[#allocation12 + $0xe8] sm:$0xff]
    %v2871 = vld [vmem:[#allocation12 + $0xf0] sm:$0xff]
    %v2872 = vld [vmem:[#allocation12 + $0xf8] sm:$0xf]
    %v2873 = vld [vmem:[#allocation12 + $0xfc] sm:$0xff]
    %v2874 = vld [vmem:[#allocation12 + $0x104] sm:$0xff]
    %v2875 = vld [vmem:[#allocation12 + $0x10c] sm:$0xff]
    %v2876 = vld [vmem:[#allocation12 + $0x114] sm:$0xf]
    %v2877 = vld [vmem:[#allocation12 + $0x118] sm:$0xff]
    %v2878 = vld [vmem:[#allocation12 + $0x120] sm:$0xff]
    %v2879 = vld [vmem:[#allocation12 + $0x128] sm:$0xff]
    %v2880 = vld [vmem:[#allocation12 + $0x130] sm:$0xf]
    %v2881 = vld [vmem:[#allocation12 + $0x134] sm:$0xff]
    %v2882 = vld [vmem:[#allocation12 + $0x13c] sm:$0xff]
    %v2883 = vld [vmem:[#allocation12 + $0x144] sm:$0xff]
    %v2884 = vld [vmem:[#allocation12 + $0x14c] sm:$0xf]
    %v2885 = vld [vmem:[#allocation12 + $0x150] sm:$0xff]
    %v2886 = vld [vmem:[#allocation12 + $0x158] sm:$0xff]
    %v2887 = vld [vmem:[#allocation12 + $0x160] sm:$0xff]
    %v2888 = vld [vmem:[#allocation12 + $0x168] sm:$0xf]
    %v2889 = vld [vmem:[#allocation12 + $0x16c] sm:$0xff]
    %v2890 = vld [vmem:[#allocation12 + $0x174] sm:$0xff]
    %v2891 = vld [vmem:[#allocation12 + $0x17c] sm:$0xff]
    %v2892 = vld [vmem:[#allocation12 + $0x184] sm:$0xf]
    %v2893 = vld [vmem:[#allocation12 + $0x188] sm:$0xff]
    %v2894 = vld [vmem:[#allocation12 + $0x190] sm:$0xff]
    %v2895 = vld [vmem:[#allocation12 + $0x198] sm:$0xff]
    %v2896 = vld [vmem:[#allocation12 + $0x1a0] sm:$0xf]
    %v2897 = vld [vmem:[#allocation12 + $0x1a4] sm:$0xff]
    %v2898 = vld [vmem:[#allocation12 + $0x1ac] sm:$0xff]
    %v2899 = vld [vmem:[#allocation12 + $0x1b4] sm:$0xff]
    %v2900 = vld [vmem:[#allocation12 + $0x1bc] sm:$0xf]
    %v2901 = vld [vmem:[#allocation12 + $0x1c0] sm:$0xff]
    %v2902 = vld [vmem:[#allocation12 + $0x1c8] sm:$0xff]
    %v2903 = vld [vmem:[#allocation12 + $0x1d0] sm:$0xff]
    %v2904 = vld [vmem:[#allocation12 + $0x1d8] sm:$0xf]
    %v2905 = vld [vmem:[#allocation12 + $0x1dc] sm:$0xff]
    %v2906 = vld [vmem:[#allocation12 + $0x1e4] sm:$0xff]
    %v2907 = vld [vmem:[#allocation12 + $0x1ec] sm:$0xff]
    %v2908 = vld [vmem:[#allocation12 + $0x1f4] sm:$0xf]
    %v2909 = vld [vmem:[#allocation12 + $0x1f8] sm:$0xff]
    %v2910 = vld [vmem:[#allocation12 + $0x200] sm:$0xff]
    %v2911 = vld [vmem:[#allocation12 + $0x208] sm:$0xff]
    %v2912 = vld [vmem:[#allocation12 + $0x210] sm:$0xf]
    %v2913 = vld [vmem:[#allocation12 + $0x214] sm:$0xff]
    %v2914 = vld [vmem:[#allocation12 + $0x21c] sm:$0xff]
    %v2915 = vld [vmem:[#allocation12 + $0x224] sm:$0xff]
    %v2916 = vld [vmem:[#allocation12 + $0x22c] sm:$0xf]
    %v2917 = vld [vmem:[#allocation12 + $0x230] sm:$0xff]
    %v2918 = vld [vmem:[#allocation12 + $0x238] sm:$0xff]
    %v2919 = vld [vmem:[#allocation12 + $0x240] sm:$0xff]
    %v2920 = vld [vmem:[#allocation12 + $0x248] sm:$0xf]
    %v2921 = vld [vmem:[#allocation12 + $0x24c] sm:$0xff]
    %v2922 = vld [vmem:[#allocation12 + $0x254] sm:$0xff]
    %v2923 = vld [vmem:[#allocation12 + $0x25c] sm:$0xff]
    %v2924 = vld [vmem:[#allocation12 + $0x264] sm:$0xf]
    %v2925 = vld [vmem:[#allocation12 + $0x268] sm:$0xff]
    %v2926 = vld [vmem:[#allocation12 + $0x270] sm:$0xff]
    %v2927 = vld [vmem:[#allocation12 + $0x278] sm:$0xff]
    %v2928 = vld [vmem:[#allocation12 + $0x280] sm:$0xf]
    %v2929 = vld [vmem:[#allocation12 + $0x284] sm:$0xff]
    %v2930 = vld [vmem:[#allocation12 + $0x28c] sm:$0xff]
    %v2931 = vld [vmem:[#allocation12 + $0x294] sm:$0xff]
    %v2932 = vld [vmem:[#allocation12 + $0x29c] sm:$0xf]
    %v2933 = vld [vmem:[#allocation12 + $0x2a0] sm:$0xff]
    %v2934 = vld [vmem:[#allocation12 + $0x2a8] sm:$0xff]
    %v2935 = vld [vmem:[#allocation12 + $0x2b0] sm:$0xff]
    %v2936 = vld [vmem:[#allocation12 + $0x2b8] sm:$0xf]
    %v2937 = vld [vmem:[#allocation12 + $0x2bc] sm:$0xff]
    %v2938 = vld [vmem:[#allocation12 + $0x2c4] sm:$0xff]
    %v2939 = vld [vmem:[#allocation12 + $0x2cc] sm:$0xff]
    %v2940 = vld [vmem:[#allocation12 + $0x2d4] sm:$0xf]
    %v2941 = vld [vmem:[#allocation12 + $0x2d8] sm:$0xff]
    %v2942 = vld [vmem:[#allocation12 + $0x2e0] sm:$0xff]
    %v2943 = vld [vmem:[#allocation12 + $0x2e8] sm:$0xff]
    %v2944 = vld [vmem:[#allocation12 + $0x2f0] sm:$0xf]
    %v2945 = vld [vmem:[#allocation12 + $0x2f4] sm:$0xff]
    %v2946 = vld [vmem:[#allocation12 + $0x2fc] sm:$0xff]
    %v2947 = vld [vmem:[#allocation12 + $0x304] sm:$0xff]
    %v2948 = vld [vmem:[#allocation12 + $0x30c] sm:$0xf]
    %v2949 = vld [vmem:[#allocation12 + $0x310] sm:$0xff]
    %v2950 = vld [vmem:[#allocation12 + $0x318] sm:$0xff]
    %v2951 = vld [vmem:[#allocation12 + $0x320] sm:$0xff]
    %v2952 = vld [vmem:[#allocation12 + $0x328] sm:$0xf]
    %v2953 = vld [vmem:[#allocation12 + $0x32c] sm:$0xff]
    %v2954 = vld [vmem:[#allocation12 + $0x334] sm:$0xff]
    %v2955 = vld [vmem:[#allocation12 + $0x33c] sm:$0xff]
    %v2956 = vld [vmem:[#allocation12 + $0x344] sm:$0xf]
    %v2957 = vld [vmem:[#allocation12 + $0x348] sm:$0xff]
    %v2958 = vld [vmem:[#allocation12 + $0x350] sm:$0xff]
    %v2959 = vld [vmem:[#allocation12 + $0x358] sm:$0xff]
    %v2960 = vld [vmem:[#allocation12 + $0x360] sm:$0xf]
    %v2961 = vld [vmem:[#allocation12 + $0x364] sm:$0xff]
    %v2962 = vld [vmem:[#allocation12 + $0x36c] sm:$0xff]
    %v2963 = vld [vmem:[#allocation12 + $0x374] sm:$0xff]
    %v2964 = vld [vmem:[#allocation12 + $0x37c] sm:$0xf]
    %v2965 = vld [vmem:[#allocation12 + $0x380] sm:$0xff]
    %v2966 = vld [vmem:[#allocation12 + $0x388] sm:$0xff]
    %v2967 = vld [vmem:[#allocation12 + $0x390] sm:$0xff]
    %v2968 = vld [vmem:[#allocation12 + $0x398] sm:$0xf]
    %v2969 = vld [vmem:[#allocation12 + $0x39c] sm:$0xff]
    %v2970 = vld [vmem:[#allocation12 + $0x3a4] sm:$0xff]
    %v2971 = vld [vmem:[#allocation12 + $0x3ac] sm:$0xff]
    %v2972 = vld [vmem:[#allocation12 + $0x3b4] sm:$0xf]
    %v2973 = vld [vmem:[#allocation12 + $0x3b8] sm:$0xff]
    %v2974 = vld [vmem:[#allocation12 + $0x3c0] sm:$0xff]
    %v2975 = vld [vmem:[#allocation12 + $0x3c8] sm:$0xff]
    %v2976 = vld [vmem:[#allocation12 + $0x3d0] sm:$0xf]
    %v2977 = vld [vmem:[#allocation12 + $0x3d4] sm:$0xff]
    %v2978 = vld [vmem:[#allocation12 + $0x3dc] sm:$0xff]
    %v2979 = vld [vmem:[#allocation12 + $0x3e4] sm:$0xff]
    %v2980 = vld [vmem:[#allocation12 + $0x3ec] sm:$0xf]
    %v2981 = vld [vmem:[#allocation12 + $0x3f0] sm:$0xff]
    %v2982 = vld [vmem:[#allocation12 + $0x3f8] sm:$0xff]
    %v2983 = vld [vmem:[#allocation12 + $0x400] sm:$0xff]
    %v2984 = vld [vmem:[#allocation12 + $0x408] sm:$0xf]
    %v2985 = vld [vmem:[#allocation12 + $0x40c] sm:$0xff]
    %v2986 = vld [vmem:[#allocation12 + $0x414] sm:$0xff]
    %v2987 = vld [vmem:[#allocation12 + $0x41c] sm:$0xff]
    %v2988 = vld [vmem:[#allocation12 + $0x424] sm:$0xf]
    %v2989 = vld [vmem:[#allocation12 + $0x428] sm:$0xff]
    %v2990 = vld [vmem:[#allocation12 + $0x430] sm:$0xff]
    %v2991 = vld [vmem:[#allocation12 + $0x438] sm:$0xff]
    %v2992 = vld [vmem:[#allocation12 + $0x440] sm:$0xf]
    %v2993 = vld [vmem:[#allocation12 + $0x444] sm:$0xff]
    %v2994 = vld [vmem:[#allocation12 + $0x44c] sm:$0xff]
    %v2995 = vld [vmem:[#allocation12 + $0x454] sm:$0xff]
    %v2996 = vld [vmem:[#allocation12 + $0x45c] sm:$0xf]
    %v2997 = vld [vmem:[#allocation12 + $0x460] sm:$0xff]
    %v2998 = vld [vmem:[#allocation12 + $0x468] sm:$0xff]
    %v2999 = vld [vmem:[#allocation12 + $0x470] sm:$0xff]
    %v3000 = vld [vmem:[#allocation12 + $0x478] sm:$0xf]
    %v3001 = vld [vmem:[#allocation12 + $0x47c] sm:$0xff]
    %v3002 = vld [vmem:[#allocation12 + $0x484] sm:$0xff]
    %v3003 = vld [vmem:[#allocation12 + $0x48c] sm:$0xff]
    %v3004 = vld [vmem:[#allocation12 + $0x494] sm:$0xf]
    %v3005 = vld [vmem:[#allocation12 + $0x498] sm:$0xff]
    %v3006 = vld [vmem:[#allocation12 + $0x4a0] sm:$0xff]
    %v3007 = vld [vmem:[#allocation12 + $0x4a8] sm:$0xff]
    %v3008 = vld [vmem:[#allocation12 + $0x4b0] sm:$0xf]
    %v3009 = vld [vmem:[#allocation12 + $0x4b4] sm:$0xff]
    %v3010 = vld [vmem:[#allocation12 + $0x4bc] sm:$0xff]
    %v3011 = vld [vmem:[#allocation12 + $0x4c4] sm:$0xff]
    %v3012 = vld [vmem:[#allocation12 + $0x4cc] sm:$0xf]
    %v3013 = vld [vmem:[#allocation12 + $0x4d0] sm:$0xff]
    %v3014 = vld [vmem:[#allocation12 + $0x4d8] sm:$0xff]
    %v3015 = vld [vmem:[#allocation12 + $0x4e0] sm:$0xff]
    %v3016 = vld [vmem:[#allocation12 + $0x4e8] sm:$0xf]
    %v3017 = vld [vmem:[#allocation12 + $0x4ec] sm:$0xff]
    %v3018 = vld [vmem:[#allocation12 + $0x4f4] sm:$0xff]
    %v3019 = vld [vmem:[#allocation12 + $0x4fc] sm:$0xff]
    %v3020 = vld [vmem:[#allocation12 + $0x504] sm:$0xf]
    %v3021 = vld [vmem:[#allocation12 + $0x508] sm:$0xff]
    %v3022 = vld [vmem:[#allocation12 + $0x510] sm:$0xff]
    %v3023 = vld [vmem:[#allocation12 + $0x518] sm:$0xff]
    %v3024 = vld [vmem:[#allocation12 + $0x520] sm:$0xf]
    %v3025 = vld [vmem:[#allocation12 + $0x524] sm:$0xff]
    %v3026 = vld [vmem:[#allocation12 + $0x52c] sm:$0xff]
    %v3027 = vld [vmem:[#allocation12 + $0x534] sm:$0xff]
    %v3028 = vld [vmem:[#allocation12 + $0x53c] sm:$0xf]
    %v3029 = vld [vmem:[#allocation12 + $0x540] sm:$0xff]
    %v3030 = vld [vmem:[#allocation12 + $0x548] sm:$0xff]
    %v3031 = vld [vmem:[#allocation12 + $0x550] sm:$0xff]
    %v3032 = vld [vmem:[#allocation12 + $0x558] sm:$0xf]
    %v3033 = vld [vmem:[#allocation12 + $0x55c] sm:$0xff]
    %v3034 = vld [vmem:[#allocation12 + $0x564] sm:$0xff]
    %v3035 = vld [vmem:[#allocation12 + $0x56c] sm:$0xff]
    %v3036 = vld [vmem:[#allocation12 + $0x574] sm:$0xf]
    %v3037 = vld [vmem:[#allocation12 + $0x578] sm:$0xff]
    %v3038 = vld [vmem:[#allocation12 + $0x580] sm:$0xff]
    %v3039 = vld [vmem:[#allocation12 + $0x588] sm:$0xff]
    %v3040 = vld [vmem:[#allocation12 + $0x590] sm:$0xf]
    %v3041 = vld [vmem:[#allocation12 + $0x594] sm:$0xff]
    %v3042 = vld [vmem:[#allocation12 + $0x59c] sm:$0xff]
    %v3043 = vld [vmem:[#allocation12 + $0x5a4] sm:$0xff]
    %v3044 = vld [vmem:[#allocation12 + $0x5ac] sm:$0xf]
    %v3045 = vld [vmem:[#allocation12 + $0x5b0] sm:$0xff]
    %v3046 = vld [vmem:[#allocation12 + $0x5b8] sm:$0xff]
    %v3047 = vld [vmem:[#allocation12 + $0x5c0] sm:$0xff]
    %v3048 = vld [vmem:[#allocation12 + $0x5c8] sm:$0xf]
    %v3049 = vld [vmem:[#allocation12 + $0x5cc] sm:$0xff]
    %v3050 = vld [vmem:[#allocation12 + $0x5d4] sm:$0xff]
    %v3051 = vld [vmem:[#allocation12 + $0x5dc] sm:$0xff]
    %v3052 = vld [vmem:[#allocation12 + $0x5e4] sm:$0xf]
    %v3053 = vld [vmem:[#allocation12 + $0x5e8] sm:$0xff]
    %v3054 = vld [vmem:[#allocation12 + $0x5f0] sm:$0xff]
    %v3055 = vld [vmem:[#allocation12 + $0x5f8] sm:$0xff]
    %v3056 = vld [vmem:[#allocation12 + $0x600] sm:$0xf]
    %v3057 = vld [vmem:[#allocation12 + $0x604] sm:$0xff]
    %v3058 = vld [vmem:[#allocation12 + $0x60c] sm:$0xff]
    %v3059 = vld [vmem:[#allocation12 + $0x614] sm:$0xff]
    %v3060 = vld [vmem:[#allocation12 + $0x61c] sm:$0xf]
    %v3061 = vld [vmem:[#allocation12 + $0x620] sm:$0xff]
    %v3062 = vld [vmem:[#allocation12 + $0x628] sm:$0xff]
    %v3063 = vld [vmem:[#allocation12 + $0x630] sm:$0xff]
    %v3064 = vld [vmem:[#allocation12 + $0x638] sm:$0xf]
    %v3065 = vld [vmem:[#allocation12 + $0x63c] sm:$0xff]
    %v3066 = vld [vmem:[#allocation12 + $0x644] sm:$0xff]
    %v3067 = vld [vmem:[#allocation12 + $0x64c] sm:$0xff]
    %v3068 = vld [vmem:[#allocation12 + $0x654] sm:$0xf]
    %v3069 = vld [vmem:[#allocation12 + $0x658] sm:$0xff]
    %v3070 = vld [vmem:[#allocation12 + $0x660] sm:$0xff]
    %v3071 = vld [vmem:[#allocation12 + $0x668] sm:$0xff]
    %v3072 = vld [vmem:[#allocation12 + $0x670] sm:$0xf]
    %v3073 = vld [vmem:[#allocation12 + $0x674] sm:$0xff]
    %v3074 = vld [vmem:[#allocation12 + $0x67c] sm:$0xff]
    %v3075 = vld [vmem:[#allocation12 + $0x684] sm:$0xff]
    %v3076 = vld [vmem:[#allocation12 + $0x68c] sm:$0xf]
    %v3077 = vld [vmem:[#allocation12 + $0x690] sm:$0xff]
    %v3078 = vld [vmem:[#allocation12 + $0x698] sm:$0xff]
    %v3079 = vld [vmem:[#allocation12 + $0x6a0] sm:$0xff]
    %v3080 = vld [vmem:[#allocation12 + $0x6a8] sm:$0xf]
    %v3081 = vld [vmem:[#allocation12 + $0x6ac] sm:$0xff]
    %v3082 = vld [vmem:[#allocation12 + $0x6b4] sm:$0xff]
    %v3083 = vld [vmem:[#allocation12 + $0x6bc] sm:$0xff]
    %v3084 = vld [vmem:[#allocation12 + $0x6c4] sm:$0xf]
    %v3085 = vld [vmem:[#allocation12 + $0x6c8] sm:$0xff]
    %v3086 = vld [vmem:[#allocation12 + $0x6d0] sm:$0xff]
    %v3087 = vld [vmem:[#allocation12 + $0x6d8] sm:$0xff]
    %v3088 = vld [vmem:[#allocation12 + $0x6e0] sm:$0xf]
    %v3089 = vld [vmem:[#allocation12 + $0x6e4] sm:$0xff]
    %v3090 = vld [vmem:[#allocation12 + $0x6ec] sm:$0xff]
    %v3091 = vld [vmem:[#allocation12 + $0x6f4] sm:$0xff]
    %v3092 = vld [vmem:[#allocation12 + $0x6fc] sm:$0xf]
    %v3093 = vld [vmem:[#allocation12 + $0x700] sm:$0xff]
    %v3094 = vld [vmem:[#allocation12 + $0x708] sm:$0xff]
    %v3095 = vld [vmem:[#allocation12 + $0x710] sm:$0xff]
    %v3096 = vld [vmem:[#allocation12 + $0x718] sm:$0xf]
    %v3097 = vld [vmem:[#allocation12 + $0x71c] sm:$0xff]
    %v3098 = vld [vmem:[#allocation12 + $0x724] sm:$0xff]
    %v3099 = vld [vmem:[#allocation12 + $0x72c] sm:$0xff]
    %v3100 = vld [vmem:[#allocation12 + $0x734] sm:$0xf]
    %v3101 = vld [vmem:[#allocation12 + $0x738] sm:$0xff]
    %v3102 = vld [vmem:[#allocation12 + $0x740] sm:$0xff]
    %v3103 = vld [vmem:[#allocation12 + $0x748] sm:$0xff]
    %v3104 = vld [vmem:[#allocation12 + $0x750] sm:$0xf]
    %v3105 = vld [vmem:[#allocation12 + $0x754] sm:$0xff]
    %v3106 = vld [vmem:[#allocation12 + $0x75c] sm:$0xff]
    %v3107 = vld [vmem:[#allocation12 + $0x764] sm:$0xff]
    %v3108 = vld [vmem:[#allocation12 + $0x76c] sm:$0xf]
    %v3109 = vld [vmem:[#allocation12 + $0x770] sm:$0xff]
    %v3110 = vld [vmem:[#allocation12 + $0x778] sm:$0xff]
    %v3111 = vld [vmem:[#allocation12 + $0x780] sm:$0xff]
    %v3112 = vld [vmem:[#allocation12 + $0x788] sm:$0xf]
    %v3113 = vld [vmem:[#allocation12 + $0x78c] sm:$0xff]
    %v3114 = vld [vmem:[#allocation12 + $0x794] sm:$0xff]
    %v3115 = vld [vmem:[#allocation12 + $0x79c] sm:$0xff]
    %v3116 = vld [vmem:[#allocation12 + $0x7a4] sm:$0xf]
    %v3117 = vld [vmem:[#allocation12 + $0x7a8] sm:$0xff]
    %v3118 = vld [vmem:[#allocation12 + $0x7b0] sm:$0xff]
    %v3119 = vld [vmem:[#allocation12 + $0x7b8] sm:$0xff]
    %v3120 = vld [vmem:[#allocation12 + $0x7c0] sm:$0xf]
    %v3121 = vld [vmem:[#allocation12 + $0x7c4] sm:$0xff]
    %v3122 = vld [vmem:[#allocation12 + $0x7cc] sm:$0xff]
    %v3123 = vld [vmem:[#allocation12 + $0x7d4] sm:$0xff]
    %v3124 = vld [vmem:[#allocation12 + $0x7dc] sm:$0xf]
    %v3125 = vld [vmem:[#allocation12 + $0x7e0] sm:$0xff]
    %v3126 = vld [vmem:[#allocation12 + $0x7e8] sm:$0xff]
    %v3127 = vld [vmem:[#allocation12 + $0x7f0] sm:$0xff]
    %v3128 = vld [vmem:[#allocation12 + $0x7f8] sm:$0xf]
    %v3129 = vld [vmem:[#allocation12 + $0x7fc] sm:$0xff]
    %v3130 = vld [vmem:[#allocation12 + $0x804] sm:$0xff]
    %v3131 = vld [vmem:[#allocation12 + $0x80c] sm:$0xff]
    %v3132 = vld [vmem:[#allocation12 + $0x814] sm:$0xf]
    %v3133 = vld [vmem:[#allocation12 + $0x818] sm:$0xff]
    %v3134 = vld [vmem:[#allocation12 + $0x820] sm:$0xff]
    %v3135 = vld [vmem:[#allocation12 + $0x828] sm:$0xff]
    %v3136 = vld [vmem:[#allocation12 + $0x830] sm:$0xf]
    %v3137 = vld [vmem:[#allocation12 + $0x834] sm:$0xff]
    %v3138 = vld [vmem:[#allocation12 + $0x83c] sm:$0xff]
    %v3139 = vld [vmem:[#allocation12 + $0x844] sm:$0xff]
    %v3140 = vld [vmem:[#allocation12 + $0x84c] sm:$0xf]
    %v3141 = vld [vmem:[#allocation12 + $0x850] sm:$0xff]
    %v3142 = vld [vmem:[#allocation12 + $0x858] sm:$0xff]
    %v3143 = vld [vmem:[#allocation12 + $0x860] sm:$0xff]
    %v3144 = vld [vmem:[#allocation12 + $0x868] sm:$0xf]
    %v3145 = vld [vmem:[#allocation12 + $0x86c] sm:$0xff]
    %v3146 = vld [vmem:[#allocation12 + $0x874] sm:$0xff]
    %v3147 = vld [vmem:[#allocation12 + $0x87c] sm:$0xff]
    %v3148 = vld [vmem:[#allocation12 + $0x884] sm:$0xf]
    %v3149 = vld [vmem:[#allocation12 + $0x888] sm:$0xff]
    %v3150 = vld [vmem:[#allocation12 + $0x890] sm:$0xff]
    %v3151 = vld [vmem:[#allocation12 + $0x898] sm:$0xff]
    %v3152 = vld [vmem:[#allocation12 + $0x8a0] sm:$0xf]
    %v3153 = vld [vmem:[#allocation12 + $0x8a4] sm:$0xff]
    %v3154 = vld [vmem:[#allocation12 + $0x8ac] sm:$0xff]
    %v3155 = vld [vmem:[#allocation12 + $0x8b4] sm:$0xff]
    %v3156 = vld [vmem:[#allocation12 + $0x8bc] sm:$0xf]
    %v3157 = vld [vmem:[#allocation12 + $0x8c0] sm:$0xff]
    %v3158 = vld [vmem:[#allocation12 + $0x8c8] sm:$0xff]
    %v3159 = vld [vmem:[#allocation12 + $0x8d0] sm:$0xff]
    %v3160 = vld [vmem:[#allocation12 + $0x8d8] sm:$0xf]
    %v3161 = vld [vmem:[#allocation12 + $0x8dc] sm:$0xff]
    %v3162 = vld [vmem:[#allocation12 + $0x8e4] sm:$0xff]
    %v3163 = vld [vmem:[#allocation12 + $0x8ec] sm:$0xff]
    %v3164 = vld [vmem:[#allocation12 + $0x8f4] sm:$0xf]
    %v3165 = vld [vmem:[#allocation12 + $0x8f8] sm:$0xff]
    %v3166 = vld [vmem:[#allocation12 + $0x900] sm:$0xff]
    %v3167 = vld [vmem:[#allocation12 + $0x908] sm:$0xff]
    %v3168 = vld [vmem:[#allocation12 + $0x910] sm:$0xf]
    %v3169 = vld [vmem:[#allocation12 + $0x914] sm:$0xff]
    %v3170 = vld [vmem:[#allocation12 + $0x91c] sm:$0xff]
    %v3171 = vld [vmem:[#allocation12 + $0x924] sm:$0xff]
    %v3172 = vld [vmem:[#allocation12 + $0x92c] sm:$0xf]
    %v3173 = vld [vmem:[#allocation12 + $0x930] sm:$0xff]
    %v3174 = vld [vmem:[#allocation12 + $0x938] sm:$0xff]
    %v3175 = vld [vmem:[#allocation12 + $0x940] sm:$0xff]
    %v3176 = vld [vmem:[#allocation12 + $0x948] sm:$0xf]
    %v3177 = vld [vmem:[#allocation12 + $0x94c] sm:$0xff]
    %v3178 = vld [vmem:[#allocation12 + $0x954] sm:$0xff]
    %v3179 = vld [vmem:[#allocation12 + $0x95c] sm:$0xff]
    %v3180 = vld [vmem:[#allocation12 + $0x964] sm:$0xf]
    %v3181 = vld [vmem:[#allocation12 + $0x968] sm:$0xff]
    %v3182 = vld [vmem:[#allocation12 + $0x970] sm:$0xff]
    %v3183 = vld [vmem:[#allocation12 + $0x978] sm:$0xff]
    %v3184 = vld [vmem:[#allocation12 + $0x980] sm:$0xf]
    %v3185 = vld [vmem:[#allocation12 + $0x984] sm:$0xff]
    %v3186 = vld [vmem:[#allocation12 + $0x98c] sm:$0xff]
    %v3187 = vld [vmem:[#allocation12 + $0x994] sm:$0xff]
    %v3188 = vld [vmem:[#allocation12 + $0x99c] sm:$0xf]
    %v3189 = vld [vmem:[#allocation12 + $0x9a0] sm:$0xff]
    %v3190 = vld [vmem:[#allocation12 + $0x9a8] sm:$0xff]
    %v3191 = vld [vmem:[#allocation12 + $0x9b0] sm:$0xff]
    %v3192 = vld [vmem:[#allocation12 + $0x9b8] sm:$0xf]
    %v3193 = vld [vmem:[#allocation12 + $0x9bc] sm:$0xff]
    %v3194 = vld [vmem:[#allocation12 + $0x9c4] sm:$0xff]
    %v3195 = vld [vmem:[#allocation12 + $0x9cc] sm:$0xff]
    %v3196 = vld [vmem:[#allocation12 + $0x9d4] sm:$0xf]
    %v3197 = vld [vmem:[#allocation12 + $0x9d8] sm:$0xff]
    %v3198 = vld [vmem:[#allocation12 + $0x9e0] sm:$0xff]
    %v3199 = vld [vmem:[#allocation12 + $0x9e8] sm:$0xff]
    %v3200 = vld [vmem:[#allocation12 + $0x9f0] sm:$0xf]
    %v3201 = vld [vmem:[#allocation12 + $0x9f4] sm:$0xff]
    %v3202 = vld [vmem:[#allocation12 + $0x9fc] sm:$0xff]
    %v3203 = vld [vmem:[#allocation12 + $0xa04] sm:$0xff]
    %v3204 = vld [vmem:[#allocation12 + $0xa0c] sm:$0xf]
    %v3205 = vld [vmem:[#allocation12 + $0xa10] sm:$0xff]
    %v3206 = vld [vmem:[#allocation12 + $0xa18] sm:$0xff]
    %v3207 = vld [vmem:[#allocation12 + $0xa20] sm:$0xff]
    %v3208 = vld [vmem:[#allocation12 + $0xa28] sm:$0xf]
    %v3209 = vld [vmem:[#allocation12 + $0xa2c] sm:$0xff]
    %v3210 = vld [vmem:[#allocation12 + $0xa34] sm:$0xff]
    %v3211 = vld [vmem:[#allocation12 + $0xa3c] sm:$0xff]
    %v3212 = vld [vmem:[#allocation12 + $0xa44] sm:$0xf]
    %v3213 = vld [vmem:[#allocation12 + $0xa48] sm:$0xff]
    %v3214 = vld [vmem:[#allocation12 + $0xa50] sm:$0xff]
    %v3215 = vld [vmem:[#allocation12 + $0xa58] sm:$0xff]
    %v3216 = vld [vmem:[#allocation12 + $0xa60] sm:$0xf]
    %v3217 = vld [vmem:[#allocation12 + $0xa64] sm:$0xff]
    %v3218 = vld [vmem:[#allocation12 + $0xa6c] sm:$0xff]
    %v3219 = vld [vmem:[#allocation12 + $0xa74] sm:$0xff]
    %v3220 = vld [vmem:[#allocation12 + $0xa7c] sm:$0xf]
    %v3221 = vld [vmem:[#allocation12 + $0xa80] sm:$0xff]
    %v3222 = vld [vmem:[#allocation12 + $0xa88] sm:$0xff]
    %v3223 = vld [vmem:[#allocation12 + $0xa90] sm:$0xff]
    %v3224 = vld [vmem:[#allocation12 + $0xa98] sm:$0xf]
    %v3225 = vld [vmem:[#allocation12 + $0xa9c] sm:$0xff]
    %v3226 = vld [vmem:[#allocation12 + $0xaa4] sm:$0xff]
    %v3227 = vld [vmem:[#allocation12 + $0xaac] sm:$0xff]
    %v3228 = vld [vmem:[#allocation12 + $0xab4] sm:$0xf]
    %v3229 = vld [vmem:[#allocation12 + $0xab8] sm:$0xff]
    %v3230 = vld [vmem:[#allocation12 + $0xac0] sm:$0xff]
    %v3231 = vld [vmem:[#allocation12 + $0xac8] sm:$0xff]
    %v3232 = vld [vmem:[#allocation12 + $0xad0] sm:$0xf]
    %v3233 = vld [vmem:[#allocation12 + $0xad4] sm:$0xff]
    %v3234 = vld [vmem:[#allocation12 + $0xadc] sm:$0xff]
    %v3235 = vld [vmem:[#allocation12 + $0xae4] sm:$0xff]
    %v3236 = vld [vmem:[#allocation12 + $0xaec] sm:$0xf]
    %v3237 = vld [vmem:[#allocation12 + $0xaf0] sm:$0xff]
    %v3238 = vld [vmem:[#allocation12 + $0xaf8] sm:$0xff]
    %v3239 = vld [vmem:[#allocation12 + $0xb00] sm:$0xff]
    %v3240 = vld [vmem:[#allocation12 + $0xb08] sm:$0xf]
    %v3241 = vld [vmem:[#allocation12 + $0xb0c] sm:$0xff]
    %v3242 = vld [vmem:[#allocation12 + $0xb14] sm:$0xff]
    %v3243 = vld [vmem:[#allocation12 + $0xb1c] sm:$0xff]
    %v3244 = vld [vmem:[#allocation12 + $0xb24] sm:$0xf]
    %v3245 = vld [vmem:[#allocation12 + $0xb28] sm:$0xff]
    %v3246 = vld [vmem:[#allocation12 + $0xb30] sm:$0xff]
    %v3247 = vld [vmem:[#allocation12 + $0xb38] sm:$0xff]
    %v3248 = vld [vmem:[#allocation12 + $0xb40] sm:$0xf]
    %v3249 = vld [vmem:[#allocation12 + $0xb44] sm:$0xff]
    %v3250 = vld [vmem:[#allocation12 + $0xb4c] sm:$0xff]
    %v3251 = vld [vmem:[#allocation12 + $0xb54] sm:$0xff]
    %v3252 = vld [vmem:[#allocation12 + $0xb5c] sm:$0xf]
    %v3253 = vld [vmem:[#allocation12 + $0xb60] sm:$0xff]
    %v3254 = vld [vmem:[#allocation12 + $0xb68] sm:$0xff]
    %v3255 = vld [vmem:[#allocation12 + $0xb70] sm:$0xff]
    %v3256 = vld [vmem:[#allocation12 + $0xb78] sm:$0xf]
    %v3257 = vld [vmem:[#allocation12 + $0xb7c] sm:$0xff]
    %v3258 = vld [vmem:[#allocation12 + $0xb84] sm:$0xff]
    %v3259 = vld [vmem:[#allocation12 + $0xb8c] sm:$0xff]
    %v3260 = vld [vmem:[#allocation12 + $0xb94] sm:$0xf]
    %v3261 = vld [vmem:[#allocation12 + $0xb98] sm:$0xff]
    %v3262 = vld [vmem:[#allocation12 + $0xba0] sm:$0xff]
    %v3263 = vld [vmem:[#allocation12 + $0xba8] sm:$0xff]
    %v3264 = vld [vmem:[#allocation12 + $0xbb0] sm:$0xf]
    %v3265 = vld [vmem:[#allocation12 + $0xbb4] sm:$0xff]
    %v3266 = vld [vmem:[#allocation12 + $0xbbc] sm:$0xff]
    %v3267 = vld [vmem:[#allocation12 + $0xbc4] sm:$0xff]
    %v3268 = vld [vmem:[#allocation12 + $0xbcc] sm:$0xf]
    %v3269 = vld [vmem:[#allocation12 + $0xbd0] sm:$0xff]
    %v3270 = vld [vmem:[#allocation12 + $0xbd8] sm:$0xff]
    %v3271 = vld [vmem:[#allocation12 + $0xbe0] sm:$0xff]
    %v3272 = vld [vmem:[#allocation12 + $0xbe8] sm:$0xf]
    %v3273 = vld [vmem:[#allocation12 + $0xbec] sm:$0xff]
    %v3274 = vld [vmem:[#allocation12 + $0xbf4] sm:$0xff]
    %v3275 = vld [vmem:[#allocation12 + $0xbfc] sm:$0xff]
    %v3276 = vld [vmem:[#allocation12 + $0xc04] sm:$0xf]
    %v3277 = vld [vmem:[#allocation12 + $0xc08] sm:$0xff]
    %v3278 = vld [vmem:[#allocation12 + $0xc10] sm:$0xff]
    %v3279 = vld [vmem:[#allocation12 + $0xc18] sm:$0xff]
    %v3280 = vld [vmem:[#allocation12 + $0xc20] sm:$0xf]
    %v3281 = vld [vmem:[#allocation12 + $0xc24] sm:$0xff]
    %v3282 = vld [vmem:[#allocation12 + $0xc2c] sm:$0xff]
    %v3283 = vld [vmem:[#allocation12 + $0xc34] sm:$0xff]
    %v3284 = vld [vmem:[#allocation12 + $0xc3c] sm:$0xf]
    %v3285 = vld [vmem:[#allocation12 + $0xc40] sm:$0xff]
    %v3286 = vld [vmem:[#allocation12 + $0xc48] sm:$0xff]
    %v3287 = vld [vmem:[#allocation12 + $0xc50] sm:$0xff]
    %v3288 = vld [vmem:[#allocation12 + $0xc58] sm:$0xf]
    %v3289 = vld [vmem:[#allocation12 + $0xc5c] sm:$0xff]
    %v3290 = vld [vmem:[#allocation12 + $0xc64] sm:$0xff]
    %v3291 = vld [vmem:[#allocation12 + $0xc6c] sm:$0xff]
    %v3292 = vld [vmem:[#allocation12 + $0xc74] sm:$0xf]
    %v3293 = vld [vmem:[#allocation12 + $0xc78] sm:$0xff]
    %v3294 = vld [vmem:[#allocation12 + $0xc80] sm:$0xff]
    %v3295 = vld [vmem:[#allocation12 + $0xc88] sm:$0xff]
    %v3296 = vld [vmem:[#allocation12 + $0xc90] sm:$0xf]
    %v3297 = vld [vmem:[#allocation12 + $0xc94] sm:$0xff]
    %v3298 = vld [vmem:[#allocation12 + $0xc9c] sm:$0xff]
    %v3299 = vld [vmem:[#allocation12 + $0xca4] sm:$0xff]
    %v3300 = vld [vmem:[#allocation12 + $0xcac] sm:$0xf]
    %v3301 = vld [vmem:[#allocation12 + $0xcb0] sm:$0xff]
    %v3302 = vld [vmem:[#allocation12 + $0xcb8] sm:$0xff]
    %v3303 = vld [vmem:[#allocation12 + $0xcc0] sm:$0xff]
    %v3304 = vld [vmem:[#allocation12 + $0xcc8] sm:$0xf]
    %v3305 = vld [vmem:[#allocation12 + $0xccc] sm:$0xff]
    %v3306 = vld [vmem:[#allocation12 + $0xcd4] sm:$0xff]
    %v3307 = vld [vmem:[#allocation12 + $0xcdc] sm:$0xff]
    %v3308 = vld [vmem:[#allocation12 + $0xce4] sm:$0xf]
    %v3309 = vld [vmem:[#allocation12 + $0xce8] sm:$0xff]
    %v3310 = vld [vmem:[#allocation12 + $0xcf0] sm:$0xff]
    %v3311 = vld [vmem:[#allocation12 + $0xcf8] sm:$0xff]
    %v3312 = vld [vmem:[#allocation12 + $0xd00] sm:$0xf]
    %v3313 = vld [vmem:[#allocation12 + $0xd04] sm:$0xff]
    %v3314 = vld [vmem:[#allocation12 + $0xd0c] sm:$0xff]
    %v3315 = vld [vmem:[#allocation12 + $0xd14] sm:$0xff]
    %v3316 = vld [vmem:[#allocation12 + $0xd1c] sm:$0xf]
    %v3317 = vld [vmem:[#allocation12 + $0xd20] sm:$0xff]
    %v3318 = vld [vmem:[#allocation12 + $0xd28] sm:$0xff]
    %v3319 = vld [vmem:[#allocation12 + $0xd30] sm:$0xff]
    %v3320 = vld [vmem:[#allocation12 + $0xd38] sm:$0xf]
    %v3321 = vld [vmem:[#allocation12 + $0xd3c] sm:$0xff]
    %v3322 = vld [vmem:[#allocation12 + $0xd44] sm:$0xff]
    %v3323 = vld [vmem:[#allocation12 + $0xd4c] sm:$0xff]
    %v3324 = vld [vmem:[#allocation12 + $0xd54] sm:$0xf]
    %v3325 = vld [vmem:[#allocation12 + $0xd58] sm:$0xff]
    %v3326 = vld [vmem:[#allocation12 + $0xd60] sm:$0xff]
    %v3327 = vld [vmem:[#allocation12 + $0xd68] sm:$0xff]
    %v3328 = vld [vmem:[#allocation12 + $0xd70] sm:$0xf]
    %v3329 = vld [vmem:[#allocation12 + $0xd74] sm:$0xff]
    %v3330 = vld [vmem:[#allocation12 + $0xd7c] sm:$0xff]
    %v3331 = vld [vmem:[#allocation12 + $0xd84] sm:$0xff]
    %v3332 = vld [vmem:[#allocation12 + $0xd8c] sm:$0xf]
    %v3333 = vld [vmem:[#allocation12 + $0xd90] sm:$0xff]
    %v3334 = vld [vmem:[#allocation12 + $0xd98] sm:$0xff]
    %v3335 = vld [vmem:[#allocation12 + $0xda0] sm:$0xff]
    %v3336 = vld [vmem:[#allocation12 + $0xda8] sm:$0xf]
    %v3337 = vld [vmem:[#allocation12 + $0xdac] sm:$0xff]
    %v3338 = vld [vmem:[#allocation12 + $0xdb4] sm:$0xff]
    %v3339 = vld [vmem:[#allocation12 + $0xdbc] sm:$0xff]
    %v3340 = vld [vmem:[#allocation12 + $0xdc4] sm:$0xf]
    %v3341 = vld [vmem:[#allocation12 + $0xdc8] sm:$0xff]
    %v3342 = vld [vmem:[#allocation12 + $0xdd0] sm:$0xff]
    %v3343 = vld [vmem:[#allocation12 + $0xdd8] sm:$0xff]
    %v3344 = vld [vmem:[#allocation12 + $0xde0] sm:$0xf]
    %v3345 = vld [vmem:[#allocation12 + $0xde4] sm:$0xff]
    %v3346 = vld [vmem:[#allocation12 + $0xdec] sm:$0xff]
    %v3347 = vld [vmem:[#allocation12 + $0xdf4] sm:$0xff]
    %v3348 = vld [vmem:[#allocation12 + $0xdfc] sm:$0xf]
    %v3349 = vld [vmem:[#allocation13] sm:$0xff]
    %v3351 = vperm.slane %v3349, 0
    %v3352 = vperm.slane %v3349, 1
    %v3353 = vperm.slane %v3349, 2
    %v3354 = vperm.slane %v3349, 3
    %v3355 = vperm.slane %v3349, 4
    %v3356 = vperm.slane %v3349, 5
    %v3357 = vperm.slane %v3349, 6
    %v3877 = vunpack.c.l.b16 %v2837
    %v3878 = vunpack.c.h.b16 %v2837
    %v3879 = vunpack.c.l.b16 %v2838
    %v3880 = vunpack.c.h.b16 %v2838
    %v3881 = vunpack.c.l.b16 %v2839
    %v3882 = vunpack.c.h.b16 %v2839
    %v3883 = vunpack.c.l.b16 %v2840
    %v3884 = vunpack.c.l.b16 %v2841
    %v3885 = vunpack.c.h.b16 %v2841
    %v3886 = vunpack.c.l.b16 %v2842
    %v3887 = vunpack.c.h.b16 %v2842
    %v3888 = vunpack.c.l.b16 %v2843
    %v3889 = vunpack.c.h.b16 %v2843
    %v3890 = vunpack.c.l.b16 %v2844
    %v3891 = vunpack.c.l.b16 %v2845
    %v3892 = vunpack.c.h.b16 %v2845
    %v3893 = vunpack.c.l.b16 %v2846
    %v3894 = vunpack.c.h.b16 %v2846
    %v3895 = vunpack.c.l.b16 %v2847
    %v3896 = vunpack.c.h.b16 %v2847
    %v3897 = vunpack.c.l.b16 %v2848
    %v3898 = vunpack.c.l.b16 %v2849
    %v3899 = vunpack.c.h.b16 %v2849
    %v3900 = vunpack.c.l.b16 %v2850
    %v3901 = vunpack.c.h.b16 %v2850
    %v3902 = vunpack.c.l.b16 %v2851
    %v3903 = vunpack.c.h.b16 %v2851
    %v3904 = vunpack.c.l.b16 %v2852
    %v3905 = vunpack.c.l.b16 %v2853
    %v3906 = vunpack.c.h.b16 %v2853
    %v3907 = vunpack.c.l.b16 %v2854
    %v3908 = vunpack.c.h.b16 %v2854
    %v3909 = vunpack.c.l.b16 %v2855
    %v3910 = vunpack.c.h.b16 %v2855
    %v3911 = vunpack.c.l.b16 %v2856
    %v3912 = vunpack.c.l.b16 %v2857
    %v3913 = vunpack.c.h.b16 %v2857
    %v3914 = vunpack.c.l.b16 %v2858
    %v3915 = vunpack.c.h.b16 %v2858
    %v3916 = vunpack.c.l.b16 %v2859
    %v3917 = vunpack.c.h.b16 %v2859
    %v3918 = vunpack.c.l.b16 %v2860
    %v3919 = vunpack.c.l.b16 %v2861
    %v3920 = vunpack.c.h.b16 %v2861
    %v3921 = vunpack.c.l.b16 %v2862
    %v3922 = vunpack.c.h.b16 %v2862
    %v3923 = vunpack.c.l.b16 %v2863
    %v3924 = vunpack.c.h.b16 %v2863
    %v3925 = vunpack.c.l.b16 %v2864
    %v3926 = vunpack.c.l.b16 %v2865
    %v3927 = vunpack.c.h.b16 %v2865
    %v3928 = vunpack.c.l.b16 %v2866
    %v3929 = vunpack.c.h.b16 %v2866
    %v3930 = vunpack.c.l.b16 %v2867
    %v3931 = vunpack.c.h.b16 %v2867
    %v3932 = vunpack.c.l.b16 %v2868
    %v3933 = vunpack.c.l.b16 %v2869
    %v3934 = vunpack.c.h.b16 %v2869
    %v3935 = vunpack.c.l.b16 %v2870
    %v3936 = vunpack.c.h.b16 %v2870
    %v3937 = vunpack.c.l.b16 %v2871
    %v3938 = vunpack.c.h.b16 %v2871
    %v3939 = vunpack.c.l.b16 %v2872
    %v3940 = vunpack.c.l.b16 %v2873
    %v3941 = vunpack.c.h.b16 %v2873
    %v3942 = vunpack.c.l.b16 %v2874
    %v3943 = vunpack.c.h.b16 %v2874
    %v3944 = vunpack.c.l.b16 %v2875
    %v3945 = vunpack.c.h.b16 %v2875
    %v3946 = vunpack.c.l.b16 %v2876
    %v3947 = vunpack.c.l.b16 %v2877
    %v3948 = vunpack.c.h.b16 %v2877
    %v3949 = vunpack.c.l.b16 %v2878
    %v3950 = vunpack.c.h.b16 %v2878
    %v3951 = vunpack.c.l.b16 %v2879
    %v3952 = vunpack.c.h.b16 %v2879
    %v3953 = vunpack.c.l.b16 %v2880
    %v3954 = vunpack.c.l.b16 %v2881
    %v3955 = vunpack.c.h.b16 %v2881
    %v3956 = vunpack.c.l.b16 %v2882
    %v3957 = vunpack.c.h.b16 %v2882
    %v3958 = vunpack.c.l.b16 %v2883
    %v3959 = vunpack.c.h.b16 %v2883
    %v3960 = vunpack.c.l.b16 %v2884
    %v3961 = vunpack.c.l.b16 %v2885
    %v3962 = vunpack.c.h.b16 %v2885
    %v3963 = vunpack.c.l.b16 %v2886
    %v3964 = vunpack.c.h.b16 %v2886
    %v3965 = vunpack.c.l.b16 %v2887
    %v3966 = vunpack.c.h.b16 %v2887
    %v3967 = vunpack.c.l.b16 %v2888
    %v3968 = vunpack.c.l.b16 %v2889
    %v3969 = vunpack.c.h.b16 %v2889
    %v3970 = vunpack.c.l.b16 %v2890
    %v3971 = vunpack.c.h.b16 %v2890
    %v3972 = vunpack.c.l.b16 %v2891
    %v3973 = vunpack.c.h.b16 %v2891
    %v3974 = vunpack.c.l.b16 %v2892
    %v3975 = vunpack.c.l.b16 %v2893
    %v3976 = vunpack.c.h.b16 %v2893
    %v3977 = vunpack.c.l.b16 %v2894
    %v3978 = vunpack.c.h.b16 %v2894
    %v3979 = vunpack.c.l.b16 %v2895
    %v3980 = vunpack.c.h.b16 %v2895
    %v3981 = vunpack.c.l.b16 %v2896
    %v3982 = vunpack.c.l.b16 %v2897
    %v3983 = vunpack.c.h.b16 %v2897
    %v3984 = vunpack.c.l.b16 %v2898
    %v3985 = vunpack.c.h.b16 %v2898
    %v3986 = vunpack.c.l.b16 %v2899
    %v3987 = vunpack.c.h.b16 %v2899
    %v3988 = vunpack.c.l.b16 %v2900
    %v3989 = vunpack.c.l.b16 %v2901
    %v3990 = vunpack.c.h.b16 %v2901
    %v3991 = vunpack.c.l.b16 %v2902
    %v3992 = vunpack.c.h.b16 %v2902
    %v3993 = vunpack.c.l.b16 %v2903
    %v3994 = vunpack.c.h.b16 %v2903
    %v3995 = vunpack.c.l.b16 %v2904
    %v3996 = vunpack.c.l.b16 %v2905
    %v3997 = vunpack.c.h.b16 %v2905
    %v3998 = vunpack.c.l.b16 %v2906
    %v3999 = vunpack.c.h.b16 %v2906
    %v4000 = vunpack.c.l.b16 %v2907
    %v4001 = vunpack.c.h.b16 %v2907
    %v4002 = vunpack.c.l.b16 %v2908
    %v4003 = vunpack.c.l.b16 %v2909
    %v4004 = vunpack.c.h.b16 %v2909
    %v4005 = vunpack.c.l.b16 %v2910
    %v4006 = vunpack.c.h.b16 %v2910
    %v4007 = vunpack.c.l.b16 %v2911
    %v4008 = vunpack.c.h.b16 %v2911
    %v4009 = vunpack.c.l.b16 %v2912
    %v4010 = vunpack.c.l.b16 %v2913
    %v4011 = vunpack.c.h.b16 %v2913
    %v4012 = vunpack.c.l.b16 %v2914
    %v4013 = vunpack.c.h.b16 %v2914
    %v4014 = vunpack.c.l.b16 %v2915
    %v4015 = vunpack.c.h.b16 %v2915
    %v4016 = vunpack.c.l.b16 %v2916
    %v4017 = vunpack.c.l.b16 %v2917
    %v4018 = vunpack.c.h.b16 %v2917
    %v4019 = vunpack.c.l.b16 %v2918
    %v4020 = vunpack.c.h.b16 %v2918
    %v4021 = vunpack.c.l.b16 %v2919
    %v4022 = vunpack.c.h.b16 %v2919
    %v4023 = vunpack.c.l.b16 %v2920
    %v4024 = vunpack.c.l.b16 %v2921
    %v4025 = vunpack.c.h.b16 %v2921
    %v4026 = vunpack.c.l.b16 %v2922
    %v4027 = vunpack.c.h.b16 %v2922
    %v4028 = vunpack.c.l.b16 %v2923
    %v4029 = vunpack.c.h.b16 %v2923
    %v4030 = vunpack.c.l.b16 %v2924
    %v4031 = vunpack.c.l.b16 %v2925
    %v4032 = vunpack.c.h.b16 %v2925
    %v4033 = vunpack.c.l.b16 %v2926
    %v4034 = vunpack.c.h.b16 %v2926
    %v4035 = vunpack.c.l.b16 %v2927
    %v4036 = vunpack.c.h.b16 %v2927
    %v4037 = vunpack.c.l.b16 %v2928
    %v4038 = vunpack.c.l.b16 %v2929
    %v4039 = vunpack.c.h.b16 %v2929
    %v4040 = vunpack.c.l.b16 %v2930
    %v4041 = vunpack.c.h.b16 %v2930
    %v4042 = vunpack.c.l.b16 %v2931
    %v4043 = vunpack.c.h.b16 %v2931
    %v4044 = vunpack.c.l.b16 %v2932
    %v4045 = vunpack.c.l.b16 %v2933
    %v4046 = vunpack.c.h.b16 %v2933
    %v4047 = vunpack.c.l.b16 %v2934
    %v4048 = vunpack.c.h.b16 %v2934
    %v4049 = vunpack.c.l.b16 %v2935
    %v4050 = vunpack.c.h.b16 %v2935
    %v4051 = vunpack.c.l.b16 %v2936
    %v4052 = vunpack.c.l.b16 %v2937
    %v4053 = vunpack.c.h.b16 %v2937
    %v4054 = vunpack.c.l.b16 %v2938
    %v4055 = vunpack.c.h.b16 %v2938
    %v4056 = vunpack.c.l.b16 %v2939
    %v4057 = vunpack.c.h.b16 %v2939
    %v4058 = vunpack.c.l.b16 %v2940
    %v4059 = vunpack.c.l.b16 %v2941
    %v4060 = vunpack.c.h.b16 %v2941
    %v4061 = vunpack.c.l.b16 %v2942
    %v4062 = vunpack.c.h.b16 %v2942
    %v4063 = vunpack.c.l.b16 %v2943
    %v4064 = vunpack.c.h.b16 %v2943
    %v4065 = vunpack.c.l.b16 %v2944
    %v4066 = vunpack.c.l.b16 %v2945
    %v4067 = vunpack.c.h.b16 %v2945
    %v4068 = vunpack.c.l.b16 %v2946
    %v4069 = vunpack.c.h.b16 %v2946
    %v4070 = vunpack.c.l.b16 %v2947
    %v4071 = vunpack.c.h.b16 %v2947
    %v4072 = vunpack.c.l.b16 %v2948
    %v4073 = vunpack.c.l.b16 %v2949
    %v4074 = vunpack.c.h.b16 %v2949
    %v4075 = vunpack.c.l.b16 %v2950
    %v4076 = vunpack.c.h.b16 %v2950
    %v4077 = vunpack.c.l.b16 %v2951
    %v4078 = vunpack.c.h.b16 %v2951
    %v4079 = vunpack.c.l.b16 %v2952
    %v4080 = vunpack.c.l.b16 %v2953
    %v4081 = vunpack.c.h.b16 %v2953
    %v4082 = vunpack.c.l.b16 %v2954
    %v4083 = vunpack.c.h.b16 %v2954
    %v4084 = vunpack.c.l.b16 %v2955
    %v4085 = vunpack.c.h.b16 %v2955
    %v4086 = vunpack.c.l.b16 %v2956
    %v4087 = vunpack.c.l.b16 %v2957
    %v4088 = vunpack.c.h.b16 %v2957
    %v4089 = vunpack.c.l.b16 %v2958
    %v4090 = vunpack.c.h.b16 %v2958
    %v4091 = vunpack.c.l.b16 %v2959
    %v4092 = vunpack.c.h.b16 %v2959
    %v4093 = vunpack.c.l.b16 %v2960
    %v4094 = vunpack.c.l.b16 %v2961
    %v4095 = vunpack.c.h.b16 %v2961
    %v4096 = vunpack.c.l.b16 %v2962
    %v4097 = vunpack.c.h.b16 %v2962
    %v4098 = vunpack.c.l.b16 %v2963
    %v4099 = vunpack.c.h.b16 %v2963
    %v4100 = vunpack.c.l.b16 %v2964
    %v4101 = vunpack.c.l.b16 %v2965
    %v4102 = vunpack.c.h.b16 %v2965
    %v4103 = vunpack.c.l.b16 %v2966
    %v4104 = vunpack.c.h.b16 %v2966
    %v4105 = vunpack.c.l.b16 %v2967
    %v4106 = vunpack.c.h.b16 %v2967
    %v4107 = vunpack.c.l.b16 %v2968
    %v4108 = vunpack.c.l.b16 %v2969
    %v4109 = vunpack.c.h.b16 %v2969
    %v4110 = vunpack.c.l.b16 %v2970
    %v4111 = vunpack.c.h.b16 %v2970
    %v4112 = vunpack.c.l.b16 %v2971
    %v4113 = vunpack.c.h.b16 %v2971
    %v4114 = vunpack.c.l.b16 %v2972
    %v4115 = vunpack.c.l.b16 %v2973
    %v4116 = vunpack.c.h.b16 %v2973
    %v4117 = vunpack.c.l.b16 %v2974
    %v4118 = vunpack.c.h.b16 %v2974
    %v4119 = vunpack.c.l.b16 %v2975
    %v4120 = vunpack.c.h.b16 %v2975
    %v4121 = vunpack.c.l.b16 %v2976
    %v4122 = vunpack.c.l.b16 %v2977
    %v4123 = vunpack.c.h.b16 %v2977
    %v4124 = vunpack.c.l.b16 %v2978
    %v4125 = vunpack.c.h.b16 %v2978
    %v4126 = vunpack.c.l.b16 %v2979
    %v4127 = vunpack.c.h.b16 %v2979
    %v4128 = vunpack.c.l.b16 %v2980
    %v4129 = vunpack.c.l.b16 %v2981
    %v4130 = vunpack.c.h.b16 %v2981
    %v4131 = vunpack.c.l.b16 %v2982
    %v4132 = vunpack.c.h.b16 %v2982
    %v4133 = vunpack.c.l.b16 %v2983
    %v4134 = vunpack.c.h.b16 %v2983
    %v4135 = vunpack.c.l.b16 %v2984
    %v4136 = vunpack.c.l.b16 %v2985
    %v4137 = vunpack.c.h.b16 %v2985
    %v4138 = vunpack.c.l.b16 %v2986
    %v4139 = vunpack.c.h.b16 %v2986
    %v4140 = vunpack.c.l.b16 %v2987
    %v4141 = vunpack.c.h.b16 %v2987
    %v4142 = vunpack.c.l.b16 %v2988
    %v4143 = vunpack.c.l.b16 %v2989
    %v4144 = vunpack.c.h.b16 %v2989
    %v4145 = vunpack.c.l.b16 %v2990
    %v4146 = vunpack.c.h.b16 %v2990
    %v4147 = vunpack.c.l.b16 %v2991
    %v4148 = vunpack.c.h.b16 %v2991
    %v4149 = vunpack.c.l.b16 %v2992
    %v4150 = vunpack.c.l.b16 %v2993
    %v4151 = vunpack.c.h.b16 %v2993
    %v4152 = vunpack.c.l.b16 %v2994
    %v4153 = vunpack.c.h.b16 %v2994
    %v4154 = vunpack.c.l.b16 %v2995
    %v4155 = vunpack.c.h.b16 %v2995
    %v4156 = vunpack.c.l.b16 %v2996
    %v4157 = vunpack.c.l.b16 %v2997
    %v4158 = vunpack.c.h.b16 %v2997
    %v4159 = vunpack.c.l.b16 %v2998
    %v4160 = vunpack.c.h.b16 %v2998
    %v4161 = vunpack.c.l.b16 %v2999
    %v4162 = vunpack.c.h.b16 %v2999
    %v4163 = vunpack.c.l.b16 %v3000
    %v4164 = vunpack.c.l.b16 %v3001
    %v4165 = vunpack.c.h.b16 %v3001
    %v4166 = vunpack.c.l.b16 %v3002
    %v4167 = vunpack.c.h.b16 %v3002
    %v4168 = vunpack.c.l.b16 %v3003
    %v4169 = vunpack.c.h.b16 %v3003
    %v4170 = vunpack.c.l.b16 %v3004
    %v4171 = vunpack.c.l.b16 %v3005
    %v4172 = vunpack.c.h.b16 %v3005
    %v4173 = vunpack.c.l.b16 %v3006
    %v4174 = vunpack.c.h.b16 %v3006
    %v4175 = vunpack.c.l.b16 %v3007
    %v4176 = vunpack.c.h.b16 %v3007
    %v4177 = vunpack.c.l.b16 %v3008
    %v4178 = vunpack.c.l.b16 %v3009
    %v4179 = vunpack.c.h.b16 %v3009
    %v4180 = vunpack.c.l.b16 %v3010
    %v4181 = vunpack.c.h.b16 %v3010
    %v4182 = vunpack.c.l.b16 %v3011
    %v4183 = vunpack.c.h.b16 %v3011
    %v4184 = vunpack.c.l.b16 %v3012
    %v4185 = vunpack.c.l.b16 %v3013
    %v4186 = vunpack.c.h.b16 %v3013
    %v4187 = vunpack.c.l.b16 %v3014
    %v4188 = vunpack.c.h.b16 %v3014
    %v4189 = vunpack.c.l.b16 %v3015
    %v4190 = vunpack.c.h.b16 %v3015
    %v4191 = vunpack.c.l.b16 %v3016
    %v4192 = vunpack.c.l.b16 %v3017
    %v4193 = vunpack.c.h.b16 %v3017
    %v4194 = vunpack.c.l.b16 %v3018
    %v4195 = vunpack.c.h.b16 %v3018
    %v4196 = vunpack.c.l.b16 %v3019
    %v4197 = vunpack.c.h.b16 %v3019
    %v4198 = vunpack.c.l.b16 %v3020
    %v4199 = vunpack.c.l.b16 %v3021
    %v4200 = vunpack.c.h.b16 %v3021
    %v4201 = vunpack.c.l.b16 %v3022
    %v4202 = vunpack.c.h.b16 %v3022
    %v4203 = vunpack.c.l.b16 %v3023
    %v4204 = vunpack.c.h.b16 %v3023
    %v4205 = vunpack.c.l.b16 %v3024
    %v4206 = vunpack.c.l.b16 %v3025
    %v4207 = vunpack.c.h.b16 %v3025
    %v4208 = vunpack.c.l.b16 %v3026
    %v4209 = vunpack.c.h.b16 %v3026
    %v4210 = vunpack.c.l.b16 %v3027
    %v4211 = vunpack.c.h.b16 %v3027
    %v4212 = vunpack.c.l.b16 %v3028
    %v4213 = vunpack.c.l.b16 %v3029
    %v4214 = vunpack.c.h.b16 %v3029
    %v4215 = vunpack.c.l.b16 %v3030
    %v4216 = vunpack.c.h.b16 %v3030
    %v4217 = vunpack.c.l.b16 %v3031
    %v4218 = vunpack.c.h.b16 %v3031
    %v4219 = vunpack.c.l.b16 %v3032
    %v4220 = vunpack.c.l.b16 %v3033
    %v4221 = vunpack.c.h.b16 %v3033
    %v4222 = vunpack.c.l.b16 %v3034
    %v4223 = vunpack.c.h.b16 %v3034
    %v4224 = vunpack.c.l.b16 %v3035
    %v4225 = vunpack.c.h.b16 %v3035
    %v4226 = vunpack.c.l.b16 %v3036
    %v4227 = vunpack.c.l.b16 %v3037
    %v4228 = vunpack.c.h.b16 %v3037
    %v4229 = vunpack.c.l.b16 %v3038
    %v4230 = vunpack.c.h.b16 %v3038
    %v4231 = vunpack.c.l.b16 %v3039
    %v4232 = vunpack.c.h.b16 %v3039
    %v4233 = vunpack.c.l.b16 %v3040
    %v4234 = vunpack.c.l.b16 %v3041
    %v4235 = vunpack.c.h.b16 %v3041
    %v4236 = vunpack.c.l.b16 %v3042
    %v4237 = vunpack.c.h.b16 %v3042
    %v4238 = vunpack.c.l.b16 %v3043
    %v4239 = vunpack.c.h.b16 %v3043
    %v4240 = vunpack.c.l.b16 %v3044
    %v4241 = vunpack.c.l.b16 %v3045
    %v4242 = vunpack.c.h.b16 %v3045
    %v4243 = vunpack.c.l.b16 %v3046
    %v4244 = vunpack.c.h.b16 %v3046
    %v4245 = vunpack.c.l.b16 %v3047
    %v4246 = vunpack.c.h.b16 %v3047
    %v4247 = vunpack.c.l.b16 %v3048
    %v4248 = vunpack.c.l.b16 %v3049
    %v4249 = vunpack.c.h.b16 %v3049
    %v4250 = vunpack.c.l.b16 %v3050
    %v4251 = vunpack.c.h.b16 %v3050
    %v4252 = vunpack.c.l.b16 %v3051
    %v4253 = vunpack.c.h.b16 %v3051
    %v4254 = vunpack.c.l.b16 %v3052
    %v4255 = vunpack.c.l.b16 %v3053
    %v4256 = vunpack.c.h.b16 %v3053
    %v4257 = vunpack.c.l.b16 %v3054
    %v4258 = vunpack.c.h.b16 %v3054
    %v4259 = vunpack.c.l.b16 %v3055
    %v4260 = vunpack.c.h.b16 %v3055
    %v4261 = vunpack.c.l.b16 %v3056
    %v4262 = vunpack.c.l.b16 %v3057
    %v4263 = vunpack.c.h.b16 %v3057
    %v4264 = vunpack.c.l.b16 %v3058
    %v4265 = vunpack.c.h.b16 %v3058
    %v4266 = vunpack.c.l.b16 %v3059
    %v4267 = vunpack.c.h.b16 %v3059
    %v4268 = vunpack.c.l.b16 %v3060
    %v4269 = vunpack.c.l.b16 %v3061
    %v4270 = vunpack.c.h.b16 %v3061
    %v4271 = vunpack.c.l.b16 %v3062
    %v4272 = vunpack.c.h.b16 %v3062
    %v4273 = vunpack.c.l.b16 %v3063
    %v4274 = vunpack.c.h.b16 %v3063
    %v4275 = vunpack.c.l.b16 %v3064
    %v4276 = vunpack.c.l.b16 %v3065
    %v4277 = vunpack.c.h.b16 %v3065
    %v4278 = vunpack.c.l.b16 %v3066
    %v4279 = vunpack.c.h.b16 %v3066
    %v4280 = vunpack.c.l.b16 %v3067
    %v4281 = vunpack.c.h.b16 %v3067
    %v4282 = vunpack.c.l.b16 %v3068
    %v4283 = vunpack.c.l.b16 %v3069
    %v4284 = vunpack.c.h.b16 %v3069
    %v4285 = vunpack.c.l.b16 %v3070
    %v4286 = vunpack.c.h.b16 %v3070
    %v4287 = vunpack.c.l.b16 %v3071
    %v4288 = vunpack.c.h.b16 %v3071
    %v4289 = vunpack.c.l.b16 %v3072
    %v4290 = vunpack.c.l.b16 %v3073
    %v4291 = vunpack.c.h.b16 %v3073
    %v4292 = vunpack.c.l.b16 %v3074
    %v4293 = vunpack.c.h.b16 %v3074
    %v4294 = vunpack.c.l.b16 %v3075
    %v4295 = vunpack.c.h.b16 %v3075
    %v4296 = vunpack.c.l.b16 %v3076
    %v4297 = vunpack.c.l.b16 %v3077
    %v4298 = vunpack.c.h.b16 %v3077
    %v4299 = vunpack.c.l.b16 %v3078
    %v4300 = vunpack.c.h.b16 %v3078
    %v4301 = vunpack.c.l.b16 %v3079
    %v4302 = vunpack.c.h.b16 %v3079
    %v4303 = vunpack.c.l.b16 %v3080
    %v4304 = vunpack.c.l.b16 %v3081
    %v4305 = vunpack.c.h.b16 %v3081
    %v4306 = vunpack.c.l.b16 %v3082
    %v4307 = vunpack.c.h.b16 %v3082
    %v4308 = vunpack.c.l.b16 %v3083
    %v4309 = vunpack.c.h.b16 %v3083
    %v4310 = vunpack.c.l.b16 %v3084
    %v4311 = vunpack.c.l.b16 %v3085
    %v4312 = vunpack.c.h.b16 %v3085
    %v4313 = vunpack.c.l.b16 %v3086
    %v4314 = vunpack.c.h.b16 %v3086
    %v4315 = vunpack.c.l.b16 %v3087
    %v4316 = vunpack.c.h.b16 %v3087
    %v4317 = vunpack.c.l.b16 %v3088
    %v4318 = vunpack.c.l.b16 %v3089
    %v4319 = vunpack.c.h.b16 %v3089
    %v4320 = vunpack.c.l.b16 %v3090
    %v4321 = vunpack.c.h.b16 %v3090
    %v4322 = vunpack.c.l.b16 %v3091
    %v4323 = vunpack.c.h.b16 %v3091
    %v4324 = vunpack.c.l.b16 %v3092
    %v4325 = vunpack.c.l.b16 %v3093
    %v4326 = vunpack.c.h.b16 %v3093
    %v4327 = vunpack.c.l.b16 %v3094
    %v4328 = vunpack.c.h.b16 %v3094
    %v4329 = vunpack.c.l.b16 %v3095
    %v4330 = vunpack.c.h.b16 %v3095
    %v4331 = vunpack.c.l.b16 %v3096
    %v4332 = vunpack.c.l.b16 %v3097
    %v4333 = vunpack.c.h.b16 %v3097
    %v4334 = vunpack.c.l.b16 %v3098
    %v4335 = vunpack.c.h.b16 %v3098
    %v4336 = vunpack.c.l.b16 %v3099
    %v4337 = vunpack.c.h.b16 %v3099
    %v4338 = vunpack.c.l.b16 %v3100
    %v4339 = vunpack.c.l.b16 %v3101
    %v4340 = vunpack.c.h.b16 %v3101
    %v4341 = vunpack.c.l.b16 %v3102
    %v4342 = vunpack.c.h.b16 %v3102
    %v4343 = vunpack.c.l.b16 %v3103
    %v4344 = vunpack.c.h.b16 %v3103
    %v4345 = vunpack.c.l.b16 %v3104
    %v4346 = vunpack.c.l.b16 %v3105
    %v4347 = vunpack.c.h.b16 %v3105
    %v4348 = vunpack.c.l.b16 %v3106
    %v4349 = vunpack.c.h.b16 %v3106
    %v4350 = vunpack.c.l.b16 %v3107
    %v4351 = vunpack.c.h.b16 %v3107
    %v4352 = vunpack.c.l.b16 %v3108
    %v4353 = vunpack.c.l.b16 %v3109
    %v4354 = vunpack.c.h.b16 %v3109
    %v4355 = vunpack.c.l.b16 %v3110
    %v4356 = vunpack.c.h.b16 %v3110
    %v4357 = vunpack.c.l.b16 %v3111
    %v4358 = vunpack.c.h.b16 %v3111
    %v4359 = vunpack.c.l.b16 %v3112
    %v4360 = vunpack.c.l.b16 %v3113
    %v4361 = vunpack.c.h.b16 %v3113
    %v4362 = vunpack.c.l.b16 %v3114
    %v4363 = vunpack.c.h.b16 %v3114
    %v4364 = vunpack.c.l.b16 %v3115
    %v4365 = vunpack.c.h.b16 %v3115
    %v4366 = vunpack.c.l.b16 %v3116
    %v4367 = vunpack.c.l.b16 %v3117
    %v4368 = vunpack.c.h.b16 %v3117
    %v4369 = vunpack.c.l.b16 %v3118
    %v4370 = vunpack.c.h.b16 %v3118
    %v4371 = vunpack.c.l.b16 %v3119
    %v4372 = vunpack.c.h.b16 %v3119
    %v4373 = vunpack.c.l.b16 %v3120
    %v4374 = vunpack.c.l.b16 %v3121
    %v4375 = vunpack.c.h.b16 %v3121
    %v4376 = vunpack.c.l.b16 %v3122
    %v4377 = vunpack.c.h.b16 %v3122
    %v4378 = vunpack.c.l.b16 %v3123
    %v4379 = vunpack.c.h.b16 %v3123
    %v4380 = vunpack.c.l.b16 %v3124
    %v4381 = vunpack.c.l.b16 %v3125
    %v4382 = vunpack.c.h.b16 %v3125
    %v4383 = vunpack.c.l.b16 %v3126
    %v4384 = vunpack.c.h.b16 %v3126
    %v4385 = vunpack.c.l.b16 %v3127
    %v4386 = vunpack.c.h.b16 %v3127
    %v4387 = vunpack.c.l.b16 %v3128
    %v4388 = vunpack.c.l.b16 %v3129
    %v4389 = vunpack.c.h.b16 %v3129
    %v4390 = vunpack.c.l.b16 %v3130
    %v4391 = vunpack.c.h.b16 %v3130
    %v4392 = vunpack.c.l.b16 %v3131
    %v4393 = vunpack.c.h.b16 %v3131
    %v4394 = vunpack.c.l.b16 %v3132
    %v4395 = vunpack.c.l.b16 %v3133
    %v4396 = vunpack.c.h.b16 %v3133
    %v4397 = vunpack.c.l.b16 %v3134
    %v4398 = vunpack.c.h.b16 %v3134
    %v4399 = vunpack.c.l.b16 %v3135
    %v4400 = vunpack.c.h.b16 %v3135
    %v4401 = vunpack.c.l.b16 %v3136
    %v4402 = vunpack.c.l.b16 %v3137
    %v4403 = vunpack.c.h.b16 %v3137
    %v4404 = vunpack.c.l.b16 %v3138
    %v4405 = vunpack.c.h.b16 %v3138
    %v4406 = vunpack.c.l.b16 %v3139
    %v4407 = vunpack.c.h.b16 %v3139
    %v4408 = vunpack.c.l.b16 %v3140
    %v4409 = vunpack.c.l.b16 %v3141
    %v4410 = vunpack.c.h.b16 %v3141
    %v4411 = vunpack.c.l.b16 %v3142
    %v4412 = vunpack.c.h.b16 %v3142
    %v4413 = vunpack.c.l.b16 %v3143
    %v4414 = vunpack.c.h.b16 %v3143
    %v4415 = vunpack.c.l.b16 %v3144
    %v4416 = vunpack.c.l.b16 %v3145
    %v4417 = vunpack.c.h.b16 %v3145
    %v4418 = vunpack.c.l.b16 %v3146
    %v4419 = vunpack.c.h.b16 %v3146
    %v4420 = vunpack.c.l.b16 %v3147
    %v4421 = vunpack.c.h.b16 %v3147
    %v4422 = vunpack.c.l.b16 %v3148
    %v4423 = vunpack.c.l.b16 %v3149
    %v4424 = vunpack.c.h.b16 %v3149
    %v4425 = vunpack.c.l.b16 %v3150
    %v4426 = vunpack.c.h.b16 %v3150
    %v4427 = vunpack.c.l.b16 %v3151
    %v4428 = vunpack.c.h.b16 %v3151
    %v4429 = vunpack.c.l.b16 %v3152
    %v4430 = vunpack.c.l.b16 %v3153
    %v4431 = vunpack.c.h.b16 %v3153
    %v4432 = vunpack.c.l.b16 %v3154
    %v4433 = vunpack.c.h.b16 %v3154
    %v4434 = vunpack.c.l.b16 %v3155
    %v4435 = vunpack.c.h.b16 %v3155
    %v4436 = vunpack.c.l.b16 %v3156
    %v4437 = vunpack.c.l.b16 %v3157
    %v4438 = vunpack.c.h.b16 %v3157
    %v4439 = vunpack.c.l.b16 %v3158
    %v4440 = vunpack.c.h.b16 %v3158
    %v4441 = vunpack.c.l.b16 %v3159
    %v4442 = vunpack.c.h.b16 %v3159
    %v4443 = vunpack.c.l.b16 %v3160
    %v4444 = vunpack.c.l.b16 %v3161
    %v4445 = vunpack.c.h.b16 %v3161
    %v4446 = vunpack.c.l.b16 %v3162
    %v4447 = vunpack.c.h.b16 %v3162
    %v4448 = vunpack.c.l.b16 %v3163
    %v4449 = vunpack.c.h.b16 %v3163
    %v4450 = vunpack.c.l.b16 %v3164
    %v4451 = vunpack.c.l.b16 %v3165
    %v4452 = vunpack.c.h.b16 %v3165
    %v4453 = vunpack.c.l.b16 %v3166
    %v4454 = vunpack.c.h.b16 %v3166
    %v4455 = vunpack.c.l.b16 %v3167
    %v4456 = vunpack.c.h.b16 %v3167
    %v4457 = vunpack.c.l.b16 %v3168
    %v4458 = vunpack.c.l.b16 %v3169
    %v4459 = vunpack.c.h.b16 %v3169
    %v4460 = vunpack.c.l.b16 %v3170
    %v4461 = vunpack.c.h.b16 %v3170
    %v4462 = vunpack.c.l.b16 %v3171
    %v4463 = vunpack.c.h.b16 %v3171
    %v4464 = vunpack.c.l.b16 %v3172
    %v4465 = vunpack.c.l.b16 %v3173
    %v4466 = vunpack.c.h.b16 %v3173
    %v4467 = vunpack.c.l.b16 %v3174
    %v4468 = vunpack.c.h.b16 %v3174
    %v4469 = vunpack.c.l.b16 %v3175
    %v4470 = vunpack.c.h.b16 %v3175
    %v4471 = vunpack.c.l.b16 %v3176
    %v4472 = vunpack.c.l.b16 %v3177
    %v4473 = vunpack.c.h.b16 %v3177
    %v4474 = vunpack.c.l.b16 %v3178
    %v4475 = vunpack.c.h.b16 %v3178
    %v4476 = vunpack.c.l.b16 %v3179
    %v4477 = vunpack.c.h.b16 %v3179
    %v4478 = vunpack.c.l.b16 %v3180
    %v4479 = vunpack.c.l.b16 %v3181
    %v4480 = vunpack.c.h.b16 %v3181
    %v4481 = vunpack.c.l.b16 %v3182
    %v4482 = vunpack.c.h.b16 %v3182
    %v4483 = vunpack.c.l.b16 %v3183
    %v4484 = vunpack.c.h.b16 %v3183
    %v4485 = vunpack.c.l.b16 %v3184
    %v4486 = vunpack.c.l.b16 %v3185
    %v4487 = vunpack.c.h.b16 %v3185
    %v4488 = vunpack.c.l.b16 %v3186
    %v4489 = vunpack.c.h.b16 %v3186
    %v4490 = vunpack.c.l.b16 %v3187
    %v4491 = vunpack.c.h.b16 %v3187
    %v4492 = vunpack.c.l.b16 %v3188
    %v4493 = vunpack.c.l.b16 %v3189
    %v4494 = vunpack.c.h.b16 %v3189
    %v4495 = vunpack.c.l.b16 %v3190
    %v4496 = vunpack.c.h.b16 %v3190
    %v4497 = vunpack.c.l.b16 %v3191
    %v4498 = vunpack.c.h.b16 %v3191
    %v4499 = vunpack.c.l.b16 %v3192
    %v4500 = vunpack.c.l.b16 %v3193
    %v4501 = vunpack.c.h.b16 %v3193
    %v4502 = vunpack.c.l.b16 %v3194
    %v4503 = vunpack.c.h.b16 %v3194
    %v4504 = vunpack.c.l.b16 %v3195
    %v4505 = vunpack.c.h.b16 %v3195
    %v4506 = vunpack.c.l.b16 %v3196
    %v4507 = vunpack.c.l.b16 %v3197
    %v4508 = vunpack.c.h.b16 %v3197
    %v4509 = vunpack.c.l.b16 %v3198
    %v4510 = vunpack.c.h.b16 %v3198
    %v4511 = vunpack.c.l.b16 %v3199
    %v4512 = vunpack.c.h.b16 %v3199
    %v4513 = vunpack.c.l.b16 %v3200
    %v4514 = vunpack.c.l.b16 %v3201
    %v4515 = vunpack.c.h.b16 %v3201
    %v4516 = vunpack.c.l.b16 %v3202
    %v4517 = vunpack.c.h.b16 %v3202
    %v4518 = vunpack.c.l.b16 %v3203
    %v4519 = vunpack.c.h.b16 %v3203
    %v4520 = vunpack.c.l.b16 %v3204
    %v4521 = vunpack.c.l.b16 %v3205
    %v4522 = vunpack.c.h.b16 %v3205
    %v4523 = vunpack.c.l.b16 %v3206
    %v4524 = vunpack.c.h.b16 %v3206
    %v4525 = vunpack.c.l.b16 %v3207
    %v4526 = vunpack.c.h.b16 %v3207
    %v4527 = vunpack.c.l.b16 %v3208
    %v4528 = vunpack.c.l.b16 %v3209
    %v4529 = vunpack.c.h.b16 %v3209
    %v4530 = vunpack.c.l.b16 %v3210
    %v4531 = vunpack.c.h.b16 %v3210
    %v4532 = vunpack.c.l.b16 %v3211
    %v4533 = vunpack.c.h.b16 %v3211
    %v4534 = vunpack.c.l.b16 %v3212
    %v4535 = vunpack.c.l.b16 %v3213
    %v4536 = vunpack.c.h.b16 %v3213
    %v4537 = vunpack.c.l.b16 %v3214
    %v4538 = vunpack.c.h.b16 %v3214
    %v4539 = vunpack.c.l.b16 %v3215
    %v4540 = vunpack.c.h.b16 %v3215
    %v4541 = vunpack.c.l.b16 %v3216
    %v4542 = vunpack.c.l.b16 %v3217
    %v4543 = vunpack.c.h.b16 %v3217
    %v4544 = vunpack.c.l.b16 %v3218
    %v4545 = vunpack.c.h.b16 %v3218
    %v4546 = vunpack.c.l.b16 %v3219
    %v4547 = vunpack.c.h.b16 %v3219
    %v4548 = vunpack.c.l.b16 %v3220
    %v4549 = vunpack.c.l.b16 %v3221
    %v4550 = vunpack.c.h.b16 %v3221
    %v4551 = vunpack.c.l.b16 %v3222
    %v4552 = vunpack.c.h.b16 %v3222
    %v4553 = vunpack.c.l.b16 %v3223
    %v4554 = vunpack.c.h.b16 %v3223
    %v4555 = vunpack.c.l.b16 %v3224
    %v4556 = vunpack.c.l.b16 %v3225
    %v4557 = vunpack.c.h.b16 %v3225
    %v4558 = vunpack.c.l.b16 %v3226
    %v4559 = vunpack.c.h.b16 %v3226
    %v4560 = vunpack.c.l.b16 %v3227
    %v4561 = vunpack.c.h.b16 %v3227
    %v4562 = vunpack.c.l.b16 %v3228
    %v4563 = vunpack.c.l.b16 %v3229
    %v4564 = vunpack.c.h.b16 %v3229
    %v4565 = vunpack.c.l.b16 %v3230
    %v4566 = vunpack.c.h.b16 %v3230
    %v4567 = vunpack.c.l.b16 %v3231
    %v4568 = vunpack.c.h.b16 %v3231
    %v4569 = vunpack.c.l.b16 %v3232
    %v4570 = vunpack.c.l.b16 %v3233
    %v4571 = vunpack.c.h.b16 %v3233
    %v4572 = vunpack.c.l.b16 %v3234
    %v4573 = vunpack.c.h.b16 %v3234
    %v4574 = vunpack.c.l.b16 %v3235
    %v4575 = vunpack.c.h.b16 %v3235
    %v4576 = vunpack.c.l.b16 %v3236
    %v4577 = vunpack.c.l.b16 %v3237
    %v4578 = vunpack.c.h.b16 %v3237
    %v4579 = vunpack.c.l.b16 %v3238
    %v4580 = vunpack.c.h.b16 %v3238
    %v4581 = vunpack.c.l.b16 %v3239
    %v4582 = vunpack.c.h.b16 %v3239
    %v4583 = vunpack.c.l.b16 %v3240
    %v4584 = vunpack.c.l.b16 %v3241
    %v4585 = vunpack.c.h.b16 %v3241
    %v4586 = vunpack.c.l.b16 %v3242
    %v4587 = vunpack.c.h.b16 %v3242
    %v4588 = vunpack.c.l.b16 %v3243
    %v4589 = vunpack.c.h.b16 %v3243
    %v4590 = vunpack.c.l.b16 %v3244
    %v4591 = vunpack.c.l.b16 %v3245
    %v4592 = vunpack.c.h.b16 %v3245
    %v4593 = vunpack.c.l.b16 %v3246
    %v4594 = vunpack.c.h.b16 %v3246
    %v4595 = vunpack.c.l.b16 %v3247
    %v4596 = vunpack.c.h.b16 %v3247
    %v4597 = vunpack.c.l.b16 %v3248
    %v4598 = vunpack.c.l.b16 %v3249
    %v4599 = vunpack.c.h.b16 %v3249
    %v4600 = vunpack.c.l.b16 %v3250
    %v4601 = vunpack.c.h.b16 %v3250
    %v4602 = vunpack.c.l.b16 %v3251
    %v4603 = vunpack.c.h.b16 %v3251
    %v4604 = vunpack.c.l.b16 %v3252
    %v4605 = vunpack.c.l.b16 %v3253
    %v4606 = vunpack.c.h.b16 %v3253
    %v4607 = vunpack.c.l.b16 %v3254
    %v4608 = vunpack.c.h.b16 %v3254
    %v4609 = vunpack.c.l.b16 %v3255
    %v4610 = vunpack.c.h.b16 %v3255
    %v4611 = vunpack.c.l.b16 %v3256
    %v4612 = vunpack.c.l.b16 %v3257
    %v4613 = vunpack.c.h.b16 %v3257
    %v4614 = vunpack.c.l.b16 %v3258
    %v4615 = vunpack.c.h.b16 %v3258
    %v4616 = vunpack.c.l.b16 %v3259
    %v4617 = vunpack.c.h.b16 %v3259
    %v4618 = vunpack.c.l.b16 %v3260
    %v4619 = vunpack.c.l.b16 %v3261
    %v4620 = vunpack.c.h.b16 %v3261
    %v4621 = vunpack.c.l.b16 %v3262
    %v4622 = vunpack.c.h.b16 %v3262
    %v4623 = vunpack.c.l.b16 %v3263
    %v4624 = vunpack.c.h.b16 %v3263
    %v4625 = vunpack.c.l.b16 %v3264
    %v4626 = vunpack.c.l.b16 %v3265
    %v4627 = vunpack.c.h.b16 %v3265
    %v4628 = vunpack.c.l.b16 %v3266
    %v4629 = vunpack.c.h.b16 %v3266
    %v4630 = vunpack.c.l.b16 %v3267
    %v4631 = vunpack.c.h.b16 %v3267
    %v4632 = vunpack.c.l.b16 %v3268
    %v4633 = vunpack.c.l.b16 %v3269
    %v4634 = vunpack.c.h.b16 %v3269
    %v4635 = vunpack.c.l.b16 %v3270
    %v4636 = vunpack.c.h.b16 %v3270
    %v4637 = vunpack.c.l.b16 %v3271
    %v4638 = vunpack.c.h.b16 %v3271
    %v4639 = vunpack.c.l.b16 %v3272
    %v4640 = vunpack.c.l.b16 %v3273
    %v4641 = vunpack.c.h.b16 %v3273
    %v4642 = vunpack.c.l.b16 %v3274
    %v4643 = vunpack.c.h.b16 %v3274
    %v4644 = vunpack.c.l.b16 %v3275
    %v4645 = vunpack.c.h.b16 %v3275
    %v4646 = vunpack.c.l.b16 %v3276
    %v4647 = vunpack.c.l.b16 %v3277
    %v4648 = vunpack.c.h.b16 %v3277
    %v4649 = vunpack.c.l.b16 %v3278
    %v4650 = vunpack.c.h.b16 %v3278
    %v4651 = vunpack.c.l.b16 %v3279
    %v4652 = vunpack.c.h.b16 %v3279
    %v4653 = vunpack.c.l.b16 %v3280
    %v4654 = vunpack.c.l.b16 %v3281
    %v4655 = vunpack.c.h.b16 %v3281
    %v4656 = vunpack.c.l.b16 %v3282
    %v4657 = vunpack.c.h.b16 %v3282
    %v4658 = vunpack.c.l.b16 %v3283
    %v4659 = vunpack.c.h.b16 %v3283
    %v4660 = vunpack.c.l.b16 %v3284
    %v4661 = vunpack.c.l.b16 %v3285
    %v4662 = vunpack.c.h.b16 %v3285
    %v4663 = vunpack.c.l.b16 %v3286
    %v4664 = vunpack.c.h.b16 %v3286
    %v4665 = vunpack.c.l.b16 %v3287
    %v4666 = vunpack.c.h.b16 %v3287
    %v4667 = vunpack.c.l.b16 %v3288
    %v4668 = vunpack.c.l.b16 %v3289
    %v4669 = vunpack.c.h.b16 %v3289
    %v4670 = vunpack.c.l.b16 %v3290
    %v4671 = vunpack.c.h.b16 %v3290
    %v4672 = vunpack.c.l.b16 %v3291
    %v4673 = vunpack.c.h.b16 %v3291
    %v4674 = vunpack.c.l.b16 %v3292
    %v4675 = vunpack.c.l.b16 %v3293
    %v4676 = vunpack.c.h.b16 %v3293
    %v4677 = vunpack.c.l.b16 %v3294
    %v4678 = vunpack.c.h.b16 %v3294
    %v4679 = vunpack.c.l.b16 %v3295
    %v4680 = vunpack.c.h.b16 %v3295
    %v4681 = vunpack.c.l.b16 %v3296
    %v4682 = vunpack.c.l.b16 %v3297
    %v4683 = vunpack.c.h.b16 %v3297
    %v4684 = vunpack.c.l.b16 %v3298
    %v4685 = vunpack.c.h.b16 %v3298
    %v4686 = vunpack.c.l.b16 %v3299
    %v4687 = vunpack.c.h.b16 %v3299
    %v4688 = vunpack.c.l.b16 %v3300
    %v4689 = vunpack.c.l.b16 %v3301
    %v4690 = vunpack.c.h.b16 %v3301
    %v4691 = vunpack.c.l.b16 %v3302
    %v4692 = vunpack.c.h.b16 %v3302
    %v4693 = vunpack.c.l.b16 %v3303
    %v4694 = vunpack.c.h.b16 %v3303
    %v4695 = vunpack.c.l.b16 %v3304
    %v4696 = vunpack.c.l.b16 %v3305
    %v4697 = vunpack.c.h.b16 %v3305
    %v4698 = vunpack.c.l.b16 %v3306
    %v4699 = vunpack.c.h.b16 %v3306
    %v4700 = vunpack.c.l.b16 %v3307
    %v4701 = vunpack.c.h.b16 %v3307
    %v4702 = vunpack.c.l.b16 %v3308
    %v4703 = vunpack.c.l.b16 %v3309
    %v4704 = vunpack.c.h.b16 %v3309
    %v4705 = vunpack.c.l.b16 %v3310
    %v4706 = vunpack.c.h.b16 %v3310
    %v4707 = vunpack.c.l.b16 %v3311
    %v4708 = vunpack.c.h.b16 %v3311
    %v4709 = vunpack.c.l.b16 %v3312
    %v4710 = vunpack.c.l.b16 %v3313
    %v4711 = vunpack.c.h.b16 %v3313
    %v4712 = vunpack.c.l.b16 %v3314
    %v4713 = vunpack.c.h.b16 %v3314
    %v4714 = vunpack.c.l.b16 %v3315
    %v4715 = vunpack.c.h.b16 %v3315
    %v4716 = vunpack.c.l.b16 %v3316
    %v4717 = vunpack.c.l.b16 %v3317
    %v4718 = vunpack.c.h.b16 %v3317
    %v4719 = vunpack.c.l.b16 %v3318
    %v4720 = vunpack.c.h.b16 %v3318
    %v4721 = vunpack.c.l.b16 %v3319
    %v4722 = vunpack.c.h.b16 %v3319
    %v4723 = vunpack.c.l.b16 %v3320
    %v4724 = vunpack.c.l.b16 %v3321
    %v4725 = vunpack.c.h.b16 %v3321
    %v4726 = vunpack.c.l.b16 %v3322
    %v4727 = vunpack.c.h.b16 %v3322
    %v4728 = vunpack.c.l.b16 %v3323
    %v4729 = vunpack.c.h.b16 %v3323
    %v4730 = vunpack.c.l.b16 %v3324
    %v4731 = vunpack.c.l.b16 %v3325
    %v4732 = vunpack.c.h.b16 %v3325
    %v4733 = vunpack.c.l.b16 %v3326
    %v4734 = vunpack.c.h.b16 %v3326
    %v4735 = vunpack.c.l.b16 %v3327
    %v4736 = vunpack.c.h.b16 %v3327
    %v4737 = vunpack.c.l.b16 %v3328
    %v4738 = vunpack.c.l.b16 %v3329
    %v4739 = vunpack.c.h.b16 %v3329
    %v4740 = vunpack.c.l.b16 %v3330
    %v4741 = vunpack.c.h.b16 %v3330
    %v4742 = vunpack.c.l.b16 %v3331
    %v4743 = vunpack.c.h.b16 %v3331
    %v4744 = vunpack.c.l.b16 %v3332
    %v4745 = vunpack.c.l.b16 %v3333
    %v4746 = vunpack.c.h.b16 %v3333
    %v4747 = vunpack.c.l.b16 %v3334
    %v4748 = vunpack.c.h.b16 %v3334
    %v4749 = vunpack.c.l.b16 %v3335
    %v4750 = vunpack.c.h.b16 %v3335
    %v4751 = vunpack.c.l.b16 %v3336
    %v4752 = vunpack.c.l.b16 %v3337
    %v4753 = vunpack.c.h.b16 %v3337
    %v4754 = vunpack.c.l.b16 %v3338
    %v4755 = vunpack.c.h.b16 %v3338
    %v4756 = vunpack.c.l.b16 %v3339
    %v4757 = vunpack.c.h.b16 %v3339
    %v4758 = vunpack.c.l.b16 %v3340
    %v4759 = vunpack.c.l.b16 %v3341
    %v4760 = vunpack.c.h.b16 %v3341
    %v4761 = vunpack.c.l.b16 %v3342
    %v4762 = vunpack.c.h.b16 %v3342
    %v4763 = vunpack.c.l.b16 %v3343
    %v4764 = vunpack.c.h.b16 %v3343
    %v4765 = vunpack.c.l.b16 %v3344
    %v4766 = vunpack.c.l.b16 %v3345
    %v4767 = vunpack.c.h.b16 %v3345
    %v4768 = vunpack.c.l.b16 %v3346
    %v4769 = vunpack.c.h.b16 %v3346
    %v4770 = vunpack.c.l.b16 %v3347
    %v4771 = vunpack.c.h.b16 %v3347
    %v4772 = vunpack.c.l.b16 %v3348
    %v4773 = vpack.c.b16 %v3884, %v3877
    %v4774 = vpack.c.b16 %v3885, %v3878
    %v4775 = vpack.c.b16 %v3886, %v3879
    %v4776 = vpack.c.b16 %v3887, %v3880
    %v4777 = vpack.c.b16 %v3888, %v3881
    %v4778 = vpack.c.b16 %v3889, %v3882
    %v4779 = vpack.c.b16 %v3890, %v3883
    %v4780 = vpack.c.b16 %v3898, %v3891
    %v4781 = vpack.c.b16 %v3899, %v3892
    %v4782 = vpack.c.b16 %v3900, %v3893
    %v4783 = vpack.c.b16 %v3901, %v3894
    %v4784 = vpack.c.b16 %v3902, %v3895
    %v4785 = vpack.c.b16 %v3903, %v3896
    %v4786 = vpack.c.b16 %v3904, %v3897
    %v4787 = vpack.c.b16 %v3912, %v3905
    %v4788 = vpack.c.b16 %v3913, %v3906
    %v4789 = vpack.c.b16 %v3914, %v3907
    %v4790 = vpack.c.b16 %v3915, %v3908
    %v4791 = vpack.c.b16 %v3916, %v3909
    %v4792 = vpack.c.b16 %v3917, %v3910
    %v4793 = vpack.c.b16 %v3918, %v3911
    %v4794 = vpack.c.b16 %v3926, %v3919
    %v4795 = vpack.c.b16 %v3927, %v3920
    %v4796 = vpack.c.b16 %v3928, %v3921
    %v4797 = vpack.c.b16 %v3929, %v3922
    %v4798 = vpack.c.b16 %v3930, %v3923
    %v4799 = vpack.c.b16 %v3931, %v3924
    %v4800 = vpack.c.b16 %v3932, %v3925
    %v4801 = vpack.c.b16 %v3940, %v3933
    %v4802 = vpack.c.b16 %v3941, %v3934
    %v4803 = vpack.c.b16 %v3942, %v3935
    %v4804 = vpack.c.b16 %v3943, %v3936
    %v4805 = vpack.c.b16 %v3944, %v3937
    %v4806 = vpack.c.b16 %v3945, %v3938
    %v4807 = vpack.c.b16 %v3946, %v3939
    %v4808 = vpack.c.b16 %v3954, %v3947
    %v4809 = vpack.c.b16 %v3955, %v3948
    %v4810 = vpack.c.b16 %v3956, %v3949
    %v4811 = vpack.c.b16 %v3957, %v3950
    %v4812 = vpack.c.b16 %v3958, %v3951
    %v4813 = vpack.c.b16 %v3959, %v3952
    %v4814 = vpack.c.b16 %v3960, %v3953
    %v4815 = vpack.c.b16 %v3968, %v3961
    %v4816 = vpack.c.b16 %v3969, %v3962
    %v4817 = vpack.c.b16 %v3970, %v3963
    %v4818 = vpack.c.b16 %v3971, %v3964
    %v4819 = vpack.c.b16 %v3972, %v3965
    %v4820 = vpack.c.b16 %v3973, %v3966
    %v4821 = vpack.c.b16 %v3974, %v3967
    %v4822 = vpack.c.b16 %v3982, %v3975
    %v4823 = vpack.c.b16 %v3983, %v3976
    %v4824 = vpack.c.b16 %v3984, %v3977
    %v4825 = vpack.c.b16 %v3985, %v3978
    %v4826 = vpack.c.b16 %v3986, %v3979
    %v4827 = vpack.c.b16 %v3987, %v3980
    %v4828 = vpack.c.b16 %v3988, %v3981
    %v4829 = vpack.c.b16 %v3996, %v3989
    %v4830 = vpack.c.b16 %v3997, %v3990
    %v4831 = vpack.c.b16 %v3998, %v3991
    %v4832 = vpack.c.b16 %v3999, %v3992
    %v4833 = vpack.c.b16 %v4000, %v3993
    %v4834 = vpack.c.b16 %v4001, %v3994
    %v4835 = vpack.c.b16 %v4002, %v3995
    %v4836 = vpack.c.b16 %v4010, %v4003
    %v4837 = vpack.c.b16 %v4011, %v4004
    %v4838 = vpack.c.b16 %v4012, %v4005
    %v4839 = vpack.c.b16 %v4013, %v4006
    %v4840 = vpack.c.b16 %v4014, %v4007
    %v4841 = vpack.c.b16 %v4015, %v4008
    %v4842 = vpack.c.b16 %v4016, %v4009
    %v4843 = vpack.c.b16 %v4024, %v4017
    %v4844 = vpack.c.b16 %v4025, %v4018
    %v4845 = vpack.c.b16 %v4026, %v4019
    %v4846 = vpack.c.b16 %v4027, %v4020
    %v4847 = vpack.c.b16 %v4028, %v4021
    %v4848 = vpack.c.b16 %v4029, %v4022
    %v4849 = vpack.c.b16 %v4030, %v4023
    %v4850 = vpack.c.b16 %v4038, %v4031
    %v4851 = vpack.c.b16 %v4039, %v4032
    %v4852 = vpack.c.b16 %v4040, %v4033
    %v4853 = vpack.c.b16 %v4041, %v4034
    %v4854 = vpack.c.b16 %v4042, %v4035
    %v4855 = vpack.c.b16 %v4043, %v4036
    %v4856 = vpack.c.b16 %v4044, %v4037
    %v4857 = vpack.c.b16 %v4052, %v4045
    %v4858 = vpack.c.b16 %v4053, %v4046
    %v4859 = vpack.c.b16 %v4054, %v4047
    %v4860 = vpack.c.b16 %v4055, %v4048
    %v4861 = vpack.c.b16 %v4056, %v4049
    %v4862 = vpack.c.b16 %v4057, %v4050
    %v4863 = vpack.c.b16 %v4058, %v4051
    %v4864 = vpack.c.b16 %v4066, %v4059
    %v4865 = vpack.c.b16 %v4067, %v4060
    %v4866 = vpack.c.b16 %v4068, %v4061
    %v4867 = vpack.c.b16 %v4069, %v4062
    %v4868 = vpack.c.b16 %v4070, %v4063
    %v4869 = vpack.c.b16 %v4071, %v4064
    %v4870 = vpack.c.b16 %v4072, %v4065
    %v4871 = vpack.c.b16 %v4080, %v4073
    %v4872 = vpack.c.b16 %v4081, %v4074
    %v4873 = vpack.c.b16 %v4082, %v4075
    %v4874 = vpack.c.b16 %v4083, %v4076
    %v4875 = vpack.c.b16 %v4084, %v4077
    %v4876 = vpack.c.b16 %v4085, %v4078
    %v4877 = vpack.c.b16 %v4086, %v4079
    %v4878 = vpack.c.b16 %v4094, %v4087
    %v4879 = vpack.c.b16 %v4095, %v4088
    %v4880 = vpack.c.b16 %v4096, %v4089
    %v4881 = vpack.c.b16 %v4097, %v4090
    %v4882 = vpack.c.b16 %v4098, %v4091
    %v4883 = vpack.c.b16 %v4099, %v4092
    %v4884 = vpack.c.b16 %v4100, %v4093
    %v4885 = vpack.c.b16 %v4108, %v4101
    %v4886 = vpack.c.b16 %v4109, %v4102
    %v4887 = vpack.c.b16 %v4110, %v4103
    %v4888 = vpack.c.b16 %v4111, %v4104
    %v4889 = vpack.c.b16 %v4112, %v4105
    %v4890 = vpack.c.b16 %v4113, %v4106
    %v4891 = vpack.c.b16 %v4114, %v4107
    %v4892 = vpack.c.b16 %v4122, %v4115
    %v4893 = vpack.c.b16 %v4123, %v4116
    %v4894 = vpack.c.b16 %v4124, %v4117
    %v4895 = vpack.c.b16 %v4125, %v4118
    %v4896 = vpack.c.b16 %v4126, %v4119
    %v4897 = vpack.c.b16 %v4127, %v4120
    %v4898 = vpack.c.b16 %v4128, %v4121
    %v4899 = vpack.c.b16 %v4136, %v4129
    %v4900 = vpack.c.b16 %v4137, %v4130
    %v4901 = vpack.c.b16 %v4138, %v4131
    %v4902 = vpack.c.b16 %v4139, %v4132
    %v4903 = vpack.c.b16 %v4140, %v4133
    %v4904 = vpack.c.b16 %v4141, %v4134
    %v4905 = vpack.c.b16 %v4142, %v4135
    %v4906 = vpack.c.b16 %v4150, %v4143
    %v4907 = vpack.c.b16 %v4151, %v4144
    %v4908 = vpack.c.b16 %v4152, %v4145
    %v4909 = vpack.c.b16 %v4153, %v4146
    %v4910 = vpack.c.b16 %v4154, %v4147
    %v4911 = vpack.c.b16 %v4155, %v4148
    %v4912 = vpack.c.b16 %v4156, %v4149
    %v4913 = vpack.c.b16 %v4164, %v4157
    %v4914 = vpack.c.b16 %v4165, %v4158
    %v4915 = vpack.c.b16 %v4166, %v4159
    %v4916 = vpack.c.b16 %v4167, %v4160
    %v4917 = vpack.c.b16 %v4168, %v4161
    %v4918 = vpack.c.b16 %v4169, %v4162
    %v4919 = vpack.c.b16 %v4170, %v4163
    %v4920 = vpack.c.b16 %v4178, %v4171
    %v4921 = vpack.c.b16 %v4179, %v4172
    %v4922 = vpack.c.b16 %v4180, %v4173
    %v4923 = vpack.c.b16 %v4181, %v4174
    %v4924 = vpack.c.b16 %v4182, %v4175
    %v4925 = vpack.c.b16 %v4183, %v4176
    %v4926 = vpack.c.b16 %v4184, %v4177
    %v4927 = vpack.c.b16 %v4192, %v4185
    %v4928 = vpack.c.b16 %v4193, %v4186
    %v4929 = vpack.c.b16 %v4194, %v4187
    %v4930 = vpack.c.b16 %v4195, %v4188
    %v4931 = vpack.c.b16 %v4196, %v4189
    %v4932 = vpack.c.b16 %v4197, %v4190
    %v4933 = vpack.c.b16 %v4198, %v4191
    %v4934 = vpack.c.b16 %v4206, %v4199
    %v4935 = vpack.c.b16 %v4207, %v4200
    %v4936 = vpack.c.b16 %v4208, %v4201
    %v4937 = vpack.c.b16 %v4209, %v4202
    %v4938 = vpack.c.b16 %v4210, %v4203
    %v4939 = vpack.c.b16 %v4211, %v4204
    %v4940 = vpack.c.b16 %v4212, %v4205
    %v4941 = vpack.c.b16 %v4220, %v4213
    %v4942 = vpack.c.b16 %v4221, %v4214
    %v4943 = vpack.c.b16 %v4222, %v4215
    %v4944 = vpack.c.b16 %v4223, %v4216
    %v4945 = vpack.c.b16 %v4224, %v4217
    %v4946 = vpack.c.b16 %v4225, %v4218
    %v4947 = vpack.c.b16 %v4226, %v4219
    %v4948 = vpack.c.b16 %v4234, %v4227
    %v4949 = vpack.c.b16 %v4235, %v4228
    %v4950 = vpack.c.b16 %v4236, %v4229
    %v4951 = vpack.c.b16 %v4237, %v4230
    %v4952 = vpack.c.b16 %v4238, %v4231
    %v4953 = vpack.c.b16 %v4239, %v4232
    %v4954 = vpack.c.b16 %v4240, %v4233
    %v4955 = vpack.c.b16 %v4248, %v4241
    %v4956 = vpack.c.b16 %v4249, %v4242
    %v4957 = vpack.c.b16 %v4250, %v4243
    %v4958 = vpack.c.b16 %v4251, %v4244
    %v4959 = vpack.c.b16 %v4252, %v4245
    %v4960 = vpack.c.b16 %v4253, %v4246
    %v4961 = vpack.c.b16 %v4254, %v4247
    %v4962 = vpack.c.b16 %v4262, %v4255
    %v4963 = vpack.c.b16 %v4263, %v4256
    %v4964 = vpack.c.b16 %v4264, %v4257
    %v4965 = vpack.c.b16 %v4265, %v4258
    %v4966 = vpack.c.b16 %v4266, %v4259
    %v4967 = vpack.c.b16 %v4267, %v4260
    %v4968 = vpack.c.b16 %v4268, %v4261
    %v4969 = vpack.c.b16 %v4276, %v4269
    %v4970 = vpack.c.b16 %v4277, %v4270
    %v4971 = vpack.c.b16 %v4278, %v4271
    %v4972 = vpack.c.b16 %v4279, %v4272
    %v4973 = vpack.c.b16 %v4280, %v4273
    %v4974 = vpack.c.b16 %v4281, %v4274
    %v4975 = vpack.c.b16 %v4282, %v4275
    %v4976 = vpack.c.b16 %v4290, %v4283
    %v4977 = vpack.c.b16 %v4291, %v4284
    %v4978 = vpack.c.b16 %v4292, %v4285
    %v4979 = vpack.c.b16 %v4293, %v4286
    %v4980 = vpack.c.b16 %v4294, %v4287
    %v4981 = vpack.c.b16 %v4295, %v4288
    %v4982 = vpack.c.b16 %v4296, %v4289
    %v4983 = vpack.c.b16 %v4304, %v4297
    %v4984 = vpack.c.b16 %v4305, %v4298
    %v4985 = vpack.c.b16 %v4306, %v4299
    %v4986 = vpack.c.b16 %v4307, %v4300
    %v4987 = vpack.c.b16 %v4308, %v4301
    %v4988 = vpack.c.b16 %v4309, %v4302
    %v4989 = vpack.c.b16 %v4310, %v4303
    %v4990 = vpack.c.b16 %v4318, %v4311
    %v4991 = vpack.c.b16 %v4319, %v4312
    %v4992 = vpack.c.b16 %v4320, %v4313
    %v4993 = vpack.c.b16 %v4321, %v4314
    %v4994 = vpack.c.b16 %v4322, %v4315
    %v4995 = vpack.c.b16 %v4323, %v4316
    %v4996 = vpack.c.b16 %v4324, %v4317
    %v4997 = vpack.c.b16 %v4332, %v4325
    %v4998 = vpack.c.b16 %v4333, %v4326
    %v4999 = vpack.c.b16 %v4334, %v4327
    %v5000 = vpack.c.b16 %v4335, %v4328
    %v5001 = vpack.c.b16 %v4336, %v4329
    %v5002 = vpack.c.b16 %v4337, %v4330
    %v5003 = vpack.c.b16 %v4338, %v4331
    %v5004 = vpack.c.b16 %v4346, %v4339
    %v5005 = vpack.c.b16 %v4347, %v4340
    %v5006 = vpack.c.b16 %v4348, %v4341
    %v5007 = vpack.c.b16 %v4349, %v4342
    %v5008 = vpack.c.b16 %v4350, %v4343
    %v5009 = vpack.c.b16 %v4351, %v4344
    %v5010 = vpack.c.b16 %v4352, %v4345
    %v5011 = vpack.c.b16 %v4360, %v4353
    %v5012 = vpack.c.b16 %v4361, %v4354
    %v5013 = vpack.c.b16 %v4362, %v4355
    %v5014 = vpack.c.b16 %v4363, %v4356
    %v5015 = vpack.c.b16 %v4364, %v4357
    %v5016 = vpack.c.b16 %v4365, %v4358
    %v5017 = vpack.c.b16 %v4366, %v4359
    %v5018 = vpack.c.b16 %v4374, %v4367
    %v5019 = vpack.c.b16 %v4375, %v4368
    %v5020 = vpack.c.b16 %v4376, %v4369
    %v5021 = vpack.c.b16 %v4377, %v4370
    %v5022 = vpack.c.b16 %v4378, %v4371
    %v5023 = vpack.c.b16 %v4379, %v4372
    %v5024 = vpack.c.b16 %v4380, %v4373
    %v5025 = vpack.c.b16 %v4388, %v4381
    %v5026 = vpack.c.b16 %v4389, %v4382
    %v5027 = vpack.c.b16 %v4390, %v4383
    %v5028 = vpack.c.b16 %v4391, %v4384
    %v5029 = vpack.c.b16 %v4392, %v4385
    %v5030 = vpack.c.b16 %v4393, %v4386
    %v5031 = vpack.c.b16 %v4394, %v4387
    %v5032 = vpack.c.b16 %v4402, %v4395
    %v5033 = vpack.c.b16 %v4403, %v4396
    %v5034 = vpack.c.b16 %v4404, %v4397
    %v5035 = vpack.c.b16 %v4405, %v4398
    %v5036 = vpack.c.b16 %v4406, %v4399
    %v5037 = vpack.c.b16 %v4407, %v4400
    %v5038 = vpack.c.b16 %v4408, %v4401
    %v5039 = vpack.c.b16 %v4416, %v4409
    %v5040 = vpack.c.b16 %v4417, %v4410
    %v5041 = vpack.c.b16 %v4418, %v4411
    %v5042 = vpack.c.b16 %v4419, %v4412
    %v5043 = vpack.c.b16 %v4420, %v4413
    %v5044 = vpack.c.b16 %v4421, %v4414
    %v5045 = vpack.c.b16 %v4422, %v4415
    %v5046 = vpack.c.b16 %v4430, %v4423
    %v5047 = vpack.c.b16 %v4431, %v4424
    %v5048 = vpack.c.b16 %v4432, %v4425
    %v5049 = vpack.c.b16 %v4433, %v4426
    %v5050 = vpack.c.b16 %v4434, %v4427
    %v5051 = vpack.c.b16 %v4435, %v4428
    %v5052 = vpack.c.b16 %v4436, %v4429
    %v5053 = vpack.c.b16 %v4444, %v4437
    %v5054 = vpack.c.b16 %v4445, %v4438
    %v5055 = vpack.c.b16 %v4446, %v4439
    %v5056 = vpack.c.b16 %v4447, %v4440
    %v5057 = vpack.c.b16 %v4448, %v4441
    %v5058 = vpack.c.b16 %v4449, %v4442
    %v5059 = vpack.c.b16 %v4450, %v4443
    %v5060 = vpack.c.b16 %v4458, %v4451
    %v5061 = vpack.c.b16 %v4459, %v4452
    %v5062 = vpack.c.b16 %v4460, %v4453
    %v5063 = vpack.c.b16 %v4461, %v4454
    %v5064 = vpack.c.b16 %v4462, %v4455
    %v5065 = vpack.c.b16 %v4463, %v4456
    %v5066 = vpack.c.b16 %v4464, %v4457
    %v5067 = vpack.c.b16 %v4472, %v4465
    %v5068 = vpack.c.b16 %v4473, %v4466
    %v5069 = vpack.c.b16 %v4474, %v4467
    %v5070 = vpack.c.b16 %v4475, %v4468
    %v5071 = vpack.c.b16 %v4476, %v4469
    %v5072 = vpack.c.b16 %v4477, %v4470
    %v5073 = vpack.c.b16 %v4478, %v4471
    %v5074 = vpack.c.b16 %v4486, %v4479
    %v5075 = vpack.c.b16 %v4487, %v4480
    %v5076 = vpack.c.b16 %v4488, %v4481
    %v5077 = vpack.c.b16 %v4489, %v4482
    %v5078 = vpack.c.b16 %v4490, %v4483
    %v5079 = vpack.c.b16 %v4491, %v4484
    %v5080 = vpack.c.b16 %v4492, %v4485
    %v5081 = vpack.c.b16 %v4500, %v4493
    %v5082 = vpack.c.b16 %v4501, %v4494
    %v5083 = vpack.c.b16 %v4502, %v4495
    %v5084 = vpack.c.b16 %v4503, %v4496
    %v5085 = vpack.c.b16 %v4504, %v4497
    %v5086 = vpack.c.b16 %v4505, %v4498
    %v5087 = vpack.c.b16 %v4506, %v4499
    %v5088 = vpack.c.b16 %v4514, %v4507
    %v5089 = vpack.c.b16 %v4515, %v4508
    %v5090 = vpack.c.b16 %v4516, %v4509
    %v5091 = vpack.c.b16 %v4517, %v4510
    %v5092 = vpack.c.b16 %v4518, %v4511
    %v5093 = vpack.c.b16 %v4519, %v4512
    %v5094 = vpack.c.b16 %v4520, %v4513
    %v5095 = vpack.c.b16 %v4528, %v4521
    %v5096 = vpack.c.b16 %v4529, %v4522
    %v5097 = vpack.c.b16 %v4530, %v4523
    %v5098 = vpack.c.b16 %v4531, %v4524
    %v5099 = vpack.c.b16 %v4532, %v4525
    %v5100 = vpack.c.b16 %v4533, %v4526
    %v5101 = vpack.c.b16 %v4534, %v4527
    %v5102 = vpack.c.b16 %v4542, %v4535
    %v5103 = vpack.c.b16 %v4543, %v4536
    %v5104 = vpack.c.b16 %v4544, %v4537
    %v5105 = vpack.c.b16 %v4545, %v4538
    %v5106 = vpack.c.b16 %v4546, %v4539
    %v5107 = vpack.c.b16 %v4547, %v4540
    %v5108 = vpack.c.b16 %v4548, %v4541
    %v5109 = vpack.c.b16 %v4556, %v4549
    %v5110 = vpack.c.b16 %v4557, %v4550
    %v5111 = vpack.c.b16 %v4558, %v4551
    %v5112 = vpack.c.b16 %v4559, %v4552
    %v5113 = vpack.c.b16 %v4560, %v4553
    %v5114 = vpack.c.b16 %v4561, %v4554
    %v5115 = vpack.c.b16 %v4562, %v4555
    %v5116 = vpack.c.b16 %v4570, %v4563
    %v5117 = vpack.c.b16 %v4571, %v4564
    %v5118 = vpack.c.b16 %v4572, %v4565
    %v5119 = vpack.c.b16 %v4573, %v4566
    %v5120 = vpack.c.b16 %v4574, %v4567
    %v5121 = vpack.c.b16 %v4575, %v4568
    %v5122 = vpack.c.b16 %v4576, %v4569
    %v5123 = vpack.c.b16 %v4584, %v4577
    %v5124 = vpack.c.b16 %v4585, %v4578
    %v5125 = vpack.c.b16 %v4586, %v4579
    %v5126 = vpack.c.b16 %v4587, %v4580
    %v5127 = vpack.c.b16 %v4588, %v4581
    %v5128 = vpack.c.b16 %v4589, %v4582
    %v5129 = vpack.c.b16 %v4590, %v4583
    %v5130 = vpack.c.b16 %v4598, %v4591
    %v5131 = vpack.c.b16 %v4599, %v4592
    %v5132 = vpack.c.b16 %v4600, %v4593
    %v5133 = vpack.c.b16 %v4601, %v4594
    %v5134 = vpack.c.b16 %v4602, %v4595
    %v5135 = vpack.c.b16 %v4603, %v4596
    %v5136 = vpack.c.b16 %v4604, %v4597
    %v5137 = vpack.c.b16 %v4612, %v4605
    %v5138 = vpack.c.b16 %v4613, %v4606
    %v5139 = vpack.c.b16 %v4614, %v4607
    %v5140 = vpack.c.b16 %v4615, %v4608
    %v5141 = vpack.c.b16 %v4616, %v4609
    %v5142 = vpack.c.b16 %v4617, %v4610
    %v5143 = vpack.c.b16 %v4618, %v4611
    %v5144 = vpack.c.b16 %v4626, %v4619
    %v5145 = vpack.c.b16 %v4627, %v4620
    %v5146 = vpack.c.b16 %v4628, %v4621
    %v5147 = vpack.c.b16 %v4629, %v4622
    %v5148 = vpack.c.b16 %v4630, %v4623
    %v5149 = vpack.c.b16 %v4631, %v4624
    %v5150 = vpack.c.b16 %v4632, %v4625
    %v5151 = vpack.c.b16 %v4640, %v4633
    %v5152 = vpack.c.b16 %v4641, %v4634
    %v5153 = vpack.c.b16 %v4642, %v4635
    %v5154 = vpack.c.b16 %v4643, %v4636
    %v5155 = vpack.c.b16 %v4644, %v4637
    %v5156 = vpack.c.b16 %v4645, %v4638
    %v5157 = vpack.c.b16 %v4646, %v4639
    %v5158 = vpack.c.b16 %v4654, %v4647
    %v5159 = vpack.c.b16 %v4655, %v4648
    %v5160 = vpack.c.b16 %v4656, %v4649
    %v5161 = vpack.c.b16 %v4657, %v4650
    %v5162 = vpack.c.b16 %v4658, %v4651
    %v5163 = vpack.c.b16 %v4659, %v4652
    %v5164 = vpack.c.b16 %v4660, %v4653
    %v5165 = vpack.c.b16 %v4668, %v4661
    %v5166 = vpack.c.b16 %v4669, %v4662
    %v5167 = vpack.c.b16 %v4670, %v4663
    %v5168 = vpack.c.b16 %v4671, %v4664
    %v5169 = vpack.c.b16 %v4672, %v4665
    %v5170 = vpack.c.b16 %v4673, %v4666
    %v5171 = vpack.c.b16 %v4674, %v4667
    %v5172 = vpack.c.b16 %v4682, %v4675
    %v5173 = vpack.c.b16 %v4683, %v4676
    %v5174 = vpack.c.b16 %v4684, %v4677
    %v5175 = vpack.c.b16 %v4685, %v4678
    %v5176 = vpack.c.b16 %v4686, %v4679
    %v5177 = vpack.c.b16 %v4687, %v4680
    %v5178 = vpack.c.b16 %v4688, %v4681
    %v5179 = vpack.c.b16 %v4696, %v4689
    %v5180 = vpack.c.b16 %v4697, %v4690
    %v5181 = vpack.c.b16 %v4698, %v4691
    %v5182 = vpack.c.b16 %v4699, %v4692
    %v5183 = vpack.c.b16 %v4700, %v4693
    %v5184 = vpack.c.b16 %v4701, %v4694
    %v5185 = vpack.c.b16 %v4702, %v4695
    %v5186 = vpack.c.b16 %v4710, %v4703
    %v5187 = vpack.c.b16 %v4711, %v4704
    %v5188 = vpack.c.b16 %v4712, %v4705
    %v5189 = vpack.c.b16 %v4713, %v4706
    %v5190 = vpack.c.b16 %v4714, %v4707
    %v5191 = vpack.c.b16 %v4715, %v4708
    %v5192 = vpack.c.b16 %v4716, %v4709
    %v5193 = vpack.c.b16 %v4724, %v4717
    %v5194 = vpack.c.b16 %v4725, %v4718
    %v5195 = vpack.c.b16 %v4726, %v4719
    %v5196 = vpack.c.b16 %v4727, %v4720
    %v5197 = vpack.c.b16 %v4728, %v4721
    %v5198 = vpack.c.b16 %v4729, %v4722
    %v5199 = vpack.c.b16 %v4730, %v4723
    %v5200 = vpack.c.b16 %v4738, %v4731
    %v5201 = vpack.c.b16 %v4739, %v4732
    %v5202 = vpack.c.b16 %v4740, %v4733
    %v5203 = vpack.c.b16 %v4741, %v4734
    %v5204 = vpack.c.b16 %v4742, %v4735
    %v5205 = vpack.c.b16 %v4743, %v4736
    %v5206 = vpack.c.b16 %v4744, %v4737
    %v5207 = vpack.c.b16 %v4752, %v4745
    %v5208 = vpack.c.b16 %v4753, %v4746
    %v5209 = vpack.c.b16 %v4754, %v4747
    %v5210 = vpack.c.b16 %v4755, %v4748
    %v5211 = vpack.c.b16 %v4756, %v4749
    %v5212 = vpack.c.b16 %v4757, %v4750
    %v5213 = vpack.c.b16 %v4758, %v4751
    %v5214 = vpack.c.b16 %v4766, %v4759
    %v5215 = vpack.c.b16 %v4767, %v4760
    %v5216 = vpack.c.b16 %v4768, %v4761
    %v5217 = vpack.c.b16 %v4769, %v4762
    %v5218 = vpack.c.b16 %v4770, %v4763
    %v5219 = vpack.c.b16 %v4771, %v4764
    %v5220 = vpack.c.b16 %v4772, %v4765
    %5669 = vmatpush.bf16.msra.mxu0 %v4822
    %5670 = vmatpush.bf16.msra.mxu0 %v4815
    %5671 = vmatpush.bf16.msra.mxu0 %v4808
    %5672 = vmatpush.bf16.msra.mxu0 %v4801
    %5673 = vmatpush.bf16.msra.mxu0 %v4794
    %5674 = vmatpush.bf16.msra.mxu0 %v4787
    %5675 = vmatpush.bf16.msra.mxu0 %v4780
    %5676 = vmatpush.bf16.msra.mxu0 %v4773
    %5677 = vmatmul.bf16.gmra.mxu0 %v2829
    %v5678 = vpop.f32.mrf.mxu0
    %v5679 = vadd.f32 %v3351, %v5678
    %v5680 = vpop.f32.mrf.mxu0
    %v5681 = vadd.f32 %v3351, %v5680
    %5682 = vdwg.mxu0
    %5683 = vmatpush.bf16.msra.mxu0 %v4878
    %5684 = vmatpush.bf16.msra.mxu0 %v4871
    %5685 = vmatpush.bf16.msra.mxu0 %v4864
    %5686 = vmatpush.bf16.msra.mxu0 %v4857
    %5687 = vmatpush.bf16.msra.mxu0 %v4850
    %5688 = vmatpush.bf16.msra.mxu0 %v4843
    %5689 = vmatpush.bf16.msra.mxu0 %v4836
    %5690 = vmatpush.bf16.msra.mxu0 %v4829
    %5691 = vmatmul.bf16.gmra.mxu0 %v2830
    %v5692 = vpop.f32.mrf.mxu0
    %v5693 = vadd.f32 %v5679, %v5692
    %v5694 = vpop.f32.mrf.mxu0
    %v5695 = vadd.f32 %v5681, %v5694
    %5696 = vdwg.mxu0
    %5697 = vmatpush.bf16.msra.mxu0 %v4934
    %5698 = vmatpush.bf16.msra.mxu0 %v4927
    %5699 = vmatpush.bf16.msra.mxu0 %v4920
    %5700 = vmatpush.bf16.msra.mxu0 %v4913
    %5701 = vmatpush.bf16.msra.mxu0 %v4906
    %5702 = vmatpush.bf16.msra.mxu0 %v4899
    %5703 = vmatpush.bf16.msra.mxu0 %v4892
    %5704 = vmatpush.bf16.msra.mxu0 %v4885
    %5705 = vmatmul.bf16.gmra.mxu0 %v2831
    %v5706 = vpop.f32.mrf.mxu0
    %v5707 = vadd.f32 %v5693, %v5706
    %v5708 = vpop.f32.mrf.mxu0
    %v5709 = vadd.f32 %v5695, %v5708
    %5710 = vdwg.mxu0
    %5711 = vmatpush.bf16.msra.mxu0 %v4990
    %5712 = vmatpush.bf16.msra.mxu0 %v4983
    %5713 = vmatpush.bf16.msra.mxu0 %v4976
    %5714 = vmatpush.bf16.msra.mxu0 %v4969
    %5715 = vmatpush.bf16.msra.mxu0 %v4962
    %5716 = vmatpush.bf16.msra.mxu0 %v4955
    %5717 = vmatpush.bf16.msra.mxu0 %v4948
    %5718 = vmatpush.bf16.msra.mxu0 %v4941
    %5719 = vmatmul.bf16.gmra.mxu0 %v2832
    %v5720 = vpop.f32.mrf.mxu0
    %v5721 = vadd.f32 %v5707, %v5720
    %v5722 = vpop.f32.mrf.mxu0
    %v5723 = vadd.f32 %v5709, %v5722
    %5724 = vdwg.mxu0
    %5725 = vmatpush.bf16.msra.mxu0 %v5046
    %5726 = vmatpush.bf16.msra.mxu0 %v5039
    %5727 = vmatpush.bf16.msra.mxu0 %v5032
    %5728 = vmatpush.bf16.msra.mxu0 %v5025
    %5729 = vmatpush.bf16.msra.mxu0 %v5018
    %5730 = vmatpush.bf16.msra.mxu0 %v5011
    %5731 = vmatpush.bf16.msra.mxu0 %v5004
    %5732 = vmatpush.bf16.msra.mxu0 %v4997
    %5733 = vmatmul.bf16.gmra.mxu0 %v2833
    %v5734 = vpop.f32.mrf.mxu0
    %v5735 = vadd.f32 %v5721, %v5734
    %v5736 = vpop.f32.mrf.mxu0
    %v5737 = vadd.f32 %v5723, %v5736
    %5738 = vdwg.mxu0
    %5739 = vmatpush.bf16.msra.mxu0 %v5102
    %5740 = vmatpush.bf16.msra.mxu0 %v5095
    %5741 = vmatpush.bf16.msra.mxu0 %v5088
    %5742 = vmatpush.bf16.msra.mxu0 %v5081
    %5743 = vmatpush.bf16.msra.mxu0 %v5074
    %5744 = vmatpush.bf16.msra.mxu0 %v5067
    %5745 = vmatpush.bf16.msra.mxu0 %v5060
    %5746 = vmatpush.bf16.msra.mxu0 %v5053
    %5747 = vmatmul.bf16.gmra.mxu0 %v2834
    %v5748 = vpop.f32.mrf.mxu0
    %v5749 = vadd.f32 %v5735, %v5748
    %v5750 = vpop.f32.mrf.mxu0
    %v5751 = vadd.f32 %v5737, %v5750
    %5752 = vdwg.mxu0
    %5753 = vmatpush.bf16.msra.mxu0 %v5158
    %5754 = vmatpush.bf16.msra.mxu0 %v5151
    %5755 = vmatpush.bf16.msra.mxu0 %v5144
    %5756 = vmatpush.bf16.msra.mxu0 %v5137
    %5757 = vmatpush.bf16.msra.mxu0 %v5130
    %5758 = vmatpush.bf16.msra.mxu0 %v5123
    %5759 = vmatpush.bf16.msra.mxu0 %v5116
    %5760 = vmatpush.bf16.msra.mxu0 %v5109
    %5761 = vmatmul.bf16.gmra.mxu0 %v2835
    %v5762 = vpop.f32.mrf.mxu0
    %v5763 = vadd.f32 %v5749, %v5762
    %v5764 = vpop.f32.mrf.mxu0
    %v5765 = vadd.f32 %v5751, %v5764
    %5766 = vdwg.mxu0
    %5767 = vmatpush.bf16.msra.mxu0 %v5214
    %5768 = vmatpush.bf16.msra.mxu0 %v5207
    %5769 = vmatpush.bf16.msra.mxu0 %v5200
    %5770 = vmatpush.bf16.msra.mxu0 %v5193
    %5771 = vmatpush.bf16.msra.mxu0 %v5186
    %5772 = vmatpush.bf16.msra.mxu0 %v5179
    %5773 = vmatpush.bf16.msra.mxu0 %v5172
    %5774 = vmatpush.bf16.msra.mxu0 %v5165
    %5775 = vmatmul.bf16.gmra.mxu0 %v2836
    %v5776 = vpop.f32.mrf.mxu0
    %v5777 = vadd.f32 %v5763, %v5776
    %v5778 = vpop.f32.mrf.mxu0
    %v5779 = vadd.f32 %v5765, %v5778
    %5780 = vdwg.mxu0
    %5781 = vmatpush.bf16.msra.mxu0 %v4823
    %5782 = vmatpush.bf16.msra.mxu0 %v4816
    %5783 = vmatpush.bf16.msra.mxu0 %v4809
    %5784 = vmatpush.bf16.msra.mxu0 %v4802
    %5785 = vmatpush.bf16.msra.mxu0 %v4795
    %5786 = vmatpush.bf16.msra.mxu0 %v4788
    %5787 = vmatpush.bf16.msra.mxu0 %v4781
    %5788 = vmatpush.bf16.msra.mxu0 %v4774
    %5789 = vmatmul.bf16.gmra.mxu0 %v2829
    %v5790 = vpop.f32.mrf.mxu0
    %v5791 = vadd.f32 %v3352, %v5790
    %v5792 = vpop.f32.mrf.mxu0
    %v5793 = vadd.f32 %v3352, %v5792
    %5794 = vdwg.mxu0
    %5795 = vmatpush.bf16.msra.mxu0 %v4879
    %5796 = vmatpush.bf16.msra.mxu0 %v4872
    %5797 = vmatpush.bf16.msra.mxu0 %v4865
    %5798 = vmatpush.bf16.msra.mxu0 %v4858
    %5799 = vmatpush.bf16.msra.mxu0 %v4851
    %5800 = vmatpush.bf16.msra.mxu0 %v4844
    %5801 = vmatpush.bf16.msra.mxu0 %v4837
    %5802 = vmatpush.bf16.msra.mxu0 %v4830
    %5803 = vmatmul.bf16.gmra.mxu0 %v2830
    %v5804 = vpop.f32.mrf.mxu0
    %v5805 = vadd.f32 %v5791, %v5804
    %v5806 = vpop.f32.mrf.mxu0
    %v5807 = vadd.f32 %v5793, %v5806
    %5808 = vdwg.mxu0
    %5809 = vmatpush.bf16.msra.mxu0 %v4935
    %5810 = vmatpush.bf16.msra.mxu0 %v4928
    %5811 = vmatpush.bf16.msra.mxu0 %v4921
    %5812 = vmatpush.bf16.msra.mxu0 %v4914
    %5813 = vmatpush.bf16.msra.mxu0 %v4907
    %5814 = vmatpush.bf16.msra.mxu0 %v4900
    %5815 = vmatpush.bf16.msra.mxu0 %v4893
    %5816 = vmatpush.bf16.msra.mxu0 %v4886
    %5817 = vmatmul.bf16.gmra.mxu0 %v2831
    %v5818 = vpop.f32.mrf.mxu0
    %v5819 = vadd.f32 %v5805, %v5818
    %v5820 = vpop.f32.mrf.mxu0
    %v5821 = vadd.f32 %v5807, %v5820
    %5822 = vdwg.mxu0
    %5823 = vmatpush.bf16.msra.mxu0 %v4991
    %5824 = vmatpush.bf16.msra.mxu0 %v4984
    %5825 = vmatpush.bf16.msra.mxu0 %v4977
    %5826 = vmatpush.bf16.msra.mxu0 %v4970
    %5827 = vmatpush.bf16.msra.mxu0 %v4963
    %5828 = vmatpush.bf16.msra.mxu0 %v4956
    %5829 = vmatpush.bf16.msra.mxu0 %v4949
    %5830 = vmatpush.bf16.msra.mxu0 %v4942
    %5831 = vmatmul.bf16.gmra.mxu0 %v2832
    %v5832 = vpop.f32.mrf.mxu0
    %v5833 = vadd.f32 %v5819, %v5832
    %v5834 = vpop.f32.mrf.mxu0
    %v5835 = vadd.f32 %v5821, %v5834
    %5836 = vdwg.mxu0
    %5837 = vmatpush.bf16.msra.mxu0 %v5047
    %5838 = vmatpush.bf16.msra.mxu0 %v5040
    %5839 = vmatpush.bf16.msra.mxu0 %v5033
    %5840 = vmatpush.bf16.msra.mxu0 %v5026
    %5841 = vmatpush.bf16.msra.mxu0 %v5019
    %5842 = vmatpush.bf16.msra.mxu0 %v5012
    %5843 = vmatpush.bf16.msra.mxu0 %v5005
    %5844 = vmatpush.bf16.msra.mxu0 %v4998
    %5845 = vmatmul.bf16.gmra.mxu0 %v2833
    %v5846 = vpop.f32.mrf.mxu0
    %v5847 = vadd.f32 %v5833, %v5846
    %v5848 = vpop.f32.mrf.mxu0
    %v5849 = vadd.f32 %v5835, %v5848
    %5850 = vdwg.mxu0
    %5851 = vmatpush.bf16.msra.mxu0 %v5103
    %5852 = vmatpush.bf16.msra.mxu0 %v5096
    %5853 = vmatpush.bf16.msra.mxu0 %v5089
    %5854 = vmatpush.bf16.msra.mxu0 %v5082
    %5855 = vmatpush.bf16.msra.mxu0 %v5075
    %5856 = vmatpush.bf16.msra.mxu0 %v5068
    %5857 = vmatpush.bf16.msra.mxu0 %v5061
    %5858 = vmatpush.bf16.msra.mxu0 %v5054
    %5859 = vmatmul.bf16.gmra.mxu0 %v2834
    %v5860 = vpop.f32.mrf.mxu0
    %v5861 = vadd.f32 %v5847, %v5860
    %v5862 = vpop.f32.mrf.mxu0
    %v5863 = vadd.f32 %v5849, %v5862
    %5864 = vdwg.mxu0
    %5865 = vmatpush.bf16.msra.mxu0 %v5159
    %5866 = vmatpush.bf16.msra.mxu0 %v5152
    %5867 = vmatpush.bf16.msra.mxu0 %v5145
    %5868 = vmatpush.bf16.msra.mxu0 %v5138
    %5869 = vmatpush.bf16.msra.mxu0 %v5131
    %5870 = vmatpush.bf16.msra.mxu0 %v5124
    %5871 = vmatpush.bf16.msra.mxu0 %v5117
    %5872 = vmatpush.bf16.msra.mxu0 %v5110
    %5873 = vmatmul.bf16.gmra.mxu0 %v2835
    %v5874 = vpop.f32.mrf.mxu0
    %v5875 = vadd.f32 %v5861, %v5874
    %v5876 = vpop.f32.mrf.mxu0
    %v5877 = vadd.f32 %v5863, %v5876
    %5878 = vdwg.mxu0
    %5879 = vmatpush.bf16.msra.mxu0 %v5215
    %5880 = vmatpush.bf16.msra.mxu0 %v5208
    %5881 = vmatpush.bf16.msra.mxu0 %v5201
    %5882 = vmatpush.bf16.msra.mxu0 %v5194
    %5883 = vmatpush.bf16.msra.mxu0 %v5187
    %5884 = vmatpush.bf16.msra.mxu0 %v5180
    %5885 = vmatpush.bf16.msra.mxu0 %v5173
    %5886 = vmatpush.bf16.msra.mxu0 %v5166
    %5887 = vmatmul.bf16.gmra.mxu0 %v2836
    %v5888 = vpop.f32.mrf.mxu0
    %v5889 = vadd.f32 %v5875, %v5888
    %v5890 = vpop.f32.mrf.mxu0
    %v5891 = vadd.f32 %v5877, %v5890
    %5892 = vdwg.mxu0
    %5893 = vmatpush.bf16.msra.mxu0 %v4824
    %5894 = vmatpush.bf16.msra.mxu0 %v4817
    %5895 = vmatpush.bf16.msra.mxu0 %v4810
    %5896 = vmatpush.bf16.msra.mxu0 %v4803
    %5897 = vmatpush.bf16.msra.mxu0 %v4796
    %5898 = vmatpush.bf16.msra.mxu0 %v4789
    %5899 = vmatpush.bf16.msra.mxu0 %v4782
    %5900 = vmatpush.bf16.msra.mxu0 %v4775
    %5901 = vmatmul.bf16.gmra.mxu0 %v2829
    %v5902 = vpop.f32.mrf.mxu0
    %v5903 = vadd.f32 %v3353, %v5902
    %v5904 = vpop.f32.mrf.mxu0
    %v5905 = vadd.f32 %v3353, %v5904
    %5906 = vdwg.mxu0
    %5907 = vmatpush.bf16.msra.mxu0 %v4880
    %5908 = vmatpush.bf16.msra.mxu0 %v4873
    %5909 = vmatpush.bf16.msra.mxu0 %v4866
    %5910 = vmatpush.bf16.msra.mxu0 %v4859
    %5911 = vmatpush.bf16.msra.mxu0 %v4852
    %5912 = vmatpush.bf16.msra.mxu0 %v4845
    %5913 = vmatpush.bf16.msra.mxu0 %v4838
    %5914 = vmatpush.bf16.msra.mxu0 %v4831
    %5915 = vmatmul.bf16.gmra.mxu0 %v2830
    %v5916 = vpop.f32.mrf.mxu0
    %v5917 = vadd.f32 %v5903, %v5916
    %v5918 = vpop.f32.mrf.mxu0
    %v5919 = vadd.f32 %v5905, %v5918
    %5920 = vdwg.mxu0
    %5921 = vmatpush.bf16.msra.mxu0 %v4936
    %5922 = vmatpush.bf16.msra.mxu0 %v4929
    %5923 = vmatpush.bf16.msra.mxu0 %v4922
    %5924 = vmatpush.bf16.msra.mxu0 %v4915
    %5925 = vmatpush.bf16.msra.mxu0 %v4908
    %5926 = vmatpush.bf16.msra.mxu0 %v4901
    %5927 = vmatpush.bf16.msra.mxu0 %v4894
    %5928 = vmatpush.bf16.msra.mxu0 %v4887
    %5929 = vmatmul.bf16.gmra.mxu0 %v2831
    %v5930 = vpop.f32.mrf.mxu0
    %v5931 = vadd.f32 %v5917, %v5930
    %v5932 = vpop.f32.mrf.mxu0
    %v5933 = vadd.f32 %v5919, %v5932
    %5934 = vdwg.mxu0
    %5935 = vmatpush.bf16.msra.mxu0 %v4992
    %5936 = vmatpush.bf16.msra.mxu0 %v4985
    %5937 = vmatpush.bf16.msra.mxu0 %v4978
    %5938 = vmatpush.bf16.msra.mxu0 %v4971
    %5939 = vmatpush.bf16.msra.mxu0 %v4964
    %5940 = vmatpush.bf16.msra.mxu0 %v4957
    %5941 = vmatpush.bf16.msra.mxu0 %v4950
    %5942 = vmatpush.bf16.msra.mxu0 %v4943
    %5943 = vmatmul.bf16.gmra.mxu0 %v2832
    %v5944 = vpop.f32.mrf.mxu0
    %v5945 = vadd.f32 %v5931, %v5944
    %v5946 = vpop.f32.mrf.mxu0
    %v5947 = vadd.f32 %v5933, %v5946
    %5948 = vdwg.mxu0
    %5949 = vmatpush.bf16.msra.mxu0 %v5048
    %5950 = vmatpush.bf16.msra.mxu0 %v5041
    %5951 = vmatpush.bf16.msra.mxu0 %v5034
    %5952 = vmatpush.bf16.msra.mxu0 %v5027
    %5953 = vmatpush.bf16.msra.mxu0 %v5020
    %5954 = vmatpush.bf16.msra.mxu0 %v5013
    %5955 = vmatpush.bf16.msra.mxu0 %v5006
    %5956 = vmatpush.bf16.msra.mxu0 %v4999
    %5957 = vmatmul.bf16.gmra.mxu0 %v2833
    %v5958 = vpop.f32.mrf.mxu0
    %v5959 = vadd.f32 %v5945, %v5958
    %v5960 = vpop.f32.mrf.mxu0
    %v5961 = vadd.f32 %v5947, %v5960
    %5962 = vdwg.mxu0
    %5963 = vmatpush.bf16.msra.mxu0 %v5104
    %5964 = vmatpush.bf16.msra.mxu0 %v5097
    %5965 = vmatpush.bf16.msra.mxu0 %v5090
    %5966 = vmatpush.bf16.msra.mxu0 %v5083
    %5967 = vmatpush.bf16.msra.mxu0 %v5076
    %5968 = vmatpush.bf16.msra.mxu0 %v5069
    %5969 = vmatpush.bf16.msra.mxu0 %v5062
    %5970 = vmatpush.bf16.msra.mxu0 %v5055
    %5971 = vmatmul.bf16.gmra.mxu0 %v2834
    %v5972 = vpop.f32.mrf.mxu0
    %v5973 = vadd.f32 %v5959, %v5972
    %v5974 = vpop.f32.mrf.mxu0
    %v5975 = vadd.f32 %v5961, %v5974
    %5976 = vdwg.mxu0
    %5977 = vmatpush.bf16.msra.mxu0 %v5160
    %5978 = vmatpush.bf16.msra.mxu0 %v5153
    %5979 = vmatpush.bf16.msra.mxu0 %v5146
    %5980 = vmatpush.bf16.msra.mxu0 %v5139
    %5981 = vmatpush.bf16.msra.mxu0 %v5132
    %5982 = vmatpush.bf16.msra.mxu0 %v5125
    %5983 = vmatpush.bf16.msra.mxu0 %v5118
    %5984 = vmatpush.bf16.msra.mxu0 %v5111
    %5985 = vmatmul.bf16.gmra.mxu0 %v2835
    %v5986 = vpop.f32.mrf.mxu0
    %v5987 = vadd.f32 %v5973, %v5986
    %v5988 = vpop.f32.mrf.mxu0
    %v5989 = vadd.f32 %v5975, %v5988
    %5990 = vdwg.mxu0
    %5991 = vmatpush.bf16.msra.mxu0 %v5216
    %5992 = vmatpush.bf16.msra.mxu0 %v5209
    %5993 = vmatpush.bf16.msra.mxu0 %v5202
    %5994 = vmatpush.bf16.msra.mxu0 %v5195
    %5995 = vmatpush.bf16.msra.mxu0 %v5188
    %5996 = vmatpush.bf16.msra.mxu0 %v5181
    %5997 = vmatpush.bf16.msra.mxu0 %v5174
    %5998 = vmatpush.bf16.msra.mxu0 %v5167
    %5999 = vmatmul.bf16.gmra.mxu0 %v2836
    %v6000 = vpop.f32.mrf.mxu0
    %v6001 = vadd.f32 %v5987, %v6000
    %v6002 = vpop.f32.mrf.mxu0
    %v6003 = vadd.f32 %v5989, %v6002
    %6004 = vdwg.mxu0
    %6005 = vmatpush.bf16.msra.mxu0 %v4825
    %6006 = vmatpush.bf16.msra.mxu0 %v4818
    %6007 = vmatpush.bf16.msra.mxu0 %v4811
    %6008 = vmatpush.bf16.msra.mxu0 %v4804
    %6009 = vmatpush.bf16.msra.mxu0 %v4797
    %6010 = vmatpush.bf16.msra.mxu0 %v4790
    %6011 = vmatpush.bf16.msra.mxu0 %v4783
    %6012 = vmatpush.bf16.msra.mxu0 %v4776
    %6013 = vmatmul.bf16.gmra.mxu0 %v2829
    %v6014 = vpop.f32.mrf.mxu0
    %v6015 = vadd.f32 %v3354, %v6014
    %v6016 = vpop.f32.mrf.mxu0
    %v6017 = vadd.f32 %v3354, %v6016
    %6018 = vdwg.mxu0
    %6019 = vmatpush.bf16.msra.mxu0 %v4881
    %6020 = vmatpush.bf16.msra.mxu0 %v4874
    %6021 = vmatpush.bf16.msra.mxu0 %v4867
    %6022 = vmatpush.bf16.msra.mxu0 %v4860
    %6023 = vmatpush.bf16.msra.mxu0 %v4853
    %6024 = vmatpush.bf16.msra.mxu0 %v4846
    %6025 = vmatpush.bf16.msra.mxu0 %v4839
    %6026 = vmatpush.bf16.msra.mxu0 %v4832
    %6027 = vmatmul.bf16.gmra.mxu0 %v2830
    %v6028 = vpop.f32.mrf.mxu0
    %v6029 = vadd.f32 %v6015, %v6028
    %v6030 = vpop.f32.mrf.mxu0
    %v6031 = vadd.f32 %v6017, %v6030
    %6032 = vdwg.mxu0
    %6033 = vmatpush.bf16.msra.mxu0 %v4937
    %6034 = vmatpush.bf16.msra.mxu0 %v4930
    %6035 = vmatpush.bf16.msra.mxu0 %v4923
    %6036 = vmatpush.bf16.msra.mxu0 %v4916
    %6037 = vmatpush.bf16.msra.mxu0 %v4909
    %6038 = vmatpush.bf16.msra.mxu0 %v4902
    %6039 = vmatpush.bf16.msra.mxu0 %v4895
    %6040 = vmatpush.bf16.msra.mxu0 %v4888
    %6041 = vmatmul.bf16.gmra.mxu0 %v2831
    %v6042 = vpop.f32.mrf.mxu0
    %v6043 = vadd.f32 %v6029, %v6042
    %v6044 = vpop.f32.mrf.mxu0
    %v6045 = vadd.f32 %v6031, %v6044
    %6046 = vdwg.mxu0
    %6047 = vmatpush.bf16.msra.mxu0 %v4993
    %6048 = vmatpush.bf16.msra.mxu0 %v4986
    %6049 = vmatpush.bf16.msra.mxu0 %v4979
    %6050 = vmatpush.bf16.msra.mxu0 %v4972
    %6051 = vmatpush.bf16.msra.mxu0 %v4965
    %6052 = vmatpush.bf16.msra.mxu0 %v4958
    %6053 = vmatpush.bf16.msra.mxu0 %v4951
    %6054 = vmatpush.bf16.msra.mxu0 %v4944
    %6055 = vmatmul.bf16.gmra.mxu0 %v2832
    %v6056 = vpop.f32.mrf.mxu0
    %v6057 = vadd.f32 %v6043, %v6056
    %v6058 = vpop.f32.mrf.mxu0
    %v6059 = vadd.f32 %v6045, %v6058
    %6060 = vdwg.mxu0
    %6061 = vmatpush.bf16.msra.mxu0 %v5049
    %6062 = vmatpush.bf16.msra.mxu0 %v5042
    %6063 = vmatpush.bf16.msra.mxu0 %v5035
    %6064 = vmatpush.bf16.msra.mxu0 %v5028
    %6065 = vmatpush.bf16.msra.mxu0 %v5021
    %6066 = vmatpush.bf16.msra.mxu0 %v5014
    %6067 = vmatpush.bf16.msra.mxu0 %v5007
    %6068 = vmatpush.bf16.msra.mxu0 %v5000
    %6069 = vmatmul.bf16.gmra.mxu0 %v2833
    %v6070 = vpop.f32.mrf.mxu0
    %v6071 = vadd.f32 %v6057, %v6070
    %v6072 = vpop.f32.mrf.mxu0
    %v6073 = vadd.f32 %v6059, %v6072
    %6074 = vdwg.mxu0
    %6075 = vmatpush.bf16.msra.mxu0 %v5105
    %6076 = vmatpush.bf16.msra.mxu0 %v5098
    %6077 = vmatpush.bf16.msra.mxu0 %v5091
    %6078 = vmatpush.bf16.msra.mxu0 %v5084
    %6079 = vmatpush.bf16.msra.mxu0 %v5077
    %6080 = vmatpush.bf16.msra.mxu0 %v5070
    %6081 = vmatpush.bf16.msra.mxu0 %v5063
    %6082 = vmatpush.bf16.msra.mxu0 %v5056
    %6083 = vmatmul.bf16.gmra.mxu0 %v2834
    %v6084 = vpop.f32.mrf.mxu0
    %v6085 = vadd.f32 %v6071, %v6084
    %v6086 = vpop.f32.mrf.mxu0
    %v6087 = vadd.f32 %v6073, %v6086
    %6088 = vdwg.mxu0
    %6089 = vmatpush.bf16.msra.mxu0 %v5161
    %6090 = vmatpush.bf16.msra.mxu0 %v5154
    %6091 = vmatpush.bf16.msra.mxu0 %v5147
    %6092 = vmatpush.bf16.msra.mxu0 %v5140
    %6093 = vmatpush.bf16.msra.mxu0 %v5133
    %6094 = vmatpush.bf16.msra.mxu0 %v5126
    %6095 = vmatpush.bf16.msra.mxu0 %v5119
    %6096 = vmatpush.bf16.msra.mxu0 %v5112
    %6097 = vmatmul.bf16.gmra.mxu0 %v2835
    %v6098 = vpop.f32.mrf.mxu0
    %v6099 = vadd.f32 %v6085, %v6098
    %v6100 = vpop.f32.mrf.mxu0
    %v6101 = vadd.f32 %v6087, %v6100
    %6102 = vdwg.mxu0
    %6103 = vmatpush.bf16.msra.mxu0 %v5217
    %6104 = vmatpush.bf16.msra.mxu0 %v5210
    %6105 = vmatpush.bf16.msra.mxu0 %v5203
    %6106 = vmatpush.bf16.msra.mxu0 %v5196
    %6107 = vmatpush.bf16.msra.mxu0 %v5189
    %6108 = vmatpush.bf16.msra.mxu0 %v5182
    %6109 = vmatpush.bf16.msra.mxu0 %v5175
    %6110 = vmatpush.bf16.msra.mxu0 %v5168
    %6111 = vmatmul.bf16.gmra.mxu0 %v2836
    %v6112 = vpop.f32.mrf.mxu0
    %v6113 = vadd.f32 %v6099, %v6112
    %v6114 = vpop.f32.mrf.mxu0
    %v6115 = vadd.f32 %v6101, %v6114
    %6116 = vdwg.mxu0
    %6117 = vmatpush.bf16.msra.mxu0 %v4826
    %6118 = vmatpush.bf16.msra.mxu0 %v4819
    %6119 = vmatpush.bf16.msra.mxu0 %v4812
    %6120 = vmatpush.bf16.msra.mxu0 %v4805
    %6121 = vmatpush.bf16.msra.mxu0 %v4798
    %6122 = vmatpush.bf16.msra.mxu0 %v4791
    %6123 = vmatpush.bf16.msra.mxu0 %v4784
    %6124 = vmatpush.bf16.msra.mxu0 %v4777
    %6125 = vmatmul.bf16.gmra.mxu0 %v2829
    %v6126 = vpop.f32.mrf.mxu0
    %v6127 = vadd.f32 %v3355, %v6126
    %v6128 = vpop.f32.mrf.mxu0
    %v6129 = vadd.f32 %v3355, %v6128
    %6130 = vdwg.mxu0
    %6131 = vmatpush.bf16.msra.mxu0 %v4882
    %6132 = vmatpush.bf16.msra.mxu0 %v4875
    %6133 = vmatpush.bf16.msra.mxu0 %v4868
    %6134 = vmatpush.bf16.msra.mxu0 %v4861
    %6135 = vmatpush.bf16.msra.mxu0 %v4854
    %6136 = vmatpush.bf16.msra.mxu0 %v4847
    %6137 = vmatpush.bf16.msra.mxu0 %v4840
    %6138 = vmatpush.bf16.msra.mxu0 %v4833
    %6139 = vmatmul.bf16.gmra.mxu0 %v2830
    %v6140 = vpop.f32.mrf.mxu0
    %v6141 = vadd.f32 %v6127, %v6140
    %v6142 = vpop.f32.mrf.mxu0
    %v6143 = vadd.f32 %v6129, %v6142
    %6144 = vdwg.mxu0
    %6145 = vmatpush.bf16.msra.mxu0 %v4938
    %6146 = vmatpush.bf16.msra.mxu0 %v4931
    %6147 = vmatpush.bf16.msra.mxu0 %v4924
    %6148 = vmatpush.bf16.msra.mxu0 %v4917
    %6149 = vmatpush.bf16.msra.mxu0 %v4910
    %6150 = vmatpush.bf16.msra.mxu0 %v4903
    %6151 = vmatpush.bf16.msra.mxu0 %v4896
    %6152 = vmatpush.bf16.msra.mxu0 %v4889
    %6153 = vmatmul.bf16.gmra.mxu0 %v2831
    %v6154 = vpop.f32.mrf.mxu0
    %v6155 = vadd.f32 %v6141, %v6154
    %v6156 = vpop.f32.mrf.mxu0
    %v6157 = vadd.f32 %v6143, %v6156
    %6158 = vdwg.mxu0
    %6159 = vmatpush.bf16.msra.mxu0 %v4994
    %6160 = vmatpush.bf16.msra.mxu0 %v4987
    %6161 = vmatpush.bf16.msra.mxu0 %v4980
    %6162 = vmatpush.bf16.msra.mxu0 %v4973
    %6163 = vmatpush.bf16.msra.mxu0 %v4966
    %6164 = vmatpush.bf16.msra.mxu0 %v4959
    %6165 = vmatpush.bf16.msra.mxu0 %v4952
    %6166 = vmatpush.bf16.msra.mxu0 %v4945
    %6167 = vmatmul.bf16.gmra.mxu0 %v2832
    %v6168 = vpop.f32.mrf.mxu0
    %v6169 = vadd.f32 %v6155, %v6168
    %v6170 = vpop.f32.mrf.mxu0
    %v6171 = vadd.f32 %v6157, %v6170
    %6172 = vdwg.mxu0
    %6173 = vmatpush.bf16.msra.mxu0 %v5050
    %6174 = vmatpush.bf16.msra.mxu0 %v5043
    %6175 = vmatpush.bf16.msra.mxu0 %v5036
    %6176 = vmatpush.bf16.msra.mxu0 %v5029
    %6177 = vmatpush.bf16.msra.mxu0 %v5022
    %6178 = vmatpush.bf16.msra.mxu0 %v5015
    %6179 = vmatpush.bf16.msra.mxu0 %v5008
    %6180 = vmatpush.bf16.msra.mxu0 %v5001
    %6181 = vmatmul.bf16.gmra.mxu0 %v2833
    %v6182 = vpop.f32.mrf.mxu0
    %v6183 = vadd.f32 %v6169, %v6182
    %v6184 = vpop.f32.mrf.mxu0
    %v6185 = vadd.f32 %v6171, %v6184
    %6186 = vdwg.mxu0
    %6187 = vmatpush.bf16.msra.mxu0 %v5106
    %6188 = vmatpush.bf16.msra.mxu0 %v5099
    %6189 = vmatpush.bf16.msra.mxu0 %v5092
    %6190 = vmatpush.bf16.msra.mxu0 %v5085
    %6191 = vmatpush.bf16.msra.mxu0 %v5078
    %6192 = vmatpush.bf16.msra.mxu0 %v5071
    %6193 = vmatpush.bf16.msra.mxu0 %v5064
    %6194 = vmatpush.bf16.msra.mxu0 %v5057
    %6195 = vmatmul.bf16.gmra.mxu0 %v2834
    %v6196 = vpop.f32.mrf.mxu0
    %v6197 = vadd.f32 %v6183, %v6196
    %v6198 = vpop.f32.mrf.mxu0
    %v6199 = vadd.f32 %v6185, %v6198
    %6200 = vdwg.mxu0
    %6201 = vmatpush.bf16.msra.mxu0 %v5162
    %6202 = vmatpush.bf16.msra.mxu0 %v5155
    %6203 = vmatpush.bf16.msra.mxu0 %v5148
    %6204 = vmatpush.bf16.msra.mxu0 %v5141
    %6205 = vmatpush.bf16.msra.mxu0 %v5134
    %6206 = vmatpush.bf16.msra.mxu0 %v5127
    %6207 = vmatpush.bf16.msra.mxu0 %v5120
    %6208 = vmatpush.bf16.msra.mxu0 %v5113
    %6209 = vmatmul.bf16.gmra.mxu0 %v2835
    %v6210 = vpop.f32.mrf.mxu0
    %v6211 = vadd.f32 %v6197, %v6210
    %v6212 = vpop.f32.mrf.mxu0
    %v6213 = vadd.f32 %v6199, %v6212
    %6214 = vdwg.mxu0
    %6215 = vmatpush.bf16.msra.mxu0 %v5218
    %6216 = vmatpush.bf16.msra.mxu0 %v5211
    %6217 = vmatpush.bf16.msra.mxu0 %v5204
    %6218 = vmatpush.bf16.msra.mxu0 %v5197
    %6219 = vmatpush.bf16.msra.mxu0 %v5190
    %6220 = vmatpush.bf16.msra.mxu0 %v5183
    %6221 = vmatpush.bf16.msra.mxu0 %v5176
    %6222 = vmatpush.bf16.msra.mxu0 %v5169
    %6223 = vmatmul.bf16.gmra.mxu0 %v2836
    %v6224 = vpop.f32.mrf.mxu0
    %v6225 = vadd.f32 %v6211, %v6224
    %v6226 = vpop.f32.mrf.mxu0
    %v6227 = vadd.f32 %v6213, %v6226
    %6228 = vdwg.mxu0
    %6229 = vmatpush.bf16.msra.mxu0 %v4827
    %6230 = vmatpush.bf16.msra.mxu0 %v4820
    %6231 = vmatpush.bf16.msra.mxu0 %v4813
    %6232 = vmatpush.bf16.msra.mxu0 %v4806
    %6233 = vmatpush.bf16.msra.mxu0 %v4799
    %6234 = vmatpush.bf16.msra.mxu0 %v4792
    %6235 = vmatpush.bf16.msra.mxu0 %v4785
    %6236 = vmatpush.bf16.msra.mxu0 %v4778
    %6237 = vmatmul.bf16.gmra.mxu0 %v2829
    %v6238 = vpop.f32.mrf.mxu0
    %v6239 = vadd.f32 %v3356, %v6238
    %v6240 = vpop.f32.mrf.mxu0
    %v6241 = vadd.f32 %v3356, %v6240
    %6242 = vdwg.mxu0
    %6243 = vmatpush.bf16.msra.mxu0 %v4883
    %6244 = vmatpush.bf16.msra.mxu0 %v4876
    %6245 = vmatpush.bf16.msra.mxu0 %v4869
    %6246 = vmatpush.bf16.msra.mxu0 %v4862
    %6247 = vmatpush.bf16.msra.mxu0 %v4855
    %6248 = vmatpush.bf16.msra.mxu0 %v4848
    %6249 = vmatpush.bf16.msra.mxu0 %v4841
    %6250 = vmatpush.bf16.msra.mxu0 %v4834
    %6251 = vmatmul.bf16.gmra.mxu0 %v2830
    %v6252 = vpop.f32.mrf.mxu0
    %v6253 = vadd.f32 %v6239, %v6252
    %v6254 = vpop.f32.mrf.mxu0
    %v6255 = vadd.f32 %v6241, %v6254
    %6256 = vdwg.mxu0
    %6257 = vmatpush.bf16.msra.mxu0 %v4939
    %6258 = vmatpush.bf16.msra.mxu0 %v4932
    %6259 = vmatpush.bf16.msra.mxu0 %v4925
    %6260 = vmatpush.bf16.msra.mxu0 %v4918
    %6261 = vmatpush.bf16.msra.mxu0 %v4911
    %6262 = vmatpush.bf16.msra.mxu0 %v4904
    %6263 = vmatpush.bf16.msra.mxu0 %v4897
    %6264 = vmatpush.bf16.msra.mxu0 %v4890
    %6265 = vmatmul.bf16.gmra.mxu0 %v2831
    %v6266 = vpop.f32.mrf.mxu0
    %v6267 = vadd.f32 %v6253, %v6266
    %v6268 = vpop.f32.mrf.mxu0
    %v6269 = vadd.f32 %v6255, %v6268
    %6270 = vdwg.mxu0
    %6271 = vmatpush.bf16.msra.mxu0 %v4995
    %6272 = vmatpush.bf16.msra.mxu0 %v4988
    %6273 = vmatpush.bf16.msra.mxu0 %v4981
    %6274 = vmatpush.bf16.msra.mxu0 %v4974
    %6275 = vmatpush.bf16.msra.mxu0 %v4967
    %6276 = vmatpush.bf16.msra.mxu0 %v4960
    %6277 = vmatpush.bf16.msra.mxu0 %v4953
    %6278 = vmatpush.bf16.msra.mxu0 %v4946
    %6279 = vmatmul.bf16.gmra.mxu0 %v2832
    %v6280 = vpop.f32.mrf.mxu0
    %v6281 = vadd.f32 %v6267, %v6280
    %v6282 = vpop.f32.mrf.mxu0
    %v6283 = vadd.f32 %v6269, %v6282
    %6284 = vdwg.mxu0
    %6285 = vmatpush.bf16.msra.mxu0 %v5051
    %6286 = vmatpush.bf16.msra.mxu0 %v5044
    %6287 = vmatpush.bf16.msra.mxu0 %v5037
    %6288 = vmatpush.bf16.msra.mxu0 %v5030
    %6289 = vmatpush.bf16.msra.mxu0 %v5023
    %6290 = vmatpush.bf16.msra.mxu0 %v5016
    %6291 = vmatpush.bf16.msra.mxu0 %v5009
    %6292 = vmatpush.bf16.msra.mxu0 %v5002
    %6293 = vmatmul.bf16.gmra.mxu0 %v2833
    %v6294 = vpop.f32.mrf.mxu0
    %v6295 = vadd.f32 %v6281, %v6294
    %v6296 = vpop.f32.mrf.mxu0
    %v6297 = vadd.f32 %v6283, %v6296
    %6298 = vdwg.mxu0
    %6299 = vmatpush.bf16.msra.mxu0 %v5107
    %6300 = vmatpush.bf16.msra.mxu0 %v5100
    %6301 = vmatpush.bf16.msra.mxu0 %v5093
    %6302 = vmatpush.bf16.msra.mxu0 %v5086
    %6303 = vmatpush.bf16.msra.mxu0 %v5079
    %6304 = vmatpush.bf16.msra.mxu0 %v5072
    %6305 = vmatpush.bf16.msra.mxu0 %v5065
    %6306 = vmatpush.bf16.msra.mxu0 %v5058
    %6307 = vmatmul.bf16.gmra.mxu0 %v2834
    %v6308 = vpop.f32.mrf.mxu0
    %v6309 = vadd.f32 %v6295, %v6308
    %v6310 = vpop.f32.mrf.mxu0
    %v6311 = vadd.f32 %v6297, %v6310
    %6312 = vdwg.mxu0
    %6313 = vmatpush.bf16.msra.mxu0 %v5163
    %6314 = vmatpush.bf16.msra.mxu0 %v5156
    %6315 = vmatpush.bf16.msra.mxu0 %v5149
    %6316 = vmatpush.bf16.msra.mxu0 %v5142
    %6317 = vmatpush.bf16.msra.mxu0 %v5135
    %6318 = vmatpush.bf16.msra.mxu0 %v5128
    %6319 = vmatpush.bf16.msra.mxu0 %v5121
    %6320 = vmatpush.bf16.msra.mxu0 %v5114
    %6321 = vmatmul.bf16.gmra.mxu0 %v2835
    %v6322 = vpop.f32.mrf.mxu0
    %v6323 = vadd.f32 %v6309, %v6322
    %v6324 = vpop.f32.mrf.mxu0
    %v6325 = vadd.f32 %v6311, %v6324
    %6326 = vdwg.mxu0
    %6327 = vmatpush.bf16.msra.mxu0 %v5219
    %6328 = vmatpush.bf16.msra.mxu0 %v5212
    %6329 = vmatpush.bf16.msra.mxu0 %v5205
    %6330 = vmatpush.bf16.msra.mxu0 %v5198
    %6331 = vmatpush.bf16.msra.mxu0 %v5191
    %6332 = vmatpush.bf16.msra.mxu0 %v5184
    %6333 = vmatpush.bf16.msra.mxu0 %v5177
    %6334 = vmatpush.bf16.msra.mxu0 %v5170
    %6335 = vmatmul.bf16.gmra.mxu0 %v2836
    %v6336 = vpop.f32.mrf.mxu0
    %v6337 = vadd.f32 %v6323, %v6336
    %v6338 = vpop.f32.mrf.mxu0
    %v6339 = vadd.f32 %v6325, %v6338
    %6340 = vdwg.mxu0
    %6341 = vmatpush.bf16.msra.mxu0 %v4828
    %6342 = vmatpush.bf16.msra.mxu0 %v4821
    %6343 = vmatpush.bf16.msra.mxu0 %v4814
    %6344 = vmatpush.bf16.msra.mxu0 %v4807
    %6345 = vmatpush.bf16.msra.mxu0 %v4800
    %6346 = vmatpush.bf16.msra.mxu0 %v4793
    %6347 = vmatpush.bf16.msra.mxu0 %v4786
    %6348 = vmatpush.bf16.msra.mxu0 %v4779
    %6349 = vmatmul.bf16.gmra.mxu0 %v2829
    %v6350 = vpop.f32.mrf.mxu0
    %v6351 = vadd.f32 %v3357, %v6350
    %v6352 = vpop.f32.mrf.mxu0
    %v6353 = vadd.f32 %v3357, %v6352
    %6354 = vdwg.mxu0
    %6355 = vmatpush.bf16.msra.mxu0 %v4884
    %6356 = vmatpush.bf16.msra.mxu0 %v4877
    %6357 = vmatpush.bf16.msra.mxu0 %v4870
    %6358 = vmatpush.bf16.msra.mxu0 %v4863
    %6359 = vmatpush.bf16.msra.mxu0 %v4856
    %6360 = vmatpush.bf16.msra.mxu0 %v4849
    %6361 = vmatpush.bf16.msra.mxu0 %v4842
    %6362 = vmatpush.bf16.msra.mxu0 %v4835
    %6363 = vmatmul.bf16.gmra.mxu0 %v2830
    %v6364 = vpop.f32.mrf.mxu0
    %v6365 = vadd.f32 %v6351, %v6364
    %v6366 = vpop.f32.mrf.mxu0
    %v6367 = vadd.f32 %v6353, %v6366
    %6368 = vdwg.mxu0
    %6369 = vmatpush.bf16.msra.mxu0 %v4940
    %6370 = vmatpush.bf16.msra.mxu0 %v4933
    %6371 = vmatpush.bf16.msra.mxu0 %v4926
    %6372 = vmatpush.bf16.msra.mxu0 %v4919
    %6373 = vmatpush.bf16.msra.mxu0 %v4912
    %6374 = vmatpush.bf16.msra.mxu0 %v4905
    %6375 = vmatpush.bf16.msra.mxu0 %v4898
    %6376 = vmatpush.bf16.msra.mxu0 %v4891
    %6377 = vmatmul.bf16.gmra.mxu0 %v2831
    %v6378 = vpop.f32.mrf.mxu0
    %v6379 = vadd.f32 %v6365, %v6378
    %v6380 = vpop.f32.mrf.mxu0
    %v6381 = vadd.f32 %v6367, %v6380
    %6382 = vdwg.mxu0
    %6383 = vmatpush.bf16.msra.mxu0 %v4996
    %6384 = vmatpush.bf16.msra.mxu0 %v4989
    %6385 = vmatpush.bf16.msra.mxu0 %v4982
    %6386 = vmatpush.bf16.msra.mxu0 %v4975
    %6387 = vmatpush.bf16.msra.mxu0 %v4968
    %6388 = vmatpush.bf16.msra.mxu0 %v4961
    %6389 = vmatpush.bf16.msra.mxu0 %v4954
    %6390 = vmatpush.bf16.msra.mxu0 %v4947
    %6391 = vmatmul.bf16.gmra.mxu0 %v2832
    %v6392 = vpop.f32.mrf.mxu0
    %v6393 = vadd.f32 %v6379, %v6392
    %v6394 = vpop.f32.mrf.mxu0
    %v6395 = vadd.f32 %v6381, %v6394
    %6396 = vdwg.mxu0
    %6397 = vmatpush.bf16.msra.mxu0 %v5052
    %6398 = vmatpush.bf16.msra.mxu0 %v5045
    %6399 = vmatpush.bf16.msra.mxu0 %v5038
    %6400 = vmatpush.bf16.msra.mxu0 %v5031
    %6401 = vmatpush.bf16.msra.mxu0 %v5024
    %6402 = vmatpush.bf16.msra.mxu0 %v5017
    %6403 = vmatpush.bf16.msra.mxu0 %v5010
    %6404 = vmatpush.bf16.msra.mxu0 %v5003
    %6405 = vmatmul.bf16.gmra.mxu0 %v2833
    %v6406 = vpop.f32.mrf.mxu0
    %v6407 = vadd.f32 %v6393, %v6406
    %v6408 = vpop.f32.mrf.mxu0
    %v6409 = vadd.f32 %v6395, %v6408
    %6410 = vdwg.mxu0
    %6411 = vmatpush.bf16.msra.mxu0 %v5108
    %6412 = vmatpush.bf16.msra.mxu0 %v5101
    %6413 = vmatpush.bf16.msra.mxu0 %v5094
    %6414 = vmatpush.bf16.msra.mxu0 %v5087
    %6415 = vmatpush.bf16.msra.mxu0 %v5080
    %6416 = vmatpush.bf16.msra.mxu0 %v5073
    %6417 = vmatpush.bf16.msra.mxu0 %v5066
    %6418 = vmatpush.bf16.msra.mxu0 %v5059
    %6419 = vmatmul.bf16.gmra.mxu0 %v2834
    %v6420 = vpop.f32.mrf.mxu0
    %v6421 = vadd.f32 %v6407, %v6420
    %v6422 = vpop.f32.mrf.mxu0
    %v6423 = vadd.f32 %v6409, %v6422
    %6424 = vdwg.mxu0
    %6425 = vmatpush.bf16.msra.mxu0 %v5164
    %6426 = vmatpush.bf16.msra.mxu0 %v5157
    %6427 = vmatpush.bf16.msra.mxu0 %v5150
    %6428 = vmatpush.bf16.msra.mxu0 %v5143
    %6429 = vmatpush.bf16.msra.mxu0 %v5136
    %6430 = vmatpush.bf16.msra.mxu0 %v5129
    %6431 = vmatpush.bf16.msra.mxu0 %v5122
    %6432 = vmatpush.bf16.msra.mxu0 %v5115
    %6433 = vmatmul.bf16.gmra.mxu0 %v2835
    %v6434 = vpop.f32.mrf.mxu0
    %v6435 = vadd.f32 %v6421, %v6434
    %v6436 = vpop.f32.mrf.mxu0
    %v6437 = vadd.f32 %v6423, %v6436
    %6438 = vdwg.mxu0
    %6439 = vmatpush.bf16.msra.mxu0 %v5220
    %6440 = vmatpush.bf16.msra.mxu0 %v5213
    %6441 = vmatpush.bf16.msra.mxu0 %v5206
    %6442 = vmatpush.bf16.msra.mxu0 %v5199
    %6443 = vmatpush.bf16.msra.mxu0 %v5192
    %6444 = vmatpush.bf16.msra.mxu0 %v5185
    %6445 = vmatpush.bf16.msra.mxu0 %v5178
    %6446 = vmatpush.bf16.msra.mxu0 %v5171
    %6447 = vmatmul.bf16.gmra.mxu0 %v2836
    %v6448 = vpop.f32.mrf.mxu0
    %v6449 = vadd.f32 %v6435, %v6448
    %v6450 = vpop.f32.mrf.mxu0
    %v6451 = vadd.f32 %v6437, %v6450
    %6452 = vdwg.mxu0
    %v6453 = vtanh.pop %v5777
    %v6454 = vtanh.pop %v5889
    %v6455 = vtanh.pop %v6001
    %v6456 = vtanh.pop %v6113
    %v6457 = vtanh.pop %v6225
    %v6458 = vtanh.pop %v6337
    %v6459 = vtanh.pop %v6449
    %v6460 = vtanh.pop %v5779
    %v6461 = vtanh.pop %v5891
    %v6462 = vtanh.pop %v6003
    %v6463 = vtanh.pop %v6115
    %v6464 = vtanh.pop %v6227
    %v6465 = vtanh.pop %v6339
    %v6466 = vtanh.pop %v6451
    %v6467 = vpack.c.bf16 %v6454, %v6453
    %v6468 = vpack.c.bf16 %v6456, %v6455
    %v6469 = vpack.c.bf16 %v6458, %v6457
    %v6470 = vpack.c.bf16 %v6459, %v6459
    %v6471 = vpack.c.bf16 %v6461, %v6460
    %v6472 = vpack.c.bf16 %v6463, %v6462
    %v6473 = vpack.c.bf16 %v6465, %v6464
    %v6474 = vpack.c.bf16 %v6466, %v6466
    %6475 = vst [vmem:[%s9] sm:$0xff] %v6467
    %6476 = vst [vmem:[%s9 + $0x8] sm:$0xff] %v6468
    %6477 = vst [vmem:[%s9 + $0x10] sm:$0xff] %v6469
    %6478 = vst [vmem:[%s9 + $0x18] sm:$0xf] %v6470
    %6479 = vst [vmem:[%s9 + $0x1c] sm:$0xff] %v6471
    %6480 = vst [vmem:[%s9 + $0x24] sm:$0xff] %v6472
    %6481 = vst [vmem:[%s9 + $0x2c] sm:$0xff] %v6473
    %6482 = vst [vmem:[%s9 + $0x34] sm:$0xf] %v6474
    // Predicated region
    $region70: #{generator_forward.1} parent=1 // pred_check
      _
    $region71: #{generator_forward.1} parent=1 // pred_check_branch
      %6484 = sbr.rel (0) target = $region73
    $region72: #{generator_forward.1} parent=1 // pred_region
      _
    $region73: #{generator_forward.1} parent=1 // pred_fallthru
      _
    // Predicated region
    $region74: #{generator_forward.1} parent=1 // pred_check
      _
    $region75: #{generator_forward.1} parent=1 // pred_check_branch
      %6486 = sbr.rel (0) target = $region77
    $region76: #{generator_forward.1} parent=1 // pred_region
      _
    $region77: #{generator_forward.1} parent=1 // pred_fallthru
      _
    %6487 = vsyncpa [#allocation3], 1
    %6488 = vsyncpa [#allocation5], 1
    %6489 = vsyncpa [#allocation8], 1
    %6490 = vsyncpa [#allocation11], 1
    %6491 = vsyncpa [#allocation14], 1

</llo_original>
